<compile_context>
chip_gen: v7x
topology: tpu7x:2x2x1
jax: 0.10.0
libtpu: 0.0.40
codegen_flags: <defaults>
</compile_context>

<pallas_src>
import jax
import jax.numpy as jnp
from jax.experimental import pallas as pl
from jax.experimental.pallas import tpu as pltpu

DWK = 7                                  # merged depthwise kernel size
DWP = (DWK - 1) // 2                     # halo width = 3
DWT = ((DWK * DWK + 7) // 8) * 8         # tap rows padded to a sublane multiple (56)


def _hardswish(v):
    return v * (jnp.clip(v + 3.0, 0.0, 6.0) * (1.0 / 6.0))


def _hardsigmoid(v):
    return jnp.clip(v * (1.0 / 6.0) + 0.5, 0.0, 1.0)


# -----------------------------------------------------------------------------
# Fused Pallas kernel: the whole InvertedResidual chain in one pallas_call
# -----------------------------------------------------------------------------
def make_fused_forward(B, H, W, C, Cp, Hd, num_re_blocks, num_hs_blocks,
                       num_batch_groups=1):
    nb = num_re_blocks + num_hs_blocks
    CH1 = Hd // 2                        # identity (1x1) half of the hidden channels
    CDW = Hd - CH1                       # merged depthwise half (3x3|5x5|7x7) = 128
    SQ = Hd // 4
    N = B * H * W
    HW = H * W
    assert B % num_batch_groups == 0
    Bg = B // num_batch_groups
    Ng = Bg * HW
    HP = H + 2 * DWP                     # padded height
    WP = ((W + 2 * DWP + 7) // 8) * 8    # padded width (sublane multiple)

    def kernel(x_ref, w_exp_ref, dw_w_ref, se_w1_ref, se_w2_ref, w_pw_ref,
               vecs_ref, out_ref, act_ref, pad_ref):
        blk = pl.program_id(1)
        # ReLU for the first num_re_blocks blocks, Hardswish afterwards.
        hs_gate = (blk >= num_re_blocks).astype(jnp.float32)

        def act(v):
            return hs_gate * _hardswish(v) + (1.0 - hs_gate) * jnp.maximum(v, 0.0)

        @pl.when(blk == 0)
        def _():
            act_ref[...] = x_ref[...]                   # chain input for this group
            pad_ref[...] = jnp.zeros_like(pad_ref)      # zero halo once (interior is
                                                        # overwritten every block)

        # ---- packed small per-block parameters (one DMA) -------------------------
        vecs = vecs_ref[...]                            # (8, Hd) f32
        exp_b = vecs[0:1, :]
        bn_s1 = vecs[1:2, :CH1]
        bn_b1 = vecs[2:3, :CH1]
        bn_s2 = vecs[1:2, CH1:].reshape(1, 1, 1, CDW)
        bn_b2 = vecs[2:3, CH1:].reshape(1, 1, 1, CDW)   # dw-conv bias folded in here
        se_b2 = vecs[3:4, :]
        se_b1 = vecs[4:5, :SQ]
        pw_b = vecs[5:6, :Cp]

        # ---- expand 1x1 conv (expand-BN folded): one bf16 MXU matmul -------------
        cur = act_ref[...]                              # (Ng, Cp) f32 -- read once
        z = act(jnp.dot(cur.astype(jnp.bfloat16), w_exp_ref[...],
                        preferred_element_type=jnp.float32) + exp_b)   # (Ng, Hd)

        # ---- identity half: mid-BN + act, pooled contribution for SE -------------
        y1 = act(z[:, :CH1] * bn_s1 + bn_b1)            # (Ng, CH1)
        pooled1 = jnp.sum(y1.reshape(Bg, HW, CH1), axis=1) * (1.0 / HW)  # (Bg, CH1)

        # ---- merged 7x7 depthwise (128 full lanes) --------------------------------
        z_dw = z[:, CH1:].reshape(Bg, H, W, CDW)
        pad_ref[:, DWP:DWP + H, DWP:DWP + W, :] = z_dw  # one interior store / block
        wall = dw_w_ref[...]                            # (DWT, CDW)
        acc = jnp.zeros((Bg, H, W, CDW), jnp.float32)
        for dx in range(DWK):                           # 7 width-shifted slab reads
            slab = pad_ref[:, :, dx:dx + W, :]          # (Bg, HP, W, CDW)
            for dy in range(DWK):                       # height shifts: layout-free
                t = dy * DWK + dx
                wt = wall[t:t + 1, :].reshape(1, 1, 1, CDW)
                acc = acc + wt * slab[:, dy:dy + H, :, :]
        y2 = act(acc * bn_s2 + bn_b2)                   # (Bg, H, W, CDW), kept as value
        pooled2 = jnp.sum(y2, axis=(1, 2)) * (1.0 / HW)                   # (Bg, CDW)

        # ---- squeeze-excitation: bf16 MXU inputs, f32 accumulation ----------------
        s1 = (jnp.dot(pooled1.astype(jnp.bfloat16), se_w1_ref[:CH1, :],
                      preferred_element_type=jnp.float32)
              + jnp.dot(pooled2.astype(jnp.bfloat16), se_w1_ref[CH1:, :],
                        preferred_element_type=jnp.float32)
              + se_b1)
        s1 = jnp.maximum(s1, 0.0)                                         # (Bg, SQ)
        s2 = _hardsigmoid(jnp.dot(s1.astype(jnp.bfloat16), se_w2_ref[...],
                                  preferred_element_type=jnp.float32) + se_b2)

        # ---- excite + pointwise 1x1 (pointwise-BN folded) + residual --------------
        e1 = (y1.reshape(Bg, HW, CH1) * s2[:, :CH1].reshape(Bg, 1, CH1)).reshape(Ng, CH1)
        e2 = (y2 * s2[:, CH1:].reshape(Bg, 1, 1, CDW)).reshape(Ng, CDW)
        o = (jnp.dot(e1.astype(jnp.bfloat16), w_pw_ref[:CH1, :],
                     preferred_element_type=jnp.float32)
             + jnp.dot(e2.astype(jnp.bfloat16), w_pw_ref[CH1:, :],
                       preferred_element_type=jnp.float32)
             + pw_b)
        new = cur + o                                   # residual (padded lanes stay 0)
        act_ref[...] = new                              # feed the next block in VMEM

        @pl.when(blk == pl.num_programs(1) - 1)
        def _():
            out_ref[...] = new                          # single HBM writeback per group

    def wspec(*shape):
        # per-block weight stack: leading block dim squeezed, block-indexed DMA
        return pl.BlockSpec((None,) + shape, lambda g, b: (b,) + (0,) * len(shape))

    call = pl.pallas_call(
        kernel,
        out_shape=jax.ShapeDtypeStruct((N, Cp), jnp.float32),
        grid=(num_batch_groups, nb),
        in_specs=[
            pl.BlockSpec((Ng, Cp), lambda g, b: (g, 0)),      # x (resident per group)
            wspec(Cp, Hd),                                    # expand weights   (bf16)
            wspec(DWT, CDW),                                  # merged dw taps   (f32)
            wspec(Hd, SQ),                                    # SE fc1           (bf16)
            wspec(SQ, Hd),                                    # SE fc2           (bf16)
            wspec(Hd, Cp),                                    # pointwise        (bf16)
            wspec(8, Hd),                                     # packed vectors   (f32)
        ],
        out_specs=pl.BlockSpec((Ng, Cp), lambda g, b: (g, 0)),
        scratch_shapes=[
            pltpu.VMEM((Ng, Cp), jnp.float32),                # running activation
            pltpu.VMEM((Bg, HP, WP, CDW), jnp.float32),       # zero-padded dw input
        ],
        compiler_params=pltpu.CompilerParams(
            dimension_semantics=("parallel", "arbitrary")),
    )
    return jax.jit(lambda x, weights: call(x, *weights))


# -----------------------------------------------------------------------------
# Deterministic parameter init (inference-folded BN) + reference params
# -----------------------------------------------------------------------------
def _fold_bn(key, n, eps=1e-3):
    k1, k2, k3, k4 = jax.random.split(key, 4)
    gamma = 1.0 + 0.1 * jax.random.normal(k1, (n,), jnp.float32)
    beta = 0.1 * jax.random.normal(k2, (n,), jnp.float32)
    mean = 0.1 * jax.random.normal(k3, (n,), jnp.float32)
    var = jax.random.uniform(k4, (n,), jnp.float32, minval=0.5, maxval=1.5)
    scale = gamma / jnp.sqrt(var + eps)
    return scale, beta - mean * scale


def _init_block(key, C, Cp, Hd):
    CH1 = Hd // 2
    c3, c5 = Hd // 4, Hd // 8
    c7 = Hd - CH1 - c3 - c5
    CDW = Hd - CH1
    SQ = Hd // 4
    ks = jax.random.split(key, 16)

    w_exp = 0.05 * jax.random.normal(ks[0], (C, Hd), jnp.float32)
    exp_s, exp_b = _fold_bn(ks[1], Hd)
    w_exp_p = jnp.zeros((Cp, Hd), jnp.float32).at[:C].set(w_exp * exp_s[None, :])
    w_exp_bf = w_exp_p.astype(jnp.bfloat16)              # fold expand-BN, pad, bf16

    w3 = 0.1 * jax.random.normal(ks[2], (3, 3, c3), jnp.float32)
    w5 = 0.1 * jax.random.normal(ks[3], (5, 5, c5), jnp.float32)
    w7 = 0.1 * jax.random.normal(ks[4], (7, 7, c7), jnp.float32)
    b3 = 0.05 * jax.random.normal(ks[5], (c3,), jnp.float32)
    b5 = 0.05 * jax.random.normal(ks[6], (c5,), jnp.float32)
    b7 = 0.05 * jax.random.normal(ks[7], (c7,), jnp.float32)
    dw_b = jnp.concatenate([b3, b5, b7])

    bn_s, bn_b = _fold_bn(ks[8], Hd)

    se_w1 = (0.05 * jax.random.normal(ks[9], (Hd, SQ), jnp.float32)).astype(jnp.bfloat16)
    se_b1 = 0.05 * jax.random.normal(ks[10], (SQ,), jnp.float32)
    se_w2 = (0.05 * jax.random.normal(ks[11], (SQ, Hd), jnp.float32)).astype(jnp.bfloat16)
    se_b2 = 0.05 * jax.random.normal(ks[12], (Hd,), jnp.float32)

    w_pw = 0.05 * jax.random.normal(ks[13], (Hd, C), jnp.float32)
    pw_s, pw_b = _fold_bn(ks[14], C)
    w_pw_p = jnp.zeros((Hd, Cp), jnp.float32).at[:, :C].set(w_pw * pw_s[None, :])
    w_pw_bf = w_pw_p.astype(jnp.bfloat16)                 # fold pointwise-BN, pad, bf16
    pw_b_p = jnp.zeros((Cp,), jnp.float32).at[:C].set(pw_b)

    # merged 7x7 depthwise taps (DWT, CDW): 3x3 / 5x5 kernels zero-padded & centered
    dw_w = jnp.zeros((DWT, CDW), jnp.float32)

    def _place(dst, w, base):
        k = w.shape[0]
        off = (DWK - k) // 2
        for dy in range(k):
            for dx in range(k):
                dst = dst.at[(dy + off) * DWK + (dx + off),
                             base:base + w.shape[-1]].set(w[dy, dx])
        return dst

    dw_w = _place(dw_w, w3, 0)
    dw_w = _place(dw_w, w5, c3)
    dw_w = _place(dw_w, w7, c3 + c5)

    # pack all small per-channel vectors into one (8, Hd) array (single DMA)
    vecs = jnp.zeros((8, Hd), jnp.float32)
    vecs = vecs.at[0].set(exp_b)
    vecs = vecs.at[1].set(bn_s)
    bn_b_fold = bn_b.at[CH1:].add(dw_b * bn_s[CH1:])      # fold dw bias into BN offset
    vecs = vecs.at[2].set(bn_b_fold)
    vecs = vecs.at[3].set(se_b2)
    vecs = vecs.at[4, :SQ].set(se_b1)
    vecs = vecs.at[5, :Cp].set(pw_b_p)

    kern = (w_exp_bf, dw_w, se_w1, se_w2, w_pw_bf, vecs)
    ref = dict(w_exp=w_exp_bf[:C], exp_b=exp_b[None, :],
               dws=[(w3, b3), (w5, b5), (w7, b7)],
               bn_s=bn_s, bn_b=bn_b, se_w1=se_w1, se_b1=se_b1[None, :],
               se_w2=se_w2, se_b2=se_b2[None, :],
               w_pw=w_pw_bf[:, :C], pw_b=pw_b[None, :], c1=CH1)
    return kern, ref


def init_params(key, C, Cp, Hd, nb):
    keys = jax.random.split(key, nb)
    blocks = [_init_block(k, C, Cp, Hd) for k in keys]
    kerns = [b[0] for b in blocks]
    refs = [b[1] for b in blocks]
    stacked = tuple(jnp.stack([k[i] for k in kerns], axis=0) for i in range(6))
    return stacked, refs


# -----------------------------------------------------------------------------
# Pure-JAX reference (mirrors PyTorch block structure; same folded/bf16 weights)
# -----------------------------------------------------------------------------
def ref_block(x, p, use_hs):
    B, H, W, C = x.shape
    Hd = p["bn_s"].shape[0]
    act = _hardswish if use_hs else (lambda v: jnp.maximum(v, 0.0))

    z = jnp.dot(x.reshape(-1, C).astype(jnp.bfloat16), p["w_exp"],
                preferred_element_type=jnp.float32) + p["exp_b"]
    z = act(z).reshape(B, H, W, Hd)

    parts = [z[..., :p["c1"]]]
    base = p["c1"]
    for (w, b) in p["dws"]:                       # per-part depthwise k x k convs
        k, ci = w.shape[0], w.shape[-1]
        zz = z[..., base:base + ci]
        base += ci
        pd = (k - 1) // 2
        zp = jnp.pad(zz, ((0, 0), (pd, pd), (pd, pd), (0, 0)))
        y = jnp.zeros_like(zz) + b
        for dy in range(k):
            for dx in range(k):
                y = y + w[dy, dx] * zp[:, dy:dy + H, dx:dx + W, :]
        parts.append(y)
    y = jnp.concatenate(parts, axis=-1)
    y = act(y * p["bn_s"] + p["bn_b"])

    pooled = jnp.mean(y, axis=(1, 2))
    s1 = jnp.maximum(jnp.dot(pooled.astype(jnp.bfloat16), p["se_w1"],
                             preferred_element_type=jnp.float32) + p["se_b1"], 0.0)
    s2 = _hardsigmoid(jnp.dot(s1.astype(jnp.bfloat16), p["se_w2"],
                              preferred_element_type=jnp.float32) + p["se_b2"])
    ye = y * s2[:, None, None, :]

    o = jnp.dot(ye.reshape(-1, Hd).astype(jnp.bfloat16), p["w_pw"],
                preferred_element_type=jnp.float32) + p["pw_b"]
    return x + o.reshape(B, H, W, C)


if __name__ == "__main__":
    # channels=64 and expand_ratio=4 are fixed by InvertedResidual(64, 4, ...)
    B, C, H, W = 2, 64, 8, 8
    expand_ratio = 4
    Hd = C * expand_ratio
    Cp = 128                                  # channels zero-padded to a full lane row
    num_re_blocks, num_hs_blocks = 8, 8       # module defaults (16-block chain)
    nb = num_re_blocks + num_hs_blocks
    num_batch_groups = 2                      # 'parallel' grid axis (2nd TC on v7x)

    root = jax.random.PRNGKey(0)
    xkey, pkey = jax.random.split(root)
    x_nchw = jax.random.normal(xkey, (B, C, H, W), jnp.float32)   # PyTorch NCHW input
    x_nhwc = jnp.transpose(x_nchw, (0, 2, 3, 1))                  # channels -> lanes
    x_flat = x_nhwc.reshape(B * H * W, C)
    x_pad = jnp.zeros((B * H * W, Cp), jnp.float32).at[:, :C].set(x_flat)

    kern_params, ref_params = init_params(pkey, C, Cp, Hd, nb)

    fwd = make_fused_forward(B, H, W, C, Cp, Hd, num_re_blocks, num_hs_blocks,
                             num_batch_groups=num_batch_groups)
    out_pad = jax.block_until_ready(fwd(x_pad, kern_params))

    # Verify against the pure-JAX reference (same folded bf16 weights).  Over a
    # 16-block residual chain the only divergence is f32 accumulation order plus
    # occasional bf16 cast-boundary flips, so a 5e-2 max-abs bound is comfortable.
    ref = x_nhwc
    for i, rp in enumerate(ref_params):
        ref = ref_block(ref, rp, use_hs=(i >= num_re_blocks))
    out_nhwc = out_pad[:, :C].reshape(B, H, W, C)
    err = float(jnp.max(jnp.abs(out_nhwc - ref)))
    assert err < 5e-2, f"mismatch vs reference: {err}"

    out_nchw = jnp.transpose(out_nhwc, (0, 3, 1, 2))   # back to PyTorch NCHW
    assert out_nchw.shape == (B, C, H, W)
    print("KERNEL_OK")
</pallas_src>

<mosaic_0001>
module attributes {stable_mosaic.version = 11 : i64} {
  func.func @kernel(%arg0: i32, %arg1: i32, %arg2: memref<64x128xf32, #tpu.memory_space<vmem>>, %arg3: memref<1x128x256xbf16, #tpu.memory_space<vmem>>, %arg4: memref<1x56x128xf32, #tpu.memory_space<vmem>>, %arg5: memref<1x256x64xbf16, #tpu.memory_space<vmem>>, %arg6: memref<1x64x256xbf16, #tpu.memory_space<vmem>>, %arg7: memref<1x256x128xbf16, #tpu.memory_space<vmem>>, %arg8: memref<1x8x256xf32, #tpu.memory_space<vmem>>, %arg9: memref<64x128xf32, #tpu.memory_space<vmem>>, %arg10: memref<64x128xf32, #tpu.memory_space<vmem>>, %arg11: memref<1x14x16x128xf32, #tpu.memory_space<vmem>>) attributes {dimension_semantics = [#tpu.dimension_semantics<parallel>, #tpu.dimension_semantics<arbitrary>], iteration_bounds = array<i64: 2, 16>, scalar_prefetch = 0 : i64, scratch_operands = 2 : i64, tpu.core_type = #tpu.core_type<tc>, window_params = [{transform_indices = @transform_0, window_bounds = array<i64: 64, 128>}, {transform_indices = @transform_1, window_bounds = array<i64: 1, 128, 256>}, {transform_indices = @transform_2, window_bounds = array<i64: 1, 56, 128>}, {transform_indices = @transform_3, window_bounds = array<i64: 1, 256, 64>}, {transform_indices = @transform_4, window_bounds = array<i64: 1, 64, 256>}, {transform_indices = @transform_5, window_bounds = array<i64: 1, 256, 128>}, {transform_indices = @transform_6, window_bounds = array<i64: 1, 8, 256>}, {transform_indices = @transform_7, window_bounds = array<i64: 64, 128>}]} {
    %c8_i32 = arith.constant 8 : i32
    %0 = arith.cmpi sge, %arg1, %c8_i32 : i32
    %1 = arith.extui %0 : i1 to i32
    %2 = arith.sitofp %1 : i32 to f32
    %c0_i32 = arith.constant 0 : i32
    %3 = arith.cmpi eq, %arg1, %c0_i32 : i32
    %4 = arith.extui %3 : i1 to i32
    %c0_i32_0 = arith.constant 0 : i32
    %5 = arith.cmpi ne, %4, %c0_i32_0 : i32
    scf.if %5 {
      %c0_87 = arith.constant 0 : index
      %c0_88 = arith.constant 0 : index
      %451 = vector.load %arg2[%c0_87, %c0_88] : memref<64x128xf32, #tpu.memory_space<vmem>>, vector<64x128xf32>
      %c0_89 = arith.constant 0 : index
      %c0_90 = arith.constant 0 : index
      %452 = vector.load %arg10[%c0_89, %c0_90] : memref<64x128xf32, #tpu.memory_space<vmem>>, vector<64x128xf32>
      tpu.vector_store %arg10[%c0_89, %c0_90], %451 {strides = array<i32>} : memref<64x128xf32, #tpu.memory_space<vmem>>, vector<64x128xf32>,
      %cst_91 = arith.constant 0.000000e+00 : f32
      %453 = vector.broadcast %cst_91 : f32 to vector<1x14x16x128xf32>
      %c0_92 = arith.constant 0 : index
      %c0_93 = arith.constant 0 : index
      %c0_94 = arith.constant 0 : index
      %c0_95 = arith.constant 0 : index
      %454 = vector.load %arg11[%c0_92, %c0_93, %c0_94, %c0_95] : memref<1x14x16x128xf32, #tpu.memory_space<vmem>>, vector<1x14x16x128xf32>
      tpu.vector_store %arg11[%c0_92, %c0_93, %c0_94, %c0_95], %453 {strides = array<i32>} : memref<1x14x16x128xf32, #tpu.memory_space<vmem>>, vector<1x14x16x128xf32>,
    } else {
    }
    %c0 = arith.constant 0 : index
    %c0_1 = arith.constant 0 : index
    %c0_2 = arith.constant 0 : index
    %6 = vector.load %arg8[%c0, %c0_1, %c0_2] : memref<1x8x256xf32, #tpu.memory_space<vmem>>, vector<1x8x256xf32>
    %7 = vector.shape_cast %6 : vector<1x8x256xf32> to vector<8x256xf32>
    %8 = vector.extract_strided_slice %7 {offsets = [0, 0], sizes = [1, 256], strides = [1, 1]} : vector<8x256xf32> to vector<1x256xf32>
    %9 = vector.extract_strided_slice %7 {offsets = [1, 0], sizes = [1, 128], strides = [1, 1]} : vector<8x256xf32> to vector<1x128xf32>
    %10 = vector.extract_strided_slice %7 {offsets = [2, 0], sizes = [1, 128], strides = [1, 1]} : vector<8x256xf32> to vector<1x128xf32>
    %11 = vector.extract_strided_slice %7 {offsets = [1, 128], sizes = [1, 128], strides = [1, 1]} : vector<8x256xf32> to vector<1x128xf32>
    %12 = vector.shape_cast %11 : vector<1x128xf32> to vector<1x1x1x128xf32>
    %13 = vector.extract_strided_slice %7 {offsets = [2, 128], sizes = [1, 128], strides = [1, 1]} : vector<8x256xf32> to vector<1x128xf32>
    %14 = vector.shape_cast %13 : vector<1x128xf32> to vector<1x1x1x128xf32>
    %15 = vector.extract_strided_slice %7 {offsets = [3, 0], sizes = [1, 256], strides = [1, 1]} : vector<8x256xf32> to vector<1x256xf32>
    %16 = vector.extract_strided_slice %7 {offsets = [4, 0], sizes = [1, 64], strides = [1, 1]} : vector<8x256xf32> to vector<1x64xf32>
    %17 = vector.extract_strided_slice %7 {offsets = [5, 0], sizes = [1, 128], strides = [1, 1]} : vector<8x256xf32> to vector<1x128xf32>
    %c0_3 = arith.constant 0 : index
    %c0_4 = arith.constant 0 : index
    %18 = vector.load %arg10[%c0_3, %c0_4] : memref<64x128xf32, #tpu.memory_space<vmem>>, vector<64x128xf32>
    %19 = arith.truncf %18 : vector<64x128xf32> to vector<64x128xbf16>
    %c0_5 = arith.constant 0 : index
    %c0_6 = arith.constant 0 : index
    %c0_7 = arith.constant 0 : index
    %20 = vector.load %arg3[%c0_5, %c0_6, %c0_7] : memref<1x128x256xbf16, #tpu.memory_space<vmem>>, vector<1x128x256xbf16>
    %21 = vector.shape_cast %20 : vector<1x128x256xbf16> to vector<128x256xbf16>
    %cst = arith.constant dense<0.000000e+00> : vector<64x256xf32>
    %22 = tpu.matmul %19, %21, %cst {dimension_numbers = #tpu.dot_dimension_numbers<[1], [0], [0], [1], [0, 0, 1, 1], [], []>} : vector<64x128xbf16>, vector<128x256xbf16>, vector<64x256xf32> -> vector<64x256xf32>
    %23 = vector.broadcast %8 : vector<1x256xf32> to vector<64x256xf32>
    %24 = arith.addf %22, %23 : vector<64x256xf32>
    %cst_8 = arith.constant 3.000000e+00 : f32
    %25 = vector.broadcast %cst_8 : f32 to vector<64x256xf32>
    %26 = arith.addf %24, %25 : vector<64x256xf32>
    %cst_9 = arith.constant 0.000000e+00 : f32
    %cst_10 = arith.constant 6.000000e+00 : f32
    %27 = vector.broadcast %cst_9 : f32 to vector<64x256xf32>
    %28 = arith.maximumf %27, %26 : vector<64x256xf32>
    %29 = vector.broadcast %cst_10 : f32 to vector<64x256xf32>
    %30 = arith.minimumf %29, %28 : vector<64x256xf32>
    %cst_11 = arith.constant 0.166666672 : f32
    %31 = vector.broadcast %cst_11 : f32 to vector<64x256xf32>
    %32 = arith.mulf %30, %31 : vector<64x256xf32>
    %33 = arith.mulf %24, %32 : vector<64x256xf32>
    %34 = vector.broadcast %2 : f32 to vector<64x256xf32>
    %35 = arith.mulf %34, %33 : vector<64x256xf32>
    %cst_12 = arith.constant 1.000000e+00 : f32
    %36 = arith.subf %cst_12, %2 : f32
    %cst_13 = arith.constant 0.000000e+00 : f32
    %37 = vector.broadcast %cst_13 : f32 to vector<64x256xf32>
    %38 = arith.maximumf %24, %37 : vector<64x256xf32>
    %39 = vector.broadcast %36 : f32 to vector<64x256xf32>
    %40 = arith.mulf %39, %38 : vector<64x256xf32>
    %41 = arith.addf %35, %40 : vector<64x256xf32>
    %42 = vector.extract_strided_slice %41 {offsets = [0, 0], sizes = [64, 128], strides = [1, 1]} : vector<64x256xf32> to vector<64x128xf32>
    %43 = vector.broadcast %9 : vector<1x128xf32> to vector<64x128xf32>
    %44 = arith.mulf %42, %43 : vector<64x128xf32>
    %45 = vector.broadcast %10 : vector<1x128xf32> to vector<64x128xf32>
    %46 = arith.addf %44, %45 : vector<64x128xf32>
    %cst_14 = arith.constant 3.000000e+00 : f32
    %47 = vector.broadcast %cst_14 : f32 to vector<64x128xf32>
    %48 = arith.addf %46, %47 : vector<64x128xf32>
    %cst_15 = arith.constant 0.000000e+00 : f32
    %cst_16 = arith.constant 6.000000e+00 : f32
    %49 = vector.broadcast %cst_15 : f32 to vector<64x128xf32>
    %50 = arith.maximumf %49, %48 : vector<64x128xf32>
    %51 = vector.broadcast %cst_16 : f32 to vector<64x128xf32>
    %52 = arith.minimumf %51, %50 : vector<64x128xf32>
    %cst_17 = arith.constant 0.166666672 : f32
    %53 = vector.broadcast %cst_17 : f32 to vector<64x128xf32>
    %54 = arith.mulf %52, %53 : vector<64x128xf32>
    %55 = arith.mulf %46, %54 : vector<64x128xf32>
    %56 = vector.broadcast %2 : f32 to vector<64x128xf32>
    %57 = arith.mulf %56, %55 : vector<64x128xf32>
    %cst_18 = arith.constant 1.000000e+00 : f32
    %58 = arith.subf %cst_18, %2 : f32
    %cst_19 = arith.constant 0.000000e+00 : f32
    %59 = vector.broadcast %cst_19 : f32 to vector<64x128xf32>
    %60 = arith.maximumf %46, %59 : vector<64x128xf32>
    %61 = vector.broadcast %58 : f32 to vector<64x128xf32>
    %62 = arith.mulf %61, %60 : vector<64x128xf32>
    %63 = arith.addf %57, %62 : vector<64x128xf32>
    %64 = vector.shape_cast %63 : vector<64x128xf32> to vector<1x64x128xf32>
    %cst_20 = arith.constant dense<0.000000e+00> : vector<1x128xf32>
    %65 = vector.multi_reduction <add>, %64, %cst_20 [1] : vector<1x64x128xf32> to vector<1x128xf32>
    %cst_21 = arith.constant 1.562500e-02 : f32
    %66 = vector.broadcast %cst_21 : f32 to vector<1x128xf32>
    %67 = arith.mulf %65, %66 : vector<1x128xf32>
    %68 = vector.extract_strided_slice %41 {offsets = [0, 128], sizes = [64, 128], strides = [1, 1]} : vector<64x256xf32> to vector<64x128xf32>
    %69 = vector.shape_cast %68 : vector<64x128xf32> to vector<1x8x8x128xf32>
    %c0_22 = arith.constant 0 : index
    %c3 = arith.constant 3 : index
    %c3_23 = arith.constant 3 : index
    %c0_24 = arith.constant 0 : index
    %70 = vector.load %arg11[%c0_22, %c3, %c3_23, %c0_24] : memref<1x14x16x128xf32, #tpu.memory_space<vmem>>, vector<1x8x8x128xf32>
    tpu.vector_store %arg11[%c0_22, %c3, %c3_23, %c0_24], %69 {strides = array<i32>} : memref<1x14x16x128xf32, #tpu.memory_space<vmem>>, vector<1x8x8x128xf32>,
    %c0_25 = arith.constant 0 : index
    %c0_26 = arith.constant 0 : index
    %c0_27 = arith.constant 0 : index
    %71 = vector.load %arg4[%c0_25, %c0_26, %c0_27] : memref<1x56x128xf32, #tpu.memory_space<vmem>>, vector<1x56x128xf32>
    %72 = vector.shape_cast %71 : vector<1x56x128xf32> to vector<56x128xf32>
    %cst_28 = arith.constant 0.000000e+00 : f32
    %73 = vector.broadcast %cst_28 : f32 to vector<1x8x8x128xf32>
    %c0_29 = arith.constant 0 : index
    %c0_30 = arith.constant 0 : index
    %c0_31 = arith.constant 0 : index
    %c0_32 = arith.constant 0 : index
    %74 = vector.load %arg11[%c0_29, %c0_30, %c0_31, %c0_32] : memref<1x14x16x128xf32, #tpu.memory_space<vmem>>, vector<1x14x8x128xf32>
    %75 = vector.extract_strided_slice %72 {offsets = [0, 0], sizes = [1, 128], strides = [1, 1]} : vector<56x128xf32> to vector<1x128xf32>
    %76 = vector.shape_cast %75 : vector<1x128xf32> to vector<1x1x1x128xf32>
    %77 = vector.extract_strided_slice %74 {offsets = [0, 0, 0, 0], sizes = [1, 8, 8, 128], strides = [1, 1, 1, 1]} : vector<1x14x8x128xf32> to vector<1x8x8x128xf32>
    %78 = vector.broadcast %76 : vector<1x1x1x128xf32> to vector<1x8x8x128xf32>
    %79 = arith.mulf %78, %77 : vector<1x8x8x128xf32>
    %80 = arith.addf %73, %79 : vector<1x8x8x128xf32>
    %81 = vector.extract_strided_slice %72 {offsets = [7, 0], sizes = [1, 128], strides = [1, 1]} : vector<56x128xf32> to vector<1x128xf32>
    %82 = vector.shape_cast %81 : vector<1x128xf32> to vector<1x1x1x128xf32>
    %83 = vector.extract_strided_slice %74 {offsets = [0, 1, 0, 0], sizes = [1, 8, 8, 128], strides = [1, 1, 1, 1]} : vector<1x14x8x128xf32> to vector<1x8x8x128xf32>
    %84 = vector.broadcast %82 : vector<1x1x1x128xf32> to vector<1x8x8x128xf32>
    %85 = arith.mulf %84, %83 : vector<1x8x8x128xf32>
    %86 = arith.addf %80, %85 : vector<1x8x8x128xf32>
    %87 = vector.extract_strided_slice %72 {offsets = [14, 0], sizes = [1, 128], strides = [1, 1]} : vector<56x128xf32> to vector<1x128xf32>
    %88 = vector.shape_cast %87 : vector<1x128xf32> to vector<1x1x1x128xf32>
    %89 = vector.extract_strided_slice %74 {offsets = [0, 2, 0, 0], sizes = [1, 8, 8, 128], strides = [1, 1, 1, 1]} : vector<1x14x8x128xf32> to vector<1x8x8x128xf32>
    %90 = vector.broadcast %88 : vector<1x1x1x128xf32> to vector<1x8x8x128xf32>
    %91 = arith.mulf %90, %89 : vector<1x8x8x128xf32>
    %92 = arith.addf %86, %91 : vector<1x8x8x128xf32>
    %93 = vector.extract_strided_slice %72 {offsets = [21, 0], sizes = [1, 128], strides = [1, 1]} : vector<56x128xf32> to vector<1x128xf32>
    %94 = vector.shape_cast %93 : vector<1x128xf32> to vector<1x1x1x128xf32>
    %95 = vector.extract_strided_slice %74 {offsets = [0, 3, 0, 0], sizes = [1, 8, 8, 128], strides = [1, 1, 1, 1]} : vector<1x14x8x128xf32> to vector<1x8x8x128xf32>
    %96 = vector.broadcast %94 : vector<1x1x1x128xf32> to vector<1x8x8x128xf32>
    %97 = arith.mulf %96, %95 : vector<1x8x8x128xf32>
    %98 = arith.addf %92, %97 : vector<1x8x8x128xf32>
    %99 = vector.extract_strided_slice %72 {offsets = [28, 0], sizes = [1, 128], strides = [1, 1]} : vector<56x128xf32> to vector<1x128xf32>
    %100 = vector.shape_cast %99 : vector<1x128xf32> to vector<1x1x1x128xf32>
    %101 = vector.extract_strided_slice %74 {offsets = [0, 4, 0, 0], sizes = [1, 8, 8, 128], strides = [1, 1, 1, 1]} : vector<1x14x8x128xf32> to vector<1x8x8x128xf32>
    %102 = vector.broadcast %100 : vector<1x1x1x128xf32> to vector<1x8x8x128xf32>
    %103 = arith.mulf %102, %101 : vector<1x8x8x128xf32>
    %104 = arith.addf %98, %103 : vector<1x8x8x128xf32>
    %105 = vector.extract_strided_slice %72 {offsets = [35, 0], sizes = [1, 128], strides = [1, 1]} : vector<56x128xf32> to vector<1x128xf32>
    %106 = vector.shape_cast %105 : vector<1x128xf32> to vector<1x1x1x128xf32>
    %107 = vector.extract_strided_slice %74 {offsets = [0, 5, 0, 0], sizes = [1, 8, 8, 128], strides = [1, 1, 1, 1]} : vector<1x14x8x128xf32> to vector<1x8x8x128xf32>
    %108 = vector.broadcast %106 : vector<1x1x1x128xf32> to vector<1x8x8x128xf32>
    %109 = arith.mulf %108, %107 : vector<1x8x8x128xf32>
    %110 = arith.addf %104, %109 : vector<1x8x8x128xf32>
    %111 = vector.extract_strided_slice %72 {offsets = [42, 0], sizes = [1, 128], strides = [1, 1]} : vector<56x128xf32> to vector<1x128xf32>
    %112 = vector.shape_cast %111 : vector<1x128xf32> to vector<1x1x1x128xf32>
    %113 = vector.extract_strided_slice %74 {offsets = [0, 6, 0, 0], sizes = [1, 8, 8, 128], strides = [1, 1, 1, 1]} : vector<1x14x8x128xf32> to vector<1x8x8x128xf32>
    %114 = vector.broadcast %112 : vector<1x1x1x128xf32> to vector<1x8x8x128xf32>
    %115 = arith.mulf %114, %113 : vector<1x8x8x128xf32>
    %116 = arith.addf %110, %115 : vector<1x8x8x128xf32>
    %c0_33 = arith.constant 0 : index
    %c0_34 = arith.constant 0 : index
    %c1 = arith.constant 1 : index
    %c0_35 = arith.constant 0 : index
    %117 = vector.load %arg11[%c0_33, %c0_34, %c1, %c0_35] : memref<1x14x16x128xf32, #tpu.memory_space<vmem>>, vector<1x14x8x128xf32>
    %118 = vector.extract_strided_slice %72 {offsets = [1, 0], sizes = [1, 128], strides = [1, 1]} : vector<56x128xf32> to vector<1x128xf32>
    %119 = vector.shape_cast %118 : vector<1x128xf32> to vector<1x1x1x128xf32>
    %120 = vector.extract_strided_slice %117 {offsets = [0, 0, 0, 0], sizes = [1, 8, 8, 128], strides = [1, 1, 1, 1]} : vector<1x14x8x128xf32> to vector<1x8x8x128xf32>
    %121 = vector.broadcast %119 : vector<1x1x1x128xf32> to vector<1x8x8x128xf32>
    %122 = arith.mulf %121, %120 : vector<1x8x8x128xf32>
    %123 = arith.addf %116, %122 : vector<1x8x8x128xf32>
    %124 = vector.extract_strided_slice %72 {offsets = [8, 0], sizes = [1, 128], strides = [1, 1]} : vector<56x128xf32> to vector<1x128xf32>
    %125 = vector.shape_cast %124 : vector<1x128xf32> to vector<1x1x1x128xf32>
    %126 = vector.extract_strided_slice %117 {offsets = [0, 1, 0, 0], sizes = [1, 8, 8, 128], strides = [1, 1, 1, 1]} : vector<1x14x8x128xf32> to vector<1x8x8x128xf32>
    %127 = vector.broadcast %125 : vector<1x1x1x128xf32> to vector<1x8x8x128xf32>
    %128 = arith.mulf %127, %126 : vector<1x8x8x128xf32>
    %129 = arith.addf %123, %128 : vector<1x8x8x128xf32>
    %130 = vector.extract_strided_slice %72 {offsets = [15, 0], sizes = [1, 128], strides = [1, 1]} : vector<56x128xf32> to vector<1x128xf32>
    %131 = vector.shape_cast %130 : vector<1x128xf32> to vector<1x1x1x128xf32>
    %132 = vector.extract_strided_slice %117 {offsets = [0, 2, 0, 0], sizes = [1, 8, 8, 128], strides = [1, 1, 1, 1]} : vector<1x14x8x128xf32> to vector<1x8x8x128xf32>
    %133 = vector.broadcast %131 : vector<1x1x1x128xf32> to vector<1x8x8x128xf32>
    %134 = arith.mulf %133, %132 : vector<1x8x8x128xf32>
    %135 = arith.addf %129, %134 : vector<1x8x8x128xf32>
    %136 = vector.extract_strided_slice %72 {offsets = [22, 0], sizes = [1, 128], strides = [1, 1]} : vector<56x128xf32> to vector<1x128xf32>
    %137 = vector.shape_cast %136 : vector<1x128xf32> to vector<1x1x1x128xf32>
    %138 = vector.extract_strided_slice %117 {offsets = [0, 3, 0, 0], sizes = [1, 8, 8, 128], strides = [1, 1, 1, 1]} : vector<1x14x8x128xf32> to vector<1x8x8x128xf32>
    %139 = vector.broadcast %137 : vector<1x1x1x128xf32> to vector<1x8x8x128xf32>
    %140 = arith.mulf %139, %138 : vector<1x8x8x128xf32>
    %141 = arith.addf %135, %140 : vector<1x8x8x128xf32>
    %142 = vector.extract_strided_slice %72 {offsets = [29, 0], sizes = [1, 128], strides = [1, 1]} : vector<56x128xf32> to vector<1x128xf32>
    %143 = vector.shape_cast %142 : vector<1x128xf32> to vector<1x1x1x128xf32>
    %144 = vector.extract_strided_slice %117 {offsets = [0, 4, 0, 0], sizes = [1, 8, 8, 128], strides = [1, 1, 1, 1]} : vector<1x14x8x128xf32> to vector<1x8x8x128xf32>
    %145 = vector.broadcast %143 : vector<1x1x1x128xf32> to vector<1x8x8x128xf32>
    %146 = arith.mulf %145, %144 : vector<1x8x8x128xf32>
    %147 = arith.addf %141, %146 : vector<1x8x8x128xf32>
    %148 = vector.extract_strided_slice %72 {offsets = [36, 0], sizes = [1, 128], strides = [1, 1]} : vector<56x128xf32> to vector<1x128xf32>
    %149 = vector.shape_cast %148 : vector<1x128xf32> to vector<1x1x1x128xf32>
    %150 = vector.extract_strided_slice %117 {offsets = [0, 5, 0, 0], sizes = [1, 8, 8, 128], strides = [1, 1, 1, 1]} : vector<1x14x8x128xf32> to vector<1x8x8x128xf32>
    %151 = vector.broadcast %149 : vector<1x1x1x128xf32> to vector<1x8x8x128xf32>
    %152 = arith.mulf %151, %150 : vector<1x8x8x128xf32>
    %153 = arith.addf %147, %152 : vector<1x8x8x128xf32>
    %154 = vector.extract_strided_slice %72 {offsets = [43, 0], sizes = [1, 128], strides = [1, 1]} : vector<56x128xf32> to vector<1x128xf32>
    %155 = vector.shape_cast %154 : vector<1x128xf32> to vector<1x1x1x128xf32>
    %156 = vector.extract_strided_slice %117 {offsets = [0, 6, 0, 0], sizes = [1, 8, 8, 128], strides = [1, 1, 1, 1]} : vector<1x14x8x128xf32> to vector<1x8x8x128xf32>
    %157 = vector.broadcast %155 : vector<1x1x1x128xf32> to vector<1x8x8x128xf32>
    %158 = arith.mulf %157, %156 : vector<1x8x8x128xf32>
    %159 = arith.addf %153, %158 : vector<1x8x8x128xf32>
    %c0_36 = arith.constant 0 : index
    %c0_37 = arith.constant 0 : index
    %c2 = arith.constant 2 : index
    %c0_38 = arith.constant 0 : index
    %160 = vector.load %arg11[%c0_36, %c0_37, %c2, %c0_38] : memref<1x14x16x128xf32, #tpu.memory_space<vmem>>, vector<1x14x8x128xf32>
    %161 = vector.extract_strided_slice %72 {offsets = [2, 0], sizes = [1, 128], strides = [1, 1]} : vector<56x128xf32> to vector<1x128xf32>
    %162 = vector.shape_cast %161 : vector<1x128xf32> to vector<1x1x1x128xf32>
    %163 = vector.extract_strided_slice %160 {offsets = [0, 0, 0, 0], sizes = [1, 8, 8, 128], strides = [1, 1, 1, 1]} : vector<1x14x8x128xf32> to vector<1x8x8x128xf32>
    %164 = vector.broadcast %162 : vector<1x1x1x128xf32> to vector<1x8x8x128xf32>
    %165 = arith.mulf %164, %163 : vector<1x8x8x128xf32>
    %166 = arith.addf %159, %165 : vector<1x8x8x128xf32>
    %167 = vector.extract_strided_slice %72 {offsets = [9, 0], sizes = [1, 128], strides = [1, 1]} : vector<56x128xf32> to vector<1x128xf32>
    %168 = vector.shape_cast %167 : vector<1x128xf32> to vector<1x1x1x128xf32>
    %169 = vector.extract_strided_slice %160 {offsets = [0, 1, 0, 0], sizes = [1, 8, 8, 128], strides = [1, 1, 1, 1]} : vector<1x14x8x128xf32> to vector<1x8x8x128xf32>
    %170 = vector.broadcast %168 : vector<1x1x1x128xf32> to vector<1x8x8x128xf32>
    %171 = arith.mulf %170, %169 : vector<1x8x8x128xf32>
    %172 = arith.addf %166, %171 : vector<1x8x8x128xf32>
    %173 = vector.extract_strided_slice %72 {offsets = [16, 0], sizes = [1, 128], strides = [1, 1]} : vector<56x128xf32> to vector<1x128xf32>
    %174 = vector.shape_cast %173 : vector<1x128xf32> to vector<1x1x1x128xf32>
    %175 = vector.extract_strided_slice %160 {offsets = [0, 2, 0, 0], sizes = [1, 8, 8, 128], strides = [1, 1, 1, 1]} : vector<1x14x8x128xf32> to vector<1x8x8x128xf32>
    %176 = vector.broadcast %174 : vector<1x1x1x128xf32> to vector<1x8x8x128xf32>
    %177 = arith.mulf %176, %175 : vector<1x8x8x128xf32>
    %178 = arith.addf %172, %177 : vector<1x8x8x128xf32>
    %179 = vector.extract_strided_slice %72 {offsets = [23, 0], sizes = [1, 128], strides = [1, 1]} : vector<56x128xf32> to vector<1x128xf32>
    %180 = vector.shape_cast %179 : vector<1x128xf32> to vector<1x1x1x128xf32>
    %181 = vector.extract_strided_slice %160 {offsets = [0, 3, 0, 0], sizes = [1, 8, 8, 128], strides = [1, 1, 1, 1]} : vector<1x14x8x128xf32> to vector<1x8x8x128xf32>
    %182 = vector.broadcast %180 : vector<1x1x1x128xf32> to vector<1x8x8x128xf32>
    %183 = arith.mulf %182, %181 : vector<1x8x8x128xf32>
    %184 = arith.addf %178, %183 : vector<1x8x8x128xf32>
    %185 = vector.extract_strided_slice %72 {offsets = [30, 0], sizes = [1, 128], strides = [1, 1]} : vector<56x128xf32> to vector<1x128xf32>
    %186 = vector.shape_cast %185 : vector<1x128xf32> to vector<1x1x1x128xf32>
    %187 = vector.extract_strided_slice %160 {offsets = [0, 4, 0, 0], sizes = [1, 8, 8, 128], strides = [1, 1, 1, 1]} : vector<1x14x8x128xf32> to vector<1x8x8x128xf32>
    %188 = vector.broadcast %186 : vector<1x1x1x128xf32> to vector<1x8x8x128xf32>
    %189 = arith.mulf %188, %187 : vector<1x8x8x128xf32>
    %190 = arith.addf %184, %189 : vector<1x8x8x128xf32>
    %191 = vector.extract_strided_slice %72 {offsets = [37, 0], sizes = [1, 128], strides = [1, 1]} : vector<56x128xf32> to vector<1x128xf32>
    %192 = vector.shape_cast %191 : vector<1x128xf32> to vector<1x1x1x128xf32>
    %193 = vector.extract_strided_slice %160 {offsets = [0, 5, 0, 0], sizes = [1, 8, 8, 128], strides = [1, 1, 1, 1]} : vector<1x14x8x128xf32> to vector<1x8x8x128xf32>
    %194 = vector.broadcast %192 : vector<1x1x1x128xf32> to vector<1x8x8x128xf32>
    %195 = arith.mulf %194, %193 : vector<1x8x8x128xf32>
    %196 = arith.addf %190, %195 : vector<1x8x8x128xf32>
    %197 = vector.extract_strided_slice %72 {offsets = [44, 0], sizes = [1, 128], strides = [1, 1]} : vector<56x128xf32> to vector<1x128xf32>
    %198 = vector.shape_cast %197 : vector<1x128xf32> to vector<1x1x1x128xf32>
    %199 = vector.extract_strided_slice %160 {offsets = [0, 6, 0, 0], sizes = [1, 8, 8, 128], strides = [1, 1, 1, 1]} : vector<1x14x8x128xf32> to vector<1x8x8x128xf32>
    %200 = vector.broadcast %198 : vector<1x1x1x128xf32> to vector<1x8x8x128xf32>
    %201 = arith.mulf %200, %199 : vector<1x8x8x128xf32>
    %202 = arith.addf %196, %201 : vector<1x8x8x128xf32>
    %c0_39 = arith.constant 0 : index
    %c0_40 = arith.constant 0 : index
    %c3_41 = arith.constant 3 : index
    %c0_42 = arith.constant 0 : index
    %203 = vector.load %arg11[%c0_39, %c0_40, %c3_41, %c0_42] : memref<1x14x16x128xf32, #tpu.memory_space<vmem>>, vector<1x14x8x128xf32>
    %204 = vector.extract_strided_slice %72 {offsets = [3, 0], sizes = [1, 128], strides = [1, 1]} : vector<56x128xf32> to vector<1x128xf32>
    %205 = vector.shape_cast %204 : vector<1x128xf32> to vector<1x1x1x128xf32>
    %206 = vector.extract_strided_slice %203 {offsets = [0, 0, 0, 0], sizes = [1, 8, 8, 128], strides = [1, 1, 1, 1]} : vector<1x14x8x128xf32> to vector<1x8x8x128xf32>
    %207 = vector.broadcast %205 : vector<1x1x1x128xf32> to vector<1x8x8x128xf32>
    %208 = arith.mulf %207, %206 : vector<1x8x8x128xf32>
    %209 = arith.addf %202, %208 : vector<1x8x8x128xf32>
    %210 = vector.extract_strided_slice %72 {offsets = [10, 0], sizes = [1, 128], strides = [1, 1]} : vector<56x128xf32> to vector<1x128xf32>
    %211 = vector.shape_cast %210 : vector<1x128xf32> to vector<1x1x1x128xf32>
    %212 = vector.extract_strided_slice %203 {offsets = [0, 1, 0, 0], sizes = [1, 8, 8, 128], strides = [1, 1, 1, 1]} : vector<1x14x8x128xf32> to vector<1x8x8x128xf32>
    %213 = vector.broadcast %211 : vector<1x1x1x128xf32> to vector<1x8x8x128xf32>
    %214 = arith.mulf %213, %212 : vector<1x8x8x128xf32>
    %215 = arith.addf %209, %214 : vector<1x8x8x128xf32>
    %216 = vector.extract_strided_slice %72 {offsets = [17, 0], sizes = [1, 128], strides = [1, 1]} : vector<56x128xf32> to vector<1x128xf32>
    %217 = vector.shape_cast %216 : vector<1x128xf32> to vector<1x1x1x128xf32>
    %218 = vector.extract_strided_slice %203 {offsets = [0, 2, 0, 0], sizes = [1, 8, 8, 128], strides = [1, 1, 1, 1]} : vector<1x14x8x128xf32> to vector<1x8x8x128xf32>
    %219 = vector.broadcast %217 : vector<1x1x1x128xf32> to vector<1x8x8x128xf32>
    %220 = arith.mulf %219, %218 : vector<1x8x8x128xf32>
    %221 = arith.addf %215, %220 : vector<1x8x8x128xf32>
    %222 = vector.extract_strided_slice %72 {offsets = [24, 0], sizes = [1, 128], strides = [1, 1]} : vector<56x128xf32> to vector<1x128xf32>
    %223 = vector.shape_cast %222 : vector<1x128xf32> to vector<1x1x1x128xf32>
    %224 = vector.extract_strided_slice %203 {offsets = [0, 3, 0, 0], sizes = [1, 8, 8, 128], strides = [1, 1, 1, 1]} : vector<1x14x8x128xf32> to vector<1x8x8x128xf32>
    %225 = vector.broadcast %223 : vector<1x1x1x128xf32> to vector<1x8x8x128xf32>
    %226 = arith.mulf %225, %224 : vector<1x8x8x128xf32>
    %227 = arith.addf %221, %226 : vector<1x8x8x128xf32>
    %228 = vector.extract_strided_slice %72 {offsets = [31, 0], sizes = [1, 128], strides = [1, 1]} : vector<56x128xf32> to vector<1x128xf32>
    %229 = vector.shape_cast %228 : vector<1x128xf32> to vector<1x1x1x128xf32>
    %230 = vector.extract_strided_slice %203 {offsets = [0, 4, 0, 0], sizes = [1, 8, 8, 128], strides = [1, 1, 1, 1]} : vector<1x14x8x128xf32> to vector<1x8x8x128xf32>
    %231 = vector.broadcast %229 : vector<1x1x1x128xf32> to vector<1x8x8x128xf32>
    %232 = arith.mulf %231, %230 : vector<1x8x8x128xf32>
    %233 = arith.addf %227, %232 : vector<1x8x8x128xf32>
    %234 = vector.extract_strided_slice %72 {offsets = [38, 0], sizes = [1, 128], strides = [1, 1]} : vector<56x128xf32> to vector<1x128xf32>
    %235 = vector.shape_cast %234 : vector<1x128xf32> to vector<1x1x1x128xf32>
    %236 = vector.extract_strided_slice %203 {offsets = [0, 5, 0, 0], sizes = [1, 8, 8, 128], strides = [1, 1, 1, 1]} : vector<1x14x8x128xf32> to vector<1x8x8x128xf32>
    %237 = vector.broadcast %235 : vector<1x1x1x128xf32> to vector<1x8x8x128xf32>
    %238 = arith.mulf %237, %236 : vector<1x8x8x128xf32>
    %239 = arith.addf %233, %238 : vector<1x8x8x128xf32>
    %240 = vector.extract_strided_slice %72 {offsets = [45, 0], sizes = [1, 128], strides = [1, 1]} : vector<56x128xf32> to vector<1x128xf32>
    %241 = vector.shape_cast %240 : vector<1x128xf32> to vector<1x1x1x128xf32>
    %242 = vector.extract_strided_slice %203 {offsets = [0, 6, 0, 0], sizes = [1, 8, 8, 128], strides = [1, 1, 1, 1]} : vector<1x14x8x128xf32> to vector<1x8x8x128xf32>
    %243 = vector.broadcast %241 : vector<1x1x1x128xf32> to vector<1x8x8x128xf32>
    %244 = arith.mulf %243, %242 : vector<1x8x8x128xf32>
    %245 = arith.addf %239, %244 : vector<1x8x8x128xf32>
    %c0_43 = arith.constant 0 : index
    %c0_44 = arith.constant 0 : index
    %c4 = arith.constant 4 : index
    %c0_45 = arith.constant 0 : index
    %246 = vector.load %arg11[%c0_43, %c0_44, %c4, %c0_45] : memref<1x14x16x128xf32, #tpu.memory_space<vmem>>, vector<1x14x8x128xf32>
    %247 = vector.extract_strided_slice %72 {offsets = [4, 0], sizes = [1, 128], strides = [1, 1]} : vector<56x128xf32> to vector<1x128xf32>
    %248 = vector.shape_cast %247 : vector<1x128xf32> to vector<1x1x1x128xf32>
    %249 = vector.extract_strided_slice %246 {offsets = [0, 0, 0, 0], sizes = [1, 8, 8, 128], strides = [1, 1, 1, 1]} : vector<1x14x8x128xf32> to vector<1x8x8x128xf32>
    %250 = vector.broadcast %248 : vector<1x1x1x128xf32> to vector<1x8x8x128xf32>
    %251 = arith.mulf %250, %249 : vector<1x8x8x128xf32>
    %252 = arith.addf %245, %251 : vector<1x8x8x128xf32>
    %253 = vector.extract_strided_slice %72 {offsets = [11, 0], sizes = [1, 128], strides = [1, 1]} : vector<56x128xf32> to vector<1x128xf32>
    %254 = vector.shape_cast %253 : vector<1x128xf32> to vector<1x1x1x128xf32>
    %255 = vector.extract_strided_slice %246 {offsets = [0, 1, 0, 0], sizes = [1, 8, 8, 128], strides = [1, 1, 1, 1]} : vector<1x14x8x128xf32> to vector<1x8x8x128xf32>
    %256 = vector.broadcast %254 : vector<1x1x1x128xf32> to vector<1x8x8x128xf32>
    %257 = arith.mulf %256, %255 : vector<1x8x8x128xf32>
    %258 = arith.addf %252, %257 : vector<1x8x8x128xf32>
    %259 = vector.extract_strided_slice %72 {offsets = [18, 0], sizes = [1, 128], strides = [1, 1]} : vector<56x128xf32> to vector<1x128xf32>
    %260 = vector.shape_cast %259 : vector<1x128xf32> to vector<1x1x1x128xf32>
    %261 = vector.extract_strided_slice %246 {offsets = [0, 2, 0, 0], sizes = [1, 8, 8, 128], strides = [1, 1, 1, 1]} : vector<1x14x8x128xf32> to vector<1x8x8x128xf32>
    %262 = vector.broadcast %260 : vector<1x1x1x128xf32> to vector<1x8x8x128xf32>
    %263 = arith.mulf %262, %261 : vector<1x8x8x128xf32>
    %264 = arith.addf %258, %263 : vector<1x8x8x128xf32>
    %265 = vector.extract_strided_slice %72 {offsets = [25, 0], sizes = [1, 128], strides = [1, 1]} : vector<56x128xf32> to vector<1x128xf32>
    %266 = vector.shape_cast %265 : vector<1x128xf32> to vector<1x1x1x128xf32>
    %267 = vector.extract_strided_slice %246 {offsets = [0, 3, 0, 0], sizes = [1, 8, 8, 128], strides = [1, 1, 1, 1]} : vector<1x14x8x128xf32> to vector<1x8x8x128xf32>
    %268 = vector.broadcast %266 : vector<1x1x1x128xf32> to vector<1x8x8x128xf32>
    %269 = arith.mulf %268, %267 : vector<1x8x8x128xf32>
    %270 = arith.addf %264, %269 : vector<1x8x8x128xf32>
    %271 = vector.extract_strided_slice %72 {offsets = [32, 0], sizes = [1, 128], strides = [1, 1]} : vector<56x128xf32> to vector<1x128xf32>
    %272 = vector.shape_cast %271 : vector<1x128xf32> to vector<1x1x1x128xf32>
    %273 = vector.extract_strided_slice %246 {offsets = [0, 4, 0, 0], sizes = [1, 8, 8, 128], strides = [1, 1, 1, 1]} : vector<1x14x8x128xf32> to vector<1x8x8x128xf32>
    %274 = vector.broadcast %272 : vector<1x1x1x128xf32> to vector<1x8x8x128xf32>
    %275 = arith.mulf %274, %273 : vector<1x8x8x128xf32>
    %276 = arith.addf %270, %275 : vector<1x8x8x128xf32>
    %277 = vector.extract_strided_slice %72 {offsets = [39, 0], sizes = [1, 128], strides = [1, 1]} : vector<56x128xf32> to vector<1x128xf32>
    %278 = vector.shape_cast %277 : vector<1x128xf32> to vector<1x1x1x128xf32>
    %279 = vector.extract_strided_slice %246 {offsets = [0, 5, 0, 0], sizes = [1, 8, 8, 128], strides = [1, 1, 1, 1]} : vector<1x14x8x128xf32> to vector<1x8x8x128xf32>
    %280 = vector.broadcast %278 : vector<1x1x1x128xf32> to vector<1x8x8x128xf32>
    %281 = arith.mulf %280, %279 : vector<1x8x8x128xf32>
    %282 = arith.addf %276, %281 : vector<1x8x8x128xf32>
    %283 = vector.extract_strided_slice %72 {offsets = [46, 0], sizes = [1, 128], strides = [1, 1]} : vector<56x128xf32> to vector<1x128xf32>
    %284 = vector.shape_cast %283 : vector<1x128xf32> to vector<1x1x1x128xf32>
    %285 = vector.extract_strided_slice %246 {offsets = [0, 6, 0, 0], sizes = [1, 8, 8, 128], strides = [1, 1, 1, 1]} : vector<1x14x8x128xf32> to vector<1x8x8x128xf32>
    %286 = vector.broadcast %284 : vector<1x1x1x128xf32> to vector<1x8x8x128xf32>
    %287 = arith.mulf %286, %285 : vector<1x8x8x128xf32>
    %288 = arith.addf %282, %287 : vector<1x8x8x128xf32>
    %c0_46 = arith.constant 0 : index
    %c0_47 = arith.constant 0 : index
    %c5 = arith.constant 5 : index
    %c0_48 = arith.constant 0 : index
    %289 = vector.load %arg11[%c0_46, %c0_47, %c5, %c0_48] : memref<1x14x16x128xf32, #tpu.memory_space<vmem>>, vector<1x14x8x128xf32>
    %290 = vector.extract_strided_slice %72 {offsets = [5, 0], sizes = [1, 128], strides = [1, 1]} : vector<56x128xf32> to vector<1x128xf32>
    %291 = vector.shape_cast %290 : vector<1x128xf32> to vector<1x1x1x128xf32>
    %292 = vector.extract_strided_slice %289 {offsets = [0, 0, 0, 0], sizes = [1, 8, 8, 128], strides = [1, 1, 1, 1]} : vector<1x14x8x128xf32> to vector<1x8x8x128xf32>
    %293 = vector.broadcast %291 : vector<1x1x1x128xf32> to vector<1x8x8x128xf32>
    %294 = arith.mulf %293, %292 : vector<1x8x8x128xf32>
    %295 = arith.addf %288, %294 : vector<1x8x8x128xf32>
    %296 = vector.extract_strided_slice %72 {offsets = [12, 0], sizes = [1, 128], strides = [1, 1]} : vector<56x128xf32> to vector<1x128xf32>
    %297 = vector.shape_cast %296 : vector<1x128xf32> to vector<1x1x1x128xf32>
    %298 = vector.extract_strided_slice %289 {offsets = [0, 1, 0, 0], sizes = [1, 8, 8, 128], strides = [1, 1, 1, 1]} : vector<1x14x8x128xf32> to vector<1x8x8x128xf32>
    %299 = vector.broadcast %297 : vector<1x1x1x128xf32> to vector<1x8x8x128xf32>
    %300 = arith.mulf %299, %298 : vector<1x8x8x128xf32>
    %301 = arith.addf %295, %300 : vector<1x8x8x128xf32>
    %302 = vector.extract_strided_slice %72 {offsets = [19, 0], sizes = [1, 128], strides = [1, 1]} : vector<56x128xf32> to vector<1x128xf32>
    %303 = vector.shape_cast %302 : vector<1x128xf32> to vector<1x1x1x128xf32>
    %304 = vector.extract_strided_slice %289 {offsets = [0, 2, 0, 0], sizes = [1, 8, 8, 128], strides = [1, 1, 1, 1]} : vector<1x14x8x128xf32> to vector<1x8x8x128xf32>
    %305 = vector.broadcast %303 : vector<1x1x1x128xf32> to vector<1x8x8x128xf32>
    %306 = arith.mulf %305, %304 : vector<1x8x8x128xf32>
    %307 = arith.addf %301, %306 : vector<1x8x8x128xf32>
    %308 = vector.extract_strided_slice %72 {offsets = [26, 0], sizes = [1, 128], strides = [1, 1]} : vector<56x128xf32> to vector<1x128xf32>
    %309 = vector.shape_cast %308 : vector<1x128xf32> to vector<1x1x1x128xf32>
    %310 = vector.extract_strided_slice %289 {offsets = [0, 3, 0, 0], sizes = [1, 8, 8, 128], strides = [1, 1, 1, 1]} : vector<1x14x8x128xf32> to vector<1x8x8x128xf32>
    %311 = vector.broadcast %309 : vector<1x1x1x128xf32> to vector<1x8x8x128xf32>
    %312 = arith.mulf %311, %310 : vector<1x8x8x128xf32>
    %313 = arith.addf %307, %312 : vector<1x8x8x128xf32>
    %314 = vector.extract_strided_slice %72 {offsets = [33, 0], sizes = [1, 128], strides = [1, 1]} : vector<56x128xf32> to vector<1x128xf32>
    %315 = vector.shape_cast %314 : vector<1x128xf32> to vector<1x1x1x128xf32>
    %316 = vector.extract_strided_slice %289 {offsets = [0, 4, 0, 0], sizes = [1, 8, 8, 128], strides = [1, 1, 1, 1]} : vector<1x14x8x128xf32> to vector<1x8x8x128xf32>
    %317 = vector.broadcast %315 : vector<1x1x1x128xf32> to vector<1x8x8x128xf32>
    %318 = arith.mulf %317, %316 : vector<1x8x8x128xf32>
    %319 = arith.addf %313, %318 : vector<1x8x8x128xf32>
    %320 = vector.extract_strided_slice %72 {offsets = [40, 0], sizes = [1, 128], strides = [1, 1]} : vector<56x128xf32> to vector<1x128xf32>
    %321 = vector.shape_cast %320 : vector<1x128xf32> to vector<1x1x1x128xf32>
    %322 = vector.extract_strided_slice %289 {offsets = [0, 5, 0, 0], sizes = [1, 8, 8, 128], strides = [1, 1, 1, 1]} : vector<1x14x8x128xf32> to vector<1x8x8x128xf32>
    %323 = vector.broadcast %321 : vector<1x1x1x128xf32> to vector<1x8x8x128xf32>
    %324 = arith.mulf %323, %322 : vector<1x8x8x128xf32>
    %325 = arith.addf %319, %324 : vector<1x8x8x128xf32>
    %326 = vector.extract_strided_slice %72 {offsets = [47, 0], sizes = [1, 128], strides = [1, 1]} : vector<56x128xf32> to vector<1x128xf32>
    %327 = vector.shape_cast %326 : vector<1x128xf32> to vector<1x1x1x128xf32>
    %328 = vector.extract_strided_slice %289 {offsets = [0, 6, 0, 0], sizes = [1, 8, 8, 128], strides = [1, 1, 1, 1]} : vector<1x14x8x128xf32> to vector<1x8x8x128xf32>
    %329 = vector.broadcast %327 : vector<1x1x1x128xf32> to vector<1x8x8x128xf32>
    %330 = arith.mulf %329, %328 : vector<1x8x8x128xf32>
    %331 = arith.addf %325, %330 : vector<1x8x8x128xf32>
    %c0_49 = arith.constant 0 : index
    %c0_50 = arith.constant 0 : index
    %c6 = arith.constant 6 : index
    %c0_51 = arith.constant 0 : index
    %332 = vector.load %arg11[%c0_49, %c0_50, %c6, %c0_51] : memref<1x14x16x128xf32, #tpu.memory_space<vmem>>, vector<1x14x8x128xf32>
    %333 = vector.extract_strided_slice %72 {offsets = [6, 0], sizes = [1, 128], strides = [1, 1]} : vector<56x128xf32> to vector<1x128xf32>
    %334 = vector.shape_cast %333 : vector<1x128xf32> to vector<1x1x1x128xf32>
    %335 = vector.extract_strided_slice %332 {offsets = [0, 0, 0, 0], sizes = [1, 8, 8, 128], strides = [1, 1, 1, 1]} : vector<1x14x8x128xf32> to vector<1x8x8x128xf32>
    %336 = vector.broadcast %334 : vector<1x1x1x128xf32> to vector<1x8x8x128xf32>
    %337 = arith.mulf %336, %335 : vector<1x8x8x128xf32>
    %338 = arith.addf %331, %337 : vector<1x8x8x128xf32>
    %339 = vector.extract_strided_slice %72 {offsets = [13, 0], sizes = [1, 128], strides = [1, 1]} : vector<56x128xf32> to vector<1x128xf32>
    %340 = vector.shape_cast %339 : vector<1x128xf32> to vector<1x1x1x128xf32>
    %341 = vector.extract_strided_slice %332 {offsets = [0, 1, 0, 0], sizes = [1, 8, 8, 128], strides = [1, 1, 1, 1]} : vector<1x14x8x128xf32> to vector<1x8x8x128xf32>
    %342 = vector.broadcast %340 : vector<1x1x1x128xf32> to vector<1x8x8x128xf32>
    %343 = arith.mulf %342, %341 : vector<1x8x8x128xf32>
    %344 = arith.addf %338, %343 : vector<1x8x8x128xf32>
    %345 = vector.extract_strided_slice %72 {offsets = [20, 0], sizes = [1, 128], strides = [1, 1]} : vector<56x128xf32> to vector<1x128xf32>
    %346 = vector.shape_cast %345 : vector<1x128xf32> to vector<1x1x1x128xf32>
    %347 = vector.extract_strided_slice %332 {offsets = [0, 2, 0, 0], sizes = [1, 8, 8, 128], strides = [1, 1, 1, 1]} : vector<1x14x8x128xf32> to vector<1x8x8x128xf32>
    %348 = vector.broadcast %346 : vector<1x1x1x128xf32> to vector<1x8x8x128xf32>
    %349 = arith.mulf %348, %347 : vector<1x8x8x128xf32>
    %350 = arith.addf %344, %349 : vector<1x8x8x128xf32>
    %351 = vector.extract_strided_slice %72 {offsets = [27, 0], sizes = [1, 128], strides = [1, 1]} : vector<56x128xf32> to vector<1x128xf32>
    %352 = vector.shape_cast %351 : vector<1x128xf32> to vector<1x1x1x128xf32>
    %353 = vector.extract_strided_slice %332 {offsets = [0, 3, 0, 0], sizes = [1, 8, 8, 128], strides = [1, 1, 1, 1]} : vector<1x14x8x128xf32> to vector<1x8x8x128xf32>
    %354 = vector.broadcast %352 : vector<1x1x1x128xf32> to vector<1x8x8x128xf32>
    %355 = arith.mulf %354, %353 : vector<1x8x8x128xf32>
    %356 = arith.addf %350, %355 : vector<1x8x8x128xf32>
    %357 = vector.extract_strided_slice %72 {offsets = [34, 0], sizes = [1, 128], strides = [1, 1]} : vector<56x128xf32> to vector<1x128xf32>
    %358 = vector.shape_cast %357 : vector<1x128xf32> to vector<1x1x1x128xf32>
    %359 = vector.extract_strided_slice %332 {offsets = [0, 4, 0, 0], sizes = [1, 8, 8, 128], strides = [1, 1, 1, 1]} : vector<1x14x8x128xf32> to vector<1x8x8x128xf32>
    %360 = vector.broadcast %358 : vector<1x1x1x128xf32> to vector<1x8x8x128xf32>
    %361 = arith.mulf %360, %359 : vector<1x8x8x128xf32>
    %362 = arith.addf %356, %361 : vector<1x8x8x128xf32>
    %363 = vector.extract_strided_slice %72 {offsets = [41, 0], sizes = [1, 128], strides = [1, 1]} : vector<56x128xf32> to vector<1x128xf32>
    %364 = vector.shape_cast %363 : vector<1x128xf32> to vector<1x1x1x128xf32>
    %365 = vector.extract_strided_slice %332 {offsets = [0, 5, 0, 0], sizes = [1, 8, 8, 128], strides = [1, 1, 1, 1]} : vector<1x14x8x128xf32> to vector<1x8x8x128xf32>
    %366 = vector.broadcast %364 : vector<1x1x1x128xf32> to vector<1x8x8x128xf32>
    %367 = arith.mulf %366, %365 : vector<1x8x8x128xf32>
    %368 = arith.addf %362, %367 : vector<1x8x8x128xf32>
    %369 = vector.extract_strided_slice %72 {offsets = [48, 0], sizes = [1, 128], strides = [1, 1]} : vector<56x128xf32> to vector<1x128xf32>
    %370 = vector.shape_cast %369 : vector<1x128xf32> to vector<1x1x1x128xf32>
    %371 = vector.extract_strided_slice %332 {offsets = [0, 6, 0, 0], sizes = [1, 8, 8, 128], strides = [1, 1, 1, 1]} : vector<1x14x8x128xf32> to vector<1x8x8x128xf32>
    %372 = vector.broadcast %370 : vector<1x1x1x128xf32> to vector<1x8x8x128xf32>
    %373 = arith.mulf %372, %371 : vector<1x8x8x128xf32>
    %374 = arith.addf %368, %373 : vector<1x8x8x128xf32>
    %375 = vector.broadcast %12 : vector<1x1x1x128xf32> to vector<1x8x8x128xf32>
    %376 = arith.mulf %374, %375 : vector<1x8x8x128xf32>
    %377 = vector.broadcast %14 : vector<1x1x1x128xf32> to vector<1x8x8x128xf32>
    %378 = arith.addf %376, %377 : vector<1x8x8x128xf32>
    %cst_52 = arith.constant 3.000000e+00 : f32
    %379 = vector.broadcast %cst_52 : f32 to vector<1x8x8x128xf32>
    %380 = arith.addf %378, %379 : vector<1x8x8x128xf32>
    %cst_53 = arith.constant 0.000000e+00 : f32
    %cst_54 = arith.constant 6.000000e+00 : f32
    %381 = vector.broadcast %cst_53 : f32 to vector<1x8x8x128xf32>
    %382 = arith.maximumf %381, %380 : vector<1x8x8x128xf32>
    %383 = vector.broadcast %cst_54 : f32 to vector<1x8x8x128xf32>
    %384 = arith.minimumf %383, %382 : vector<1x8x8x128xf32>
    %cst_55 = arith.constant 0.166666672 : f32
    %385 = vector.broadcast %cst_55 : f32 to vector<1x8x8x128xf32>
    %386 = arith.mulf %384, %385 : vector<1x8x8x128xf32>
    %387 = arith.mulf %378, %386 : vector<1x8x8x128xf32>
    %388 = vector.broadcast %2 : f32 to vector<1x8x8x128xf32>
    %389 = arith.mulf %388, %387 : vector<1x8x8x128xf32>
    %cst_56 = arith.constant 1.000000e+00 : f32
    %390 = arith.subf %cst_56, %2 : f32
    %cst_57 = arith.constant 0.000000e+00 : f32
    %391 = vector.broadcast %cst_57 : f32 to vector<1x8x8x128xf32>
    %392 = arith.maximumf %378, %391 : vector<1x8x8x128xf32>
    %393 = vector.broadcast %390 : f32 to vector<1x8x8x128xf32>
    %394 = arith.mulf %393, %392 : vector<1x8x8x128xf32>
    %395 = arith.addf %389, %394 : vector<1x8x8x128xf32>
    %cst_58 = arith.constant dense<0.000000e+00> : vector<1x128xf32>
    %396 = vector.multi_reduction <add>, %395, %cst_58 [1, 2] : vector<1x8x8x128xf32> to vector<1x128xf32>
    %cst_59 = arith.constant 1.562500e-02 : f32
    %397 = vector.broadcast %cst_59 : f32 to vector<1x128xf32>
    %398 = arith.mulf %396, %397 : vector<1x128xf32>
    %399 = arith.truncf %67 : vector<1x128xf32> to vector<1x128xbf16>
    %c0_60 = arith.constant 0 : index
    %c0_61 = arith.constant 0 : index
    %c0_62 = arith.constant 0 : index
    %400 = vector.load %arg5[%c0_60, %c0_61, %c0_62] : memref<1x256x64xbf16, #tpu.memory_space<vmem>>, vector<1x128x64xbf16>
    %401 = vector.shape_cast %400 : vector<1x128x64xbf16> to vector<128x64xbf16>
    %cst_63 = arith.constant dense<0.000000e+00> : vector<1x64xf32>
    %402 = tpu.matmul %399, %401, %cst_63 {dimension_numbers = #tpu.dot_dimension_numbers<[1], [0], [0], [1], [0, 0, 1, 1], [], []>} : vector<1x128xbf16>, vector<128x64xbf16>, vector<1x64xf32> -> vector<1x64xf32>
    %403 = arith.truncf %398 : vector<1x128xf32> to vector<1x128xbf16>
    %c0_64 = arith.constant 0 : index
    %c128 = arith.constant 128 : index
    %c0_65 = arith.constant 0 : index
    %404 = vector.load %arg5[%c0_64, %c128, %c0_65] : memref<1x256x64xbf16, #tpu.memory_space<vmem>>, vector<1x128x64xbf16>
    %405 = vector.shape_cast %404 : vector<1x128x64xbf16> to vector<128x64xbf16>
    %cst_66 = arith.constant dense<0.000000e+00> : vector<1x64xf32>
    %406 = tpu.matmul %403, %405, %cst_66 {dimension_numbers = #tpu.dot_dimension_numbers<[1], [0], [0], [1], [0, 0, 1, 1], [], []>} : vector<1x128xbf16>, vector<128x64xbf16>, vector<1x64xf32> -> vector<1x64xf32>
    %407 = arith.addf %402, %406 : vector<1x64xf32>
    %408 = arith.addf %407, %16 : vector<1x64xf32>
    %cst_67 = arith.constant 0.000000e+00 : f32
    %409 = vector.broadcast %cst_67 : f32 to vector<1x64xf32>
    %410 = arith.maximumf %408, %409 : vector<1x64xf32>
    %411 = arith.truncf %410 : vector<1x64xf32> to vector<1x64xbf16>
    %c0_68 = arith.constant 0 : index
    %c0_69 = arith.constant 0 : index
    %c0_70 = arith.constant 0 : index
    %412 = vector.load %arg6[%c0_68, %c0_69, %c0_70] : memref<1x64x256xbf16, #tpu.memory_space<vmem>>, vector<1x64x256xbf16>
    %413 = vector.shape_cast %412 : vector<1x64x256xbf16> to vector<64x256xbf16>
    %cst_71 = arith.constant dense<0.000000e+00> : vector<1x256xf32>
    %414 = tpu.matmul %411, %413, %cst_71 {dimension_numbers = #tpu.dot_dimension_numbers<[1], [0], [0], [1], [0, 0, 1, 1], [], []>} : vector<1x64xbf16>, vector<64x256xbf16>, vector<1x256xf32> -> vector<1x256xf32>
    %415 = arith.addf %414, %15 : vector<1x256xf32>
    %cst_72 = arith.constant 0.166666672 : f32
    %416 = vector.broadcast %cst_72 : f32 to vector<1x256xf32>
    %417 = arith.mulf %415, %416 : vector<1x256xf32>
    %cst_73 = arith.constant 5.000000e-01 : f32
    %418 = vector.broadcast %cst_73 : f32 to vector<1x256xf32>
    %419 = arith.addf %417, %418 : vector<1x256xf32>
    %cst_74 = arith.constant 0.000000e+00 : f32
    %cst_75 = arith.constant 1.000000e+00 : f32
    %420 = vector.broadcast %cst_74 : f32 to vector<1x256xf32>
    %421 = arith.maximumf %420, %419 : vector<1x256xf32>
    %422 = vector.broadcast %cst_75 : f32 to vector<1x256xf32>
    %423 = arith.minimumf %422, %421 : vector<1x256xf32>
    %424 = vector.shape_cast %63 : vector<64x128xf32> to vector<1x64x128xf32>
    %425 = vector.extract_strided_slice %423 {offsets = [0, 0], sizes = [1, 128], strides = [1, 1]} : vector<1x256xf32> to vector<1x128xf32>
    %426 = vector.shape_cast %425 : vector<1x128xf32> to vector<1x1x128xf32>
    %427 = vector.broadcast %426 : vector<1x1x128xf32> to vector<1x64x128xf32>
    %428 = arith.mulf %424, %427 : vector<1x64x128xf32>
    %429 = vector.shape_cast %428 : vector<1x64x128xf32> to vector<64x128xf32>
    %430 = vector.extract_strided_slice %423 {offsets = [0, 128], sizes = [1, 128], strides = [1, 1]} : vector<1x256xf32> to vector<1x128xf32>
    %431 = vector.shape_cast %430 : vector<1x128xf32> to vector<1x1x1x128xf32>
    %432 = vector.broadcast %431 : vector<1x1x1x128xf32> to vector<1x8x8x128xf32>
    %433 = arith.mulf %395, %432 : vector<1x8x8x128xf32>
    %434 = vector.shape_cast %433 : vector<1x8x8x128xf32> to vector<64x128xf32>
    %435 = arith.truncf %429 : vector<64x128xf32> to vector<64x128xbf16>
    %c0_76 = arith.constant 0 : index
    %c0_77 = arith.constant 0 : index
    %c0_78 = arith.constant 0 : index
    %436 = vector.load %arg7[%c0_76, %c0_77, %c0_78] : memref<1x256x128xbf16, #tpu.memory_space<vmem>>, vector<1x128x128xbf16>
    %437 = vector.shape_cast %436 : vector<1x128x128xbf16> to vector<128x128xbf16>
    %cst_79 = arith.constant dense<0.000000e+00> : vector<64x128xf32>
    %438 = tpu.matmul %435, %437, %cst_79 {dimension_numbers = #tpu.dot_dimension_numbers<[1], [0], [0], [1], [0, 0, 1, 1], [], []>} : vector<64x128xbf16>, vector<128x128xbf16>, vector<64x128xf32> -> vector<64x128xf32>
    %439 = arith.truncf %434 : vector<64x128xf32> to vector<64x128xbf16>
    %c0_80 = arith.constant 0 : index
    %c128_81 = arith.constant 128 : index
    %c0_82 = arith.constant 0 : index
    %440 = vector.load %arg7[%c0_80, %c128_81, %c0_82] : memref<1x256x128xbf16, #tpu.memory_space<vmem>>, vector<1x128x128xbf16>
    %441 = vector.shape_cast %440 : vector<1x128x128xbf16> to vector<128x128xbf16>
    %cst_83 = arith.constant dense<0.000000e+00> : vector<64x128xf32>
    %442 = tpu.matmul %439, %441, %cst_83 {dimension_numbers = #tpu.dot_dimension_numbers<[1], [0], [0], [1], [0, 0, 1, 1], [], []>} : vector<64x128xbf16>, vector<128x128xbf16>, vector<64x128xf32> -> vector<64x128xf32>
    %443 = arith.addf %438, %442 : vector<64x128xf32>
    %444 = vector.broadcast %17 : vector<1x128xf32> to vector<64x128xf32>
    %445 = arith.addf %443, %444 : vector<64x128xf32>
    %446 = arith.addf %18, %445 : vector<64x128xf32>
    %c0_84 = arith.constant 0 : index
    %c0_85 = arith.constant 0 : index
    %447 = vector.load %arg10[%c0_84, %c0_85] : memref<64x128xf32, #tpu.memory_space<vmem>>, vector<64x128xf32>
    tpu.vector_store %arg10[%c0_84, %c0_85], %446 {strides = array<i32>} : memref<64x128xf32, #tpu.memory_space<vmem>>, vector<64x128xf32>,
    %c15_i32 = arith.constant 15 : i32
    %448 = arith.cmpi eq, %arg1, %c15_i32 : i32
    %449 = arith.extui %448 : i1 to i32
    %c0_i32_86 = arith.constant 0 : i32
    %450 = arith.cmpi ne, %449, %c0_i32_86 : i32
    scf.if %450 {
      %c0_87 = arith.constant 0 : index
      %c0_88 = arith.constant 0 : index
      %451 = vector.load %arg9[%c0_87, %c0_88] : memref<64x128xf32, #tpu.memory_space<vmem>>, vector<64x128xf32>
      tpu.vector_store %arg9[%c0_87, %c0_88], %446 {strides = array<i32>} : memref<64x128xf32, #tpu.memory_space<vmem>>, vector<64x128xf32>,
    } else {
    }
    return
  }
  func.func @transform_0(%arg0: i32, %arg1: i32) -> (i32, i32) {
    %c0_i32 = arith.constant 0 : i32
    %c0_i32_0 = arith.constant 0 : i32
    return %arg0, %c0_i32 : i32, i32
  }
  func.func @transform_1(%arg0: i32, %arg1: i32) -> (i32, i32, i32) {
    %c0_i32 = arith.constant 0 : i32
    %c0_i32_0 = arith.constant 0 : i32
    %c0_i32_1 = arith.constant 0 : i32
    return %arg1, %c0_i32, %c0_i32_0 : i32, i32, i32
  }
  func.func @transform_2(%arg0: i32, %arg1: i32) -> (i32, i32, i32) {
    %c0_i32 = arith.constant 0 : i32
    %c0_i32_0 = arith.constant 0 : i32
    %c0_i32_1 = arith.constant 0 : i32
    return %arg1, %c0_i32, %c0_i32_0 : i32, i32, i32
  }
  func.func @transform_3(%arg0: i32, %arg1: i32) -> (i32, i32, i32) {
    %c0_i32 = arith.constant 0 : i32
    %c0_i32_0 = arith.constant 0 : i32
    %c0_i32_1 = arith.constant 0 : i32
    return %arg1, %c0_i32, %c0_i32_0 : i32, i32, i32
  }
  func.func @transform_4(%arg0: i32, %arg1: i32) -> (i32, i32, i32) {
    %c0_i32 = arith.constant 0 : i32
    %c0_i32_0 = arith.constant 0 : i32
    %c0_i32_1 = arith.constant 0 : i32
    return %arg1, %c0_i32, %c0_i32_0 : i32, i32, i32
  }
  func.func @transform_5(%arg0: i32, %arg1: i32) -> (i32, i32, i32) {
    %c0_i32 = arith.constant 0 : i32
    %c0_i32_0 = arith.constant 0 : i32
    %c0_i32_1 = arith.constant 0 : i32
    return %arg1, %c0_i32, %c0_i32_0 : i32, i32, i32
  }
  func.func @transform_6(%arg0: i32, %arg1: i32) -> (i32, i32, i32) {
    %c0_i32 = arith.constant 0 : i32
    %c0_i32_0 = arith.constant 0 : i32
    %c0_i32_1 = arith.constant 0 : i32
    return %arg1, %c0_i32, %c0_i32_0 : i32, i32, i32
  }
  func.func @transform_7(%arg0: i32, %arg1: i32) -> (i32, i32) {
    %c0_i32 = arith.constant 0 : i32
    %c0_i32_0 = arith.constant 0 : i32
    return %arg0, %c0_i32 : i32, i32
  }
}

</mosaic_0001>

<llo_original>
// kernel: _lambda_.1
$region0: #{_lambda_.1}
  #allocation0 [shape = 'u32[]', space=smem, size = 0x4, offset = 0x4, fixed_abs, tag = 'smem constant byte address 0x4 - core index']
  #allocation1 [shape = 'u32[144,128]{1,0:T(1,128)}', space=vmem, size = 0x12000, scoped, tag = 'internal scratch']
  #allocation2 [shape = 'f32[64,128]{1,0:T(8,128)}', space=vmem, size = 0x8000, scoped, tag = 'scratch operand']
  #allocation3 [shape = 'f32[1,14,16,128]{3,2,1,0:T(8,128)}', space=vmem, size = 0x1c000, scoped, tag = 'scratch operand']
  %s0 = inlined_call_operand.hbm [shape: f32[128,128], index: 0, kind: input, shape index: {}]
  %s1 = inlined_call_operand.vmem [shape: bf16[16,128,256], index: 1, kind: input, shape index: {}]
  %s2 = inlined_call_operand.hbm [shape: f32[16,56,128], index: 2, kind: input, shape index: {}]
  %s3 = inlined_call_operand.vmem [shape: bf16[16,256,64], index: 3, kind: input, shape index: {}]
  %s4 = inlined_call_operand.vmem [shape: bf16[16,64,256], index: 4, kind: input, shape index: {}]
  %s5 = inlined_call_operand.hbm [shape: bf16[16,256,128], index: 5, kind: input, shape index: {}]
  %s6 = inlined_call_operand.hbm [shape: f32[16,8,256], index: 6, kind: input, shape index: {}]
  %s7 = inlined_call_operand.hbm [shape: f32[128,128], index: 7, kind: output, shape index: {}]
  %s8 = sld [smem:[#allocation0]]
  $region85: #{_lambda_.1} parent=0
    _
  %s10 = ssub.s32 1, %s8
  %s11 = scalar_select 0, %s10, %s8
  $region1: #{_lambda_.1} parent=0
    #allocation4 [shape = 'u8[65536]{0}', space=vmem, size = 0x10000, scoped, tag = 'input window, operand 0']
    #allocation5 [shape = 's32[2]{0}', space=sflag, size = 0x8, scoped, tag = 'scoped memory for _lambda_.1']
    #allocation6 [shape = 's32[2]{0}', space=sflag, size = 0x8, scoped, tag = 'scoped memory for _lambda_.1']
    #allocation7 [shape = 'u8[57344]{0}', space=vmem, size = 0xe000, scoped, tag = 'input window, operand 2']
    #allocation8 [shape = 's32[2]{0}', space=sflag, size = 0x8, scoped, tag = 'scoped memory for _lambda_.1']
    #allocation9 [shape = 'u8[131072]{0}', space=vmem, size = 0x20000, scoped, tag = 'input window, operand 5']
    #allocation10 [shape = 'u8[16384]{0}', space=vmem, size = 0x4000, scoped, tag = 'input window, operand 6']
    #allocation11 [shape = 's32[2]{0}', space=sflag, size = 0x8, scoped, tag = 'scoped memory for _lambda_.1']
    #allocation12 [shape = 'u8[65536]{0}', space=vmem, size = 0x10000, scoped, tag = 'output window, operand 0']
    %12 = vsyncpa [#allocation5], 0
    %s13 = scalar_lea.sflag [#allocation5], 1
    %14 = vsyncpa %s13, 0
    %15 = vsyncpa [#allocation8], 0
    %s16 = scalar_lea.sflag [#allocation8], 1
    %17 = vsyncpa %s16, 0
    %18 = vsyncpa [#allocation11], 0
    %s19 = scalar_lea.sflag [#allocation11], 1
    %20 = vsyncpa %s19, 0
    %21 = vsyncpa [#allocation6], 0
    %s22 = scalar_lea.sflag [#allocation6], 1
    %23 = vsyncpa %s22, 0
    loop: start=0, step=1, limit=34
    $region2: #{_lambda_.1} parent=1 // loop_pre_header
      _
    $region3: #{_lambda_.1} parent=1 // loop_header
      %s25 = sphi 0, %s29
      %p26 = scmp.ge.s32.totalorder %s25, 34
      %s32 = sphi 0, %s44
      %s33 = sphi 0, %s40
      %s34 = sphi 0, %s32
      %s35 = sphi 0, %s33
      %s36 = sphi 0, %s34
      %s37 = sphi 0, %s35
      %s47 = sphi 0, %s49
      %s50 = sphi 0, %s47
      %s51 = sphi 0, %s50
      %s67 = sphi 0, %s51
      %s73 = sphi 0, %s75
      %s76 = sphi 0, %s73
      %s77 = sphi 0, %s76
      %s93 = sphi 0, %s77
      %s99 = sphi 0, %s101
      %s102 = sphi 0, %s99
      %s103 = sphi 0, %s102
      %s119 = sphi 0, %s103
      %s125 = sphi 0, %s127
      %s128 = sphi 0, %s125
      %s129 = sphi 0, %s128
      %s145 = sphi 0, %s129
      %s151 = sphi 0, %s153
      %s154 = sphi 0, %s151
      %s155 = sphi 0, %s154
      %s171 = sphi 0, %s155
      %s177 = sphi 0, %s179
      %s180 = sphi 0, %s177
      %s181 = sphi 0, %s180
      %s197 = sphi 0, %s181
      %s203 = sphi 0, %s205
      %s206 = sphi 0, %s203
      %s207 = sphi 0, %s206
      %s223 = sphi 0, %s207
      %s229 = sphi 0, %s231
      %s232 = sphi 0, %s229
      %s233 = sphi 0, %s232
      %s249 = sphi 0, %s233
    $region4: #{_lambda_.1} parent=1 // loop_header_branch
      %28 = sbr.rel (%p26) target = $region8
    $region5: #{_lambda_.1} parent=1 // loop_body
      %s30 = ssub.s32 %s25, 1
      %s31 = ssub.s32 %s25, 2
      %s38 = sadd.s32 1, %s33
      %p39 = scmp.ge.s32.totalorder %s38, 16
      %s40 = scalar_select %p39, 0, %s38
      %s41 = sadd.s32 1, %s32
      %s42 = scalar_select %p39, %s41, %s32
      %p43 = scmp.ge.s32.totalorder %s42, 2
      %s44 = scalar_select %p43, 0, %s42
      %s45 = ssub.s32 %s32, %s44
      %p46 = scmp.eq.s32.totalorder %s45, 0
      %s48 = sadd.s32 %s47, 1
      %s49 = scalar_select %p46, %s47, %s48
      %p52 = pneg %p46
      %p53 = scmp.eq.s32.totalorder %s25, 31
      %p54 = por %p52, %p53
      %p55 = scmp.ne.s32.totalorder %s47, %s50
      %p56 = scmp.eq.s32.totalorder %s25, 0
      %p57 = por %p55, %p56
      %p58 = scmp.ne.s32.totalorder %s47, %s50
      %p59 = scmp.eq.s32.totalorder %s30, 31
      %p60 = por %p58, %p59
      %p61 = scmp.ne.s32.totalorder %s50, %s51
      %p62 = scmp.eq.s32.totalorder %s30, 0
      %p63 = por %p61, %p62
      %p64 = scmp.ne.s32.totalorder %s50, %s51
      %p65 = scmp.eq.s32.totalorder %s31, 31
      %p66 = por %p64, %p65
      %p68 = scmp.ne.s32.totalorder %s51, %s67
      %p69 = scmp.eq.s32.totalorder %s31, 0
      %p70 = por %p68, %p69
      %s71 = ssub.s32 %s33, %s40
      %p72 = scmp.eq.s32.totalorder %s71, 0
      %s74 = sadd.s32 %s73, 1
      %s75 = scalar_select %p72, %s73, %s74
      %p78 = pneg %p72
      %p79 = scmp.eq.s32.totalorder %s25, 31
      %p80 = por %p78, %p79
      %p81 = scmp.ne.s32.totalorder %s73, %s76
      %p82 = scmp.eq.s32.totalorder %s25, 0
      %p83 = por %p81, %p82
      %p84 = scmp.ne.s32.totalorder %s73, %s76
      %p85 = scmp.eq.s32.totalorder %s30, 31
      %p86 = por %p84, %p85
      %p87 = scmp.ne.s32.totalorder %s76, %s77
      %p88 = scmp.eq.s32.totalorder %s30, 0
      %p89 = por %p87, %p88
      %p90 = scmp.ne.s32.totalorder %s76, %s77
      %p91 = scmp.eq.s32.totalorder %s31, 31
      %p92 = por %p90, %p91
      %p94 = scmp.ne.s32.totalorder %s77, %s93
      %p95 = scmp.eq.s32.totalorder %s31, 0
      %p96 = por %p94, %p95
      %s97 = ssub.s32 %s33, %s40
      %p98 = scmp.eq.s32.totalorder %s97, 0
      %s100 = sadd.s32 %s99, 1
      %s101 = scalar_select %p98, %s99, %s100
      %p104 = pneg %p98
      %p105 = scmp.eq.s32.totalorder %s25, 31
      %p106 = por %p104, %p105
      %p107 = scmp.ne.s32.totalorder %s99, %s102
      %p108 = scmp.eq.s32.totalorder %s25, 0
      %p109 = por %p107, %p108
      %p110 = scmp.ne.s32.totalorder %s99, %s102
      %p111 = scmp.eq.s32.totalorder %s30, 31
      %p112 = por %p110, %p111
      %p113 = scmp.ne.s32.totalorder %s102, %s103
      %p114 = scmp.eq.s32.totalorder %s30, 0
      %p115 = por %p113, %p114
      %p116 = scmp.ne.s32.totalorder %s102, %s103
      %p117 = scmp.eq.s32.totalorder %s31, 31
      %p118 = por %p116, %p117
      %p120 = scmp.ne.s32.totalorder %s103, %s119
      %p121 = scmp.eq.s32.totalorder %s31, 0
      %p122 = por %p120, %p121
      %s123 = ssub.s32 %s33, %s40
      %p124 = scmp.eq.s32.totalorder %s123, 0
      %s126 = sadd.s32 %s125, 1
      %s127 = scalar_select %p124, %s125, %s126
      %p130 = pneg %p124
      %p131 = scmp.eq.s32.totalorder %s25, 31
      %p132 = por %p130, %p131
      %p133 = scmp.ne.s32.totalorder %s125, %s128
      %p134 = scmp.eq.s32.totalorder %s25, 0
      %p135 = por %p133, %p134
      %p136 = scmp.ne.s32.totalorder %s125, %s128
      %p137 = scmp.eq.s32.totalorder %s30, 31
      %p138 = por %p136, %p137
      %p139 = scmp.ne.s32.totalorder %s128, %s129
      %p140 = scmp.eq.s32.totalorder %s30, 0
      %p141 = por %p139, %p140
      %p142 = scmp.ne.s32.totalorder %s128, %s129
      %p143 = scmp.eq.s32.totalorder %s31, 31
      %p144 = por %p142, %p143
      %p146 = scmp.ne.s32.totalorder %s129, %s145
      %p147 = scmp.eq.s32.totalorder %s31, 0
      %p148 = por %p146, %p147
      %s149 = ssub.s32 %s33, %s40
      %p150 = scmp.eq.s32.totalorder %s149, 0
      %s152 = sadd.s32 %s151, 1
      %s153 = scalar_select %p150, %s151, %s152
      %p156 = pneg %p150
      %p157 = scmp.eq.s32.totalorder %s25, 31
      %p158 = por %p156, %p157
      %p159 = scmp.ne.s32.totalorder %s151, %s154
      %p160 = scmp.eq.s32.totalorder %s25, 0
      %p161 = por %p159, %p160
      %p162 = scmp.ne.s32.totalorder %s151, %s154
      %p163 = scmp.eq.s32.totalorder %s30, 31
      %p164 = por %p162, %p163
      %p165 = scmp.ne.s32.totalorder %s154, %s155
      %p166 = scmp.eq.s32.totalorder %s30, 0
      %p167 = por %p165, %p166
      %p168 = scmp.ne.s32.totalorder %s154, %s155
      %p169 = scmp.eq.s32.totalorder %s31, 31
      %p170 = por %p168, %p169
      %p172 = scmp.ne.s32.totalorder %s155, %s171
      %p173 = scmp.eq.s32.totalorder %s31, 0
      %p174 = por %p172, %p173
      %s175 = ssub.s32 %s33, %s40
      %p176 = scmp.eq.s32.totalorder %s175, 0
      %s178 = sadd.s32 %s177, 1
      %s179 = scalar_select %p176, %s177, %s178
      %p182 = pneg %p176
      %p183 = scmp.eq.s32.totalorder %s25, 31
      %p184 = por %p182, %p183
      %p185 = scmp.ne.s32.totalorder %s177, %s180
      %p186 = scmp.eq.s32.totalorder %s25, 0
      %p187 = por %p185, %p186
      %p188 = scmp.ne.s32.totalorder %s177, %s180
      %p189 = scmp.eq.s32.totalorder %s30, 31
      %p190 = por %p188, %p189
      %p191 = scmp.ne.s32.totalorder %s180, %s181
      %p192 = scmp.eq.s32.totalorder %s30, 0
      %p193 = por %p191, %p192
      %p194 = scmp.ne.s32.totalorder %s180, %s181
      %p195 = scmp.eq.s32.totalorder %s31, 31
      %p196 = por %p194, %p195
      %p198 = scmp.ne.s32.totalorder %s181, %s197
      %p199 = scmp.eq.s32.totalorder %s31, 0
      %p200 = por %p198, %p199
      %s201 = ssub.s32 %s33, %s40
      %p202 = scmp.eq.s32.totalorder %s201, 0
      %s204 = sadd.s32 %s203, 1
      %s205 = scalar_select %p202, %s203, %s204
      %p208 = pneg %p202
      %p209 = scmp.eq.s32.totalorder %s25, 31
      %p210 = por %p208, %p209
      %p211 = scmp.ne.s32.totalorder %s203, %s206
      %p212 = scmp.eq.s32.totalorder %s25, 0
      %p213 = por %p211, %p212
      %p214 = scmp.ne.s32.totalorder %s203, %s206
      %p215 = scmp.eq.s32.totalorder %s30, 31
      %p216 = por %p214, %p215
      %p217 = scmp.ne.s32.totalorder %s206, %s207
      %p218 = scmp.eq.s32.totalorder %s30, 0
      %p219 = por %p217, %p218
      %p220 = scmp.ne.s32.totalorder %s206, %s207
      %p221 = scmp.eq.s32.totalorder %s31, 31
      %p222 = por %p220, %p221
      %p224 = scmp.ne.s32.totalorder %s207, %s223
      %p225 = scmp.eq.s32.totalorder %s31, 0
      %p226 = por %p224, %p225
      %s227 = ssub.s32 %s32, %s44
      %p228 = scmp.eq.s32.totalorder %s227, 0
      %s230 = sadd.s32 %s229, 1
      %s231 = scalar_select %p228, %s229, %s230
      %p234 = pneg %p228
      %p235 = scmp.eq.s32.totalorder %s25, 31
      %p236 = por %p234, %p235
      %p237 = scmp.ne.s32.totalorder %s229, %s232
      %p238 = scmp.eq.s32.totalorder %s25, 0
      %p239 = por %p237, %p238
      %p240 = scmp.ne.s32.totalorder %s229, %s232
      %p241 = scmp.eq.s32.totalorder %s30, 31
      %p242 = por %p240, %p241
      %p243 = scmp.ne.s32.totalorder %s232, %s233
      %p244 = scmp.eq.s32.totalorder %s30, 0
      %p245 = por %p243, %p244
      %p246 = scmp.ne.s32.totalorder %s232, %s233
      %p247 = scmp.eq.s32.totalorder %s31, 31
      %p248 = por %p246, %p247
      %p250 = scmp.ne.s32.totalorder %s233, %s249
      %p251 = scmp.eq.s32.totalorder %s31, 0
      %p252 = por %p250, %p251
      %p253 = scmp.le.s32.totalorder 1, %s25
      %p254 = scmp.lt.s32.totalorder %s25, 33
      %p255 = pnand %p253, %p254
      %p256 = pneg %p255
      // Predicated region
      $region9: #{_lambda_.1} parent=5 // pred_check
        _
      $region10: #{_lambda_.1} parent=5 // pred_check_branch
        %258 = sbr.rel (%p255) target = $region12
      $region11: #{_lambda_.1} parent=5 // pred_region
        %s259 = ssub.s32 %s25, 1
      $region12: #{_lambda_.1} parent=5 // pred_fallthru
        _
      %p260 = scmp.lt.s32.totalorder %s25, 32
      // Predicated region
      $region13: #{_lambda_.1} parent=5 // pred_check
        %p261 = pneg %p260
      $region14: #{_lambda_.1} parent=5 // pred_check_branch
        %263 = sbr.rel (%p261) target = $region16
      $region15: #{_lambda_.1} parent=5 // pred_region
        // Predicated region
        $region17: #{_lambda_.1} parent=15 // pred_check
          %p264 = pneg %p57
        $region18: #{_lambda_.1} parent=15 // pred_check_branch
          %266 = sbr.rel (%p264) target = $region20
        $region19: #{_lambda_.1} parent=15 // pred_region
          %s267 = sand.u32 %s47, 1
          %s268 = scalar_lea.sflag [#allocation5], %s267
          %s269 = sand.u32 %s47, 1
          %s270 = smul.addr %s269, 64
          %s271 = scalar_lea.vmem [#allocation4], %s270
          %s272 = smul.u32 8, %s32
          %s274 = ssub.s32 1024, 1024
          %275 = vsyncadd %s268, %s274
          %s276 = smul.addr %s272, 128
          %s277 = scalar_lea.hbm %s0, %s276
          %s278 = sshll.u32 %s271, 4
          %s279 = int_to_ptr.vmem [resolvable:$true] %s278
          %284 = dma.hbm_to_vmem [thread:$0]  %s277, 1024, %s279, %s268, 128, 128, 8
        $region20: #{_lambda_.1} parent=15 // pred_fallthru
          _
        // Predicated region
        $region21: #{_lambda_.1} parent=15 // pred_check
          %p285 = pneg %p83
        $region22: #{_lambda_.1} parent=15 // pred_check_branch
          %287 = sbr.rel (%p285) target = $region24
        $region23: #{_lambda_.1} parent=15 // pred_region
          %p288 = scmp.lt.s32.totalorder %s33, 15
          %s289 = scalar_select %p288, %s33, 15
          %s290 = smul.addr %s289, 32
          %s291 = smul.addr %s290, 4
          %s292 = scalar_lea.vmem %s1, %s291
        $region24: #{_lambda_.1} parent=15 // pred_fallthru
          _
        // Predicated region
        $region25: #{_lambda_.1} parent=15 // pred_check
          %p293 = pneg %p109
        $region26: #{_lambda_.1} parent=15 // pred_check_branch
          %295 = sbr.rel (%p293) target = $region28
        $region27: #{_lambda_.1} parent=15 // pred_region
          %s296 = sand.u32 %s25, 1
          %s297 = scalar_lea.sflag [#allocation8], %s296
          %s298 = sand.u32 %s99, 1
          %s299 = smul.addr %s298, 56
          %s300 = scalar_lea.vmem [#allocation7], %s299
          %s302 = ssub.s32 896, 896
          %303 = vsyncadd %s297, %s302
          %s304 = smul.addr %s33, 7
          %s305 = smul.addr %s304, 128
          %s306 = scalar_lea.hbm %s2, %s305
          %s307 = sshll.u32 %s300, 4
          %s308 = int_to_ptr.vmem [resolvable:$true] %s307
          %313 = dma.hbm_to_vmem [thread:$0]  %s306, 896, %s308, %s297, 128, 128, 8
        $region28: #{_lambda_.1} parent=15 // pred_fallthru
          _
        // Predicated region
        $region29: #{_lambda_.1} parent=15 // pred_check
          %p314 = pneg %p135
        $region30: #{_lambda_.1} parent=15 // pred_check_branch
          %316 = sbr.rel (%p314) target = $region32
        $region31: #{_lambda_.1} parent=15 // pred_region
          %p317 = scmp.lt.s32.totalorder %s33, 15
          %s318 = scalar_select %p317, %s33, 15
          %s319 = smul.addr %s318, 32
          %s320 = smul.addr %s319, 4
          %s321 = scalar_lea.vmem %s3, %s320
        $region32: #{_lambda_.1} parent=15 // pred_fallthru
          _
        // Predicated region
        $region33: #{_lambda_.1} parent=15 // pred_check
          %p322 = pneg %p161
        $region34: #{_lambda_.1} parent=15 // pred_check_branch
          %324 = sbr.rel (%p322) target = $region36
        $region35: #{_lambda_.1} parent=15 // pred_region
          %p325 = scmp.lt.s32.totalorder %s33, 15
          %s326 = scalar_select %p325, %s33, 15
          %s327 = smul.addr %s326, 16
          %s328 = smul.addr %s327, 4
          %s329 = scalar_lea.vmem %s4, %s328
        $region36: #{_lambda_.1} parent=15 // pred_fallthru
          _
        // Predicated region
        $region37: #{_lambda_.1} parent=15 // pred_check
          %p330 = pneg %p187
        $region38: #{_lambda_.1} parent=15 // pred_check_branch
          %332 = sbr.rel (%p330) target = $region40
        $region39: #{_lambda_.1} parent=15 // pred_region
          %s333 = sand.u32 %s25, 1
          %s334 = scalar_lea.sflag [#allocation8], %s333
          %s335 = sand.u32 %s177, 1
          %s336 = smul.addr %s335, 128
          %s337 = scalar_lea.vmem [#allocation9], %s336
          %s339 = ssub.s32 2048, 2048
          %340 = vsyncadd %s334, %s339
          %s341 = smul.addr %s33, 32
          %s342 = smul.addr %s341, 64
          %s343 = scalar_lea.hbm %s5, %s342
          %s344 = sshll.u32 %s337, 4
          %s345 = int_to_ptr.vmem [resolvable:$true] %s344
          %350 = dma.hbm_to_vmem [thread:$0]  %s343, 2048, %s345, %s334, 64, 64, 4
        $region40: #{_lambda_.1} parent=15 // pred_fallthru
          _
        // Predicated region
        $region41: #{_lambda_.1} parent=15 // pred_check
          %p351 = pneg %p213
        $region42: #{_lambda_.1} parent=15 // pred_check_branch
          %353 = sbr.rel (%p351) target = $region44
        $region43: #{_lambda_.1} parent=15 // pred_region
          %s354 = sand.u32 %s203, 1
          %s355 = scalar_lea.sflag [#allocation11], %s354
          %s356 = sand.u32 %s203, 1
          %s357 = smul.addr %s356, 16
          %s358 = scalar_lea.vmem [#allocation10], %s357
          %s360 = ssub.s32 256, 256
          %361 = vsyncadd %s355, %s360
          %s362 = smul.addr %s33, 2
          %s363 = smul.addr %s362, 128
          %s364 = scalar_lea.hbm %s6, %s363
          %s366 = sshll.u32 %s358, 4
          %s367 = int_to_ptr.vmem [resolvable:$true] %s366
          %369 = dma.hbm_to_vmem [thread:$0]  %s364, 256, %s367, %s355
        $region44: #{_lambda_.1} parent=15 // pred_fallthru
          _
      $region16: #{_lambda_.1} parent=5 // pred_fallthru
        _
      %p370 = scmp.le.s32.totalorder 1, %s25
      %p371 = scmp.lt.s32.totalorder %s25, 33
      %p372 = pnand %p370, %p371
      %p373 = pneg %p372
      // Predicated region
      $region45: #{_lambda_.1} parent=5 // pred_check
        _
      $region46: #{_lambda_.1} parent=5 // pred_check_branch
        %375 = sbr.rel (%p372) target = $region48
      $region47: #{_lambda_.1} parent=5 // pred_region
        %s376 = ssub.s32 %s25, 1
        %s377 = sand.u32 %s50, 1
        %s378 = scalar_lea.sflag [#allocation5], %s377
        %s379 = sand.u32 %s50, 1
        %s380 = smul.addr %s379, 64
        %s381 = scalar_lea.vmem [#allocation4], %s380
        // Predicated region
        $region49: #{_lambda_.1} parent=47 // pred_check
          %p382 = pneg %p63
        $region50: #{_lambda_.1} parent=47 // pred_check_branch
          %384 = sbr.rel (%p382) target = $region52
        $region51: #{_lambda_.1} parent=47 // pred_region
          %385 = dma.done %s378, 1024
        $region52: #{_lambda_.1} parent=47 // pred_fallthru
          _
        %s386 = sand.u32 %s30, 1
        %s387 = scalar_lea.sflag [#allocation8], %s386
        %s388 = sand.u32 %s102, 1
        %s389 = smul.addr %s388, 56
        %s390 = scalar_lea.vmem [#allocation7], %s389
        // Predicated region
        $region53: #{_lambda_.1} parent=47 // pred_check
          %p391 = pneg %p115
        $region54: #{_lambda_.1} parent=47 // pred_check_branch
          %393 = sbr.rel (%p391) target = $region56
        $region55: #{_lambda_.1} parent=47 // pred_region
          %394 = dma.done %s387, 896
        $region56: #{_lambda_.1} parent=47 // pred_fallthru
          _
        %s395 = sand.u32 %s30, 1
        %s396 = scalar_lea.sflag [#allocation8], %s395
        %s397 = sand.u32 %s180, 1
        %s398 = smul.addr %s397, 128
        %s399 = scalar_lea.vmem [#allocation9], %s398
        // Predicated region
        $region57: #{_lambda_.1} parent=47 // pred_check
          %p400 = pneg %p193
        $region58: #{_lambda_.1} parent=47 // pred_check_branch
          %402 = sbr.rel (%p400) target = $region60
        $region59: #{_lambda_.1} parent=47 // pred_region
          %403 = dma.done %s396, 2048
        $region60: #{_lambda_.1} parent=47 // pred_fallthru
          _
        %s404 = sand.u32 %s206, 1
        %s405 = scalar_lea.sflag [#allocation11], %s404
        %s406 = sand.u32 %s206, 1
        %s407 = smul.addr %s406, 16
        %s408 = scalar_lea.vmem [#allocation10], %s407
        // Predicated region
        $region61: #{_lambda_.1} parent=47 // pred_check
          %p409 = pneg %p219
        $region62: #{_lambda_.1} parent=47 // pred_check_branch
          %411 = sbr.rel (%p409) target = $region64
        $region63: #{_lambda_.1} parent=47 // pred_region
          %412 = dma.done %s405, 256
        $region64: #{_lambda_.1} parent=47 // pred_fallthru
          _
        %s413 = sand.u32 %s50, 1
        %s414 = scalar_lea.sflag [#allocation5], %s413
        %s415 = sand.u32 %s50, 1
        %s416 = smul.addr %s415, 64
        %s417 = scalar_lea.vmem [#allocation4], %s416
        %p418 = pneg %p63
        %p419 = pneg %p60
        %p420 = scmp.lt.s32.totalorder %s35, 15
        %s421 = scalar_select %p420, %s35, 15
        %s422 = smul.addr %s421, 32
        %s423 = smul.addr %s422, 4
        %s424 = scalar_lea.vmem %s1, %s423
        %p425 = pneg %p89
        %p426 = pneg %p86
        %s427 = sand.u32 %s30, 1
        %s428 = scalar_lea.sflag [#allocation8], %s427
        %s429 = sand.u32 %s102, 1
        %s430 = smul.addr %s429, 56
        %s431 = scalar_lea.vmem [#allocation7], %s430
        %p432 = pneg %p115
        %p433 = pneg %p112
        %p434 = scmp.lt.s32.totalorder %s35, 15
        %s435 = scalar_select %p434, %s35, 15
        %s436 = smul.addr %s435, 32
        %s437 = smul.addr %s436, 4
        %s438 = scalar_lea.vmem %s3, %s437
        %p439 = pneg %p141
        %p440 = pneg %p138
        %p441 = scmp.lt.s32.totalorder %s35, 15
        %s442 = scalar_select %p441, %s35, 15
        %s443 = smul.addr %s442, 16
        %s444 = smul.addr %s443, 4
        %s445 = scalar_lea.vmem %s4, %s444
        %p446 = pneg %p167
        %p447 = pneg %p164
        %s448 = sand.u32 %s30, 1
        %s449 = scalar_lea.sflag [#allocation8], %s448
        %s450 = sand.u32 %s180, 1
        %s451 = smul.addr %s450, 128
        %s452 = scalar_lea.vmem [#allocation9], %s451
        %p453 = pneg %p193
        %p454 = pneg %p190
        %s455 = sand.u32 %s206, 1
        %s456 = scalar_lea.sflag [#allocation11], %s455
        %s457 = sand.u32 %s206, 1
        %s458 = smul.addr %s457, 16
        %s459 = scalar_lea.vmem [#allocation10], %s458
        %p460 = pneg %p219
        %p461 = pneg %p216
        %p462 = pneg %p245
        %p463 = pneg %p242
        %s464 = sand.u32 %s232, 1
        %s465 = scalar_lea.sflag [#allocation6], %s464
        %s466 = sand.u32 %s232, 1
        %s467 = smul.addr %s466, 64
        %s468 = scalar_lea.vmem [#allocation12], %s467
        %s469 = smul.u32 8, %s34
        %p470 = scmp.lt.s32.totalorder %s35, 15
        %s471 = scalar_select %p470, %s35, 15
        %s472 = smul.addr %s471, 32
        %s473 = smul.addr %s472, 4
        %s474 = scalar_lea.vmem %s1, %s473
        %p475 = scmp.lt.s32.totalorder %s35, 15
        %s476 = scalar_select %p475, %s35, 15
        %s477 = smul.addr %s476, 32
        %s478 = smul.addr %s477, 4
        %s479 = scalar_lea.vmem %s3, %s478
        %p480 = scmp.lt.s32.totalorder %s35, 15
        %s481 = scalar_select %p480, %s35, 15
        %s482 = smul.addr %s481, 16
        %s483 = smul.addr %s482, 4
        %s484 = scalar_lea.vmem %s4, %s483
        %s485 = smul.u32 8, %s34
        %p487 = scmp.ge.s32.totalorder %s35, 8
        %s488 = scalar_select %p487, 1, 0
        %s489 = scvt.s32.f32 %s488
        %p490 = scmp.eq.s32.totalorder %s35, 0
        // Predicated region
        $region65: #{_lambda_.1} parent=47 // pred_check
          %p491 = pneg %p490
        $region66: #{_lambda_.1} parent=47 // pred_check_branch
          %493 = sbr.rel (%p491) target = $region68
        $region67: #{_lambda_.1} parent=47 // pred_region
          %v494 = vld [vmem:[%s381] sm:$0xff]
          %v495 = vld [vmem:[%s381 + $0x8] sm:$0xff]
          %v496 = vld [vmem:[%s381 + $0x10] sm:$0xff]
          %v497 = vld [vmem:[%s381 + $0x18] sm:$0xff]
          %v498 = vld [vmem:[%s381 + $0x20] sm:$0xff]
          %v499 = vld [vmem:[%s381 + $0x28] sm:$0xff]
          %v500 = vld [vmem:[%s381 + $0x30] sm:$0xff]
          %v501 = vld [vmem:[%s381 + $0x38] sm:$0xff]
          %502 = vst [vmem:[#allocation2] sm:$0xff] %v494
          %503 = vst [vmem:[#allocation2 + $0x8] sm:$0xff] %v495
          %504 = vst [vmem:[#allocation2 + $0x10] sm:$0xff] %v496
          %505 = vst [vmem:[#allocation2 + $0x18] sm:$0xff] %v497
          %506 = vst [vmem:[#allocation2 + $0x20] sm:$0xff] %v498
          %507 = vst [vmem:[#allocation2 + $0x28] sm:$0xff] %v499
          %508 = vst [vmem:[#allocation2 + $0x30] sm:$0xff] %v500
          %509 = vst [vmem:[#allocation2 + $0x38] sm:$0xff] %v501
          %510 = vst [vmem:[#allocation3] sm:$0xff] 0.0
          %511 = vst [vmem:[#allocation3 + $0x8] sm:$0xff] 0.0
          %512 = vst [vmem:[#allocation3 + $0x10] sm:$0xff] 0.0
          %513 = vst [vmem:[#allocation3 + $0x18] sm:$0xff] 0.0
          %514 = vst [vmem:[#allocation3 + $0x20] sm:$0xff] 0.0
          %515 = vst [vmem:[#allocation3 + $0x28] sm:$0xff] 0.0
          %516 = vst [vmem:[#allocation3 + $0x30] sm:$0xff] 0.0
          %517 = vst [vmem:[#allocation3 + $0x38] sm:$0xff] 0.0
          %518 = vst [vmem:[#allocation3 + $0x40] sm:$0xff] 0.0
          %519 = vst [vmem:[#allocation3 + $0x48] sm:$0xff] 0.0
          %520 = vst [vmem:[#allocation3 + $0x50] sm:$0xff] 0.0
          %521 = vst [vmem:[#allocation3 + $0x58] sm:$0xff] 0.0
          %522 = vst [vmem:[#allocation3 + $0x60] sm:$0xff] 0.0
          %523 = vst [vmem:[#allocation3 + $0x68] sm:$0xff] 0.0
          %524 = vst [vmem:[#allocation3 + $0x70] sm:$0xff] 0.0
          %525 = vst [vmem:[#allocation3 + $0x78] sm:$0xff] 0.0
          %526 = vst [vmem:[#allocation3 + $0x80] sm:$0xff] 0.0
          %527 = vst [vmem:[#allocation3 + $0x88] sm:$0xff] 0.0
          %528 = vst [vmem:[#allocation3 + $0x90] sm:$0xff] 0.0
          %529 = vst [vmem:[#allocation3 + $0x98] sm:$0xff] 0.0
          %530 = vst [vmem:[#allocation3 + $0xa0] sm:$0xff] 0.0
          %531 = vst [vmem:[#allocation3 + $0xa8] sm:$0xff] 0.0
          %532 = vst [vmem:[#allocation3 + $0xb0] sm:$0xff] 0.0
          %533 = vst [vmem:[#allocation3 + $0xb8] sm:$0xff] 0.0
          %534 = vst [vmem:[#allocation3 + $0xc0] sm:$0xff] 0.0
          %535 = vst [vmem:[#allocation3 + $0xc8] sm:$0xff] 0.0
          %536 = vst [vmem:[#allocation3 + $0xd0] sm:$0xff] 0.0
          %537 = vst [vmem:[#allocation3 + $0xd8] sm:$0xff] 0.0
        $region68: #{_lambda_.1} parent=47 // pred_fallthru
          _
        %v538 = vld [vmem:[%s408] sm:$0xff]
        %v539 = vld [vmem:[%s408 + $0x8] sm:$0xff]
        %v540 = vld [vmem:[#allocation2] sm:$0xff]
        %v541 = vld [vmem:[#allocation2 + $0x8] sm:$0xff]
        %v542 = vld [vmem:[#allocation2 + $0x10] sm:$0xff]
        %v543 = vld [vmem:[#allocation2 + $0x18] sm:$0xff]
        %v544 = vld [vmem:[#allocation2 + $0x20] sm:$0xff]
        %v545 = vld [vmem:[#allocation2 + $0x28] sm:$0xff]
        %v546 = vld [vmem:[#allocation2 + $0x30] sm:$0xff]
        %v547 = vld [vmem:[#allocation2 + $0x38] sm:$0xff]
        %v548 = vpack.c.bf16 %v541, %v540
        %v549 = vpack.c.bf16 %v543, %v542
        %v550 = vpack.c.bf16 %v545, %v544
        %v551 = vpack.c.bf16 %v547, %v546
        %v552 = vld [vmem:[%s474] sm:$0xff]
        %v553 = vld [vmem:[%s474 + $0x8] sm:$0xff]
        %v554 = vld [vmem:[%s474 + $0x10] sm:$0xff]
        %v555 = vld [vmem:[%s474 + $0x18] sm:$0xff]
        %v556 = vld [vmem:[%s474 + $0x20] sm:$0xff]
        %v557 = vld [vmem:[%s474 + $0x28] sm:$0xff]
        %v558 = vld [vmem:[%s474 + $0x30] sm:$0xff]
        %v559 = vld [vmem:[%s474 + $0x38] sm:$0xff]
        %v560 = vld [vmem:[%s474 + $0x40] sm:$0xff]
        %v561 = vld [vmem:[%s474 + $0x48] sm:$0xff]
        %v562 = vld [vmem:[%s474 + $0x50] sm:$0xff]
        %v563 = vld [vmem:[%s474 + $0x58] sm:$0xff]
        %v564 = vld [vmem:[%s474 + $0x60] sm:$0xff]
        %v565 = vld [vmem:[%s474 + $0x68] sm:$0xff]
        %v566 = vld [vmem:[%s474 + $0x70] sm:$0xff]
        %v567 = vld [vmem:[%s474 + $0x78] sm:$0xff]
        %v568 = vlaneseq
        %v569 = vshrl.u32 %v568, 7
        %v570 = vsub.s32 0, %v569
        %v571 = vrot.slane %v538, %v570
        %v572 = vlaneseq
        %v573 = vshrl.u32 %v572, 7
        %v574 = vsub.s32 0, %v573
        %v575 = vrot.slane %v539, %v574
        %v592 = vunpack.c.l.b16 %v552
        %v593 = vunpack.c.h.b16 %v552
        %v594 = vunpack.c.l.b16 %v553
        %v595 = vunpack.c.h.b16 %v553
        %v596 = vunpack.c.l.b16 %v554
        %v597 = vunpack.c.h.b16 %v554
        %v598 = vunpack.c.l.b16 %v555
        %v599 = vunpack.c.h.b16 %v555
        %v600 = vunpack.c.l.b16 %v556
        %v601 = vunpack.c.h.b16 %v556
        %v602 = vunpack.c.l.b16 %v557
        %v603 = vunpack.c.h.b16 %v557
        %v604 = vunpack.c.l.b16 %v558
        %v605 = vunpack.c.h.b16 %v558
        %v606 = vunpack.c.l.b16 %v559
        %v607 = vunpack.c.h.b16 %v559
        %v608 = vunpack.c.l.b16 %v560
        %v609 = vunpack.c.h.b16 %v560
        %v610 = vunpack.c.l.b16 %v561
        %v611 = vunpack.c.h.b16 %v561
        %v612 = vunpack.c.l.b16 %v562
        %v613 = vunpack.c.h.b16 %v562
        %v614 = vunpack.c.l.b16 %v563
        %v615 = vunpack.c.h.b16 %v563
        %v616 = vunpack.c.l.b16 %v564
        %v617 = vunpack.c.h.b16 %v564
        %v618 = vunpack.c.l.b16 %v565
        %v619 = vunpack.c.h.b16 %v565
        %v620 = vunpack.c.l.b16 %v566
        %v621 = vunpack.c.h.b16 %v566
        %v622 = vunpack.c.l.b16 %v567
        %v623 = vunpack.c.h.b16 %v567
        %v624 = vpack.c.b16 %v594, %v592
        %v625 = vpack.c.b16 %v595, %v593
        %v626 = vpack.c.b16 %v598, %v596
        %v627 = vpack.c.b16 %v599, %v597
        %v628 = vpack.c.b16 %v602, %v600
        %v629 = vpack.c.b16 %v603, %v601
        %v630 = vpack.c.b16 %v606, %v604
        %v631 = vpack.c.b16 %v607, %v605
        %v632 = vpack.c.b16 %v610, %v608
        %v633 = vpack.c.b16 %v611, %v609
        %v634 = vpack.c.b16 %v614, %v612
        %v635 = vpack.c.b16 %v615, %v613
        %v636 = vpack.c.b16 %v618, %v616
        %v637 = vpack.c.b16 %v619, %v617
        %v638 = vpack.c.b16 %v622, %v620
        %v639 = vpack.c.b16 %v623, %v621
        %656 = vmatprep.subr.bf16.mxu0 %v625
        %657 = vmatpush1.bf16.msra.mxu0 %v624
        %658 = vmatprep.subr.bf16.mxu0 %v627
        %659 = vmatpush1.bf16.msra.mxu0 %v626
        %660 = vmatprep.subr.bf16.mxu0 %v629
        %661 = vmatpush1.bf16.msra.mxu0 %v628
        %662 = vmatprep.subr.bf16.mxu0 %v631
        %663 = vmatpush1.bf16.msra.mxu0 %v630
        %664 = vmatprep.subr.bf16.mxu0 %v633
        %665 = vmatpush1.bf16.msra.mxu0 %v632
        %666 = vmatprep.subr.bf16.mxu0 %v635
        %667 = vmatpush1.bf16.msra.mxu0 %v634
        %668 = vmatprep.subr.bf16.mxu0 %v637
        %669 = vmatpush1.bf16.msra.mxu0 %v636
        %670 = vmatprep.subr.bf16.mxu0 %v639
        %671 = vmatpush1.bf16.msra.mxu0 %v638
        %672 = vmatprep.subr.bf16.mxu0 0
        %673 = vmatpush1.bf16.msra.mxu0 0
        %674 = vmatprep.subr.bf16.mxu0 0
        %675 = vmatpush1.bf16.msra.mxu0 0
        %676 = vmatprep.subr.bf16.mxu0 0
        %677 = vmatpush1.bf16.msra.mxu0 0
        %678 = vmatprep.subr.bf16.mxu0 0
        %679 = vmatpush1.bf16.msra.mxu0 0
        %680 = vmatprep.subr.bf16.mxu0 0
        %681 = vmatpush1.bf16.msra.mxu0 0
        %682 = vmatprep.subr.bf16.mxu0 0
        %683 = vmatpush1.bf16.msra.mxu0 0
        %684 = vmatprep.subr.bf16.mxu0 0
        %685 = vmatpush1.bf16.msra.mxu0 0
        %686 = vmatprep.subr.bf16.mxu0 0
        %687 = vmatpush1.bf16.msra.mxu0 0
        %688 = vmatprep.mubr.bf16.mxu0 0
        %689 = vmatmul.mubr.bf16.gmra.mrb[0].mxu0 %v548
        %v690 = vpop.f32.mrb[0].mxu0
        %v691 = vadd.f32 %v571, %v690
        %v692 = vpop.f32.mrb[0].mxu0
        %v693 = vadd.f32 %v575, %v692
        %v694 = vpop.f32.mrb[0].mxu0
        %v695 = vadd.f32 %v571, %v694
        %v696 = vpop.f32.mrb[0].mxu0
        %v697 = vadd.f32 %v575, %v696
        %698 = vmatprep.mubr.bf16.mxu0 0
        %699 = vmatmul.mubr.bf16.gmra.mrb[0].mxu0 %v549
        %v700 = vpop.f32.mrb[0].mxu0
        %v701 = vadd.f32 %v571, %v700
        %v702 = vpop.f32.mrb[0].mxu0
        %v703 = vadd.f32 %v575, %v702
        %v704 = vpop.f32.mrb[0].mxu0
        %v705 = vadd.f32 %v571, %v704
        %v706 = vpop.f32.mrb[0].mxu0
        %v707 = vadd.f32 %v575, %v706
        %708 = vmatprep.mubr.bf16.mxu0 0
        %709 = vmatmul.mubr.bf16.gmra.mrb[0].mxu0 %v550
        %v710 = vpop.f32.mrb[0].mxu0
        %v711 = vadd.f32 %v571, %v710
        %v712 = vpop.f32.mrb[0].mxu0
        %v713 = vadd.f32 %v575, %v712
        %v714 = vpop.f32.mrb[0].mxu0
        %v715 = vadd.f32 %v571, %v714
        %v716 = vpop.f32.mrb[0].mxu0
        %v717 = vadd.f32 %v575, %v716
        %718 = vmatprep.mubr.bf16.mxu0 0
        %719 = vmatmul.mubr.bf16.gmra.mrb[0].mxu0 %v551
        %v720 = vpop.f32.mrb[0].mxu0
        %v721 = vadd.f32 %v571, %v720
        %v722 = vpop.f32.mrb[0].mxu0
        %v723 = vadd.f32 %v575, %v722
        %v724 = vpop.f32.mrb[0].mxu0
        %v725 = vadd.f32 %v571, %v724
        %v726 = vpop.f32.mrb[0].mxu0
        %v727 = vadd.f32 %v575, %v726
        %728 = vdwg.mxu0
        %v729 = vadd.f32 %v691, 3.0
        %v730 = vadd.f32 %v693, 3.0
        %v731 = vadd.f32 %v695, 3.0
        %v732 = vadd.f32 %v697, 3.0
        %v733 = vadd.f32 %v701, 3.0
        %v734 = vadd.f32 %v703, 3.0
        %v735 = vadd.f32 %v705, 3.0
        %v736 = vadd.f32 %v707, 3.0
        %v737 = vadd.f32 %v711, 3.0
        %v738 = vadd.f32 %v713, 3.0
        %v739 = vadd.f32 %v715, 3.0
        %v740 = vadd.f32 %v717, 3.0
        %v741 = vadd.f32 %v721, 3.0
        %v742 = vadd.f32 %v723, 3.0
        %v743 = vadd.f32 %v725, 3.0
        %v744 = vadd.f32 %v727, 3.0
        %v745 = vmax.f32 %v729, 0.0
        %v746 = vmax.f32 %v730, 0.0
        %v747 = vmax.f32 %v731, 0.0
        %v748 = vmax.f32 %v732, 0.0
        %v749 = vmax.f32 %v733, 0.0
        %v750 = vmax.f32 %v734, 0.0
        %v751 = vmax.f32 %v735, 0.0
        %v752 = vmax.f32 %v736, 0.0
        %v753 = vmax.f32 %v737, 0.0
        %v754 = vmax.f32 %v738, 0.0
        %v755 = vmax.f32 %v739, 0.0
        %v756 = vmax.f32 %v740, 0.0
        %v757 = vmax.f32 %v741, 0.0
        %v758 = vmax.f32 %v742, 0.0
        %v759 = vmax.f32 %v743, 0.0
        %v760 = vmax.f32 %v744, 0.0
        %v761 = vmin.f32 %v745, 6.0
        %v762 = vmin.f32 %v746, 6.0
        %v763 = vmin.f32 %v747, 6.0
        %v764 = vmin.f32 %v748, 6.0
        %v765 = vmin.f32 %v749, 6.0
        %v766 = vmin.f32 %v750, 6.0
        %v767 = vmin.f32 %v751, 6.0
        %v768 = vmin.f32 %v752, 6.0
        %v769 = vmin.f32 %v753, 6.0
        %v770 = vmin.f32 %v754, 6.0
        %v771 = vmin.f32 %v755, 6.0
        %v772 = vmin.f32 %v756, 6.0
        %v773 = vmin.f32 %v757, 6.0
        %v774 = vmin.f32 %v758, 6.0
        %v775 = vmin.f32 %v759, 6.0
        %v776 = vmin.f32 %v760, 6.0
        %v777 = vmul.f32 %v761, 0.16666667
        %v778 = vmul.f32 %v762, 0.16666667
        %v779 = vmul.f32 %v763, 0.16666667
        %v780 = vmul.f32 %v764, 0.16666667
        %v781 = vmul.f32 %v765, 0.16666667
        %v782 = vmul.f32 %v766, 0.16666667
        %v783 = vmul.f32 %v767, 0.16666667
        %v784 = vmul.f32 %v768, 0.16666667
        %v785 = vmul.f32 %v769, 0.16666667
        %v786 = vmul.f32 %v770, 0.16666667
        %v787 = vmul.f32 %v771, 0.16666667
        %v788 = vmul.f32 %v772, 0.16666667
        %v789 = vmul.f32 %v773, 0.16666667
        %v790 = vmul.f32 %v774, 0.16666667
        %v791 = vmul.f32 %v775, 0.16666667
        %v792 = vmul.f32 %v776, 0.16666667
        %v793 = vmul.f32 %v691, %v777
        %v794 = vmul.f32 %v693, %v778
        %v795 = vmul.f32 %v695, %v779
        %v796 = vmul.f32 %v697, %v780
        %v797 = vmul.f32 %v701, %v781
        %v798 = vmul.f32 %v703, %v782
        %v799 = vmul.f32 %v705, %v783
        %v800 = vmul.f32 %v707, %v784
        %v801 = vmul.f32 %v711, %v785
        %v802 = vmul.f32 %v713, %v786
        %v803 = vmul.f32 %v715, %v787
        %v804 = vmul.f32 %v717, %v788
        %v805 = vmul.f32 %v721, %v789
        %v806 = vmul.f32 %v723, %v790
        %v807 = vmul.f32 %v725, %v791
        %v808 = vmul.f32 %v727, %v792
        %v809 = vstv %s489
        %v810 = vmul.f32 %v809, %v793
        %v811 = vmul.f32 %v809, %v794
        %v812 = vmul.f32 %v809, %v795
        %v813 = vmul.f32 %v809, %v796
        %v814 = vmul.f32 %v809, %v797
        %v815 = vmul.f32 %v809, %v798
        %v816 = vmul.f32 %v809, %v799
        %v817 = vmul.f32 %v809, %v800
        %v818 = vmul.f32 %v809, %v801
        %v819 = vmul.f32 %v809, %v802
        %v820 = vmul.f32 %v809, %v803
        %v821 = vmul.f32 %v809, %v804
        %v822 = vmul.f32 %v809, %v805
        %v823 = vmul.f32 %v809, %v806
        %v824 = vmul.f32 %v809, %v807
        %v825 = vmul.f32 %v809, %v808
        %s826 = ssub.f32 1.0, %s489
        %v827 = vmax.f32 %v691, 0.0
        %v828 = vmax.f32 %v693, 0.0
        %v829 = vmax.f32 %v695, 0.0
        %v830 = vmax.f32 %v697, 0.0
        %v831 = vmax.f32 %v701, 0.0
        %v832 = vmax.f32 %v703, 0.0
        %v833 = vmax.f32 %v705, 0.0
        %v834 = vmax.f32 %v707, 0.0
        %v835 = vmax.f32 %v711, 0.0
        %v836 = vmax.f32 %v713, 0.0
        %v837 = vmax.f32 %v715, 0.0
        %v838 = vmax.f32 %v717, 0.0
        %v839 = vmax.f32 %v721, 0.0
        %v840 = vmax.f32 %v723, 0.0
        %v841 = vmax.f32 %v725, 0.0
        %v842 = vmax.f32 %v727, 0.0
        %v843 = vstv %s826
        %v844 = vmul.f32 %v843, %v827
        %v845 = vmul.f32 %v843, %v828
        %v846 = vmul.f32 %v843, %v829
        %v847 = vmul.f32 %v843, %v830
        %v848 = vmul.f32 %v843, %v831
        %v849 = vmul.f32 %v843, %v832
        %v850 = vmul.f32 %v843, %v833
        %v851 = vmul.f32 %v843, %v834
        %v852 = vmul.f32 %v843, %v835
        %v853 = vmul.f32 %v843, %v836
        %v854 = vmul.f32 %v843, %v837
        %v855 = vmul.f32 %v843, %v838
        %v856 = vmul.f32 %v843, %v839
        %v857 = vmul.f32 %v843, %v840
        %v858 = vmul.f32 %v843, %v841
        %v859 = vmul.f32 %v843, %v842
        %v860 = vadd.f32 %v810, %v844
        %v861 = vadd.f32 %v811, %v845
        %v862 = vadd.f32 %v812, %v846
        %v863 = vadd.f32 %v813, %v847
        %v864 = vadd.f32 %v814, %v848
        %v865 = vadd.f32 %v815, %v849
        %v866 = vadd.f32 %v816, %v850
        %v867 = vadd.f32 %v817, %v851
        %v868 = vadd.f32 %v818, %v852
        %v869 = vadd.f32 %v819, %v853
        %v870 = vadd.f32 %v820, %v854
        %v871 = vadd.f32 %v821, %v855
        %v872 = vadd.f32 %v822, %v856
        %v873 = vadd.f32 %v823, %v857
        %v874 = vadd.f32 %v824, %v858
        %v875 = vadd.f32 %v825, %v859
        %v876 = vlaneseq
        %v877 = vshrl.u32 %v876, 7
        %v878 = vsub.s32 1, %v877
        %v879 = vrot.slane %v538, %v878
        %v880 = vmul.f32 %v860, %v879
        %v881 = vmul.f32 %v862, %v879
        %v882 = vmul.f32 %v864, %v879
        %v883 = vmul.f32 %v866, %v879
        %v884 = vmul.f32 %v868, %v879
        %v885 = vmul.f32 %v870, %v879
        %v886 = vmul.f32 %v872, %v879
        %v887 = vmul.f32 %v874, %v879
        %v888 = vlaneseq
        %v889 = vshrl.u32 %v888, 7
        %v890 = vsub.s32 2, %v889
        %v891 = vrot.slane %v538, %v890
        %v892 = vadd.f32 %v880, %v891
        %v893 = vadd.f32 %v881, %v891
        %v894 = vadd.f32 %v882, %v891
        %v895 = vadd.f32 %v883, %v891
        %v896 = vadd.f32 %v884, %v891
        %v897 = vadd.f32 %v885, %v891
        %v898 = vadd.f32 %v886, %v891
        %v899 = vadd.f32 %v887, %v891
        %v900 = vadd.f32 %v892, 3.0
        %v901 = vadd.f32 %v893, 3.0
        %v902 = vadd.f32 %v894, 3.0
        %v903 = vadd.f32 %v895, 3.0
        %v904 = vadd.f32 %v896, 3.0
        %v905 = vadd.f32 %v897, 3.0
        %v906 = vadd.f32 %v898, 3.0
        %v907 = vadd.f32 %v899, 3.0
        %v908 = vmax.f32 %v900, 0.0
        %v909 = vmax.f32 %v901, 0.0
        %v910 = vmax.f32 %v902, 0.0
        %v911 = vmax.f32 %v903, 0.0
        %v912 = vmax.f32 %v904, 0.0
        %v913 = vmax.f32 %v905, 0.0
        %v914 = vmax.f32 %v906, 0.0
        %v915 = vmax.f32 %v907, 0.0
        %v916 = vmin.f32 %v908, 6.0
        %v917 = vmin.f32 %v909, 6.0
        %v918 = vmin.f32 %v910, 6.0
        %v919 = vmin.f32 %v911, 6.0
        %v920 = vmin.f32 %v912, 6.0
        %v921 = vmin.f32 %v913, 6.0
        %v922 = vmin.f32 %v914, 6.0
        %v923 = vmin.f32 %v915, 6.0
        %v924 = vmul.f32 %v916, 0.16666667
        %v925 = vmul.f32 %v917, 0.16666667
        %v926 = vmul.f32 %v918, 0.16666667
        %v927 = vmul.f32 %v919, 0.16666667
        %v928 = vmul.f32 %v920, 0.16666667
        %v929 = vmul.f32 %v921, 0.16666667
        %v930 = vmul.f32 %v922, 0.16666667
        %v931 = vmul.f32 %v923, 0.16666667
        %v932 = vmul.f32 %v892, %v924
        %v933 = vmul.f32 %v893, %v925
        %v934 = vmul.f32 %v894, %v926
        %v935 = vmul.f32 %v895, %v927
        %v936 = vmul.f32 %v896, %v928
        %v937 = vmul.f32 %v897, %v929
        %v938 = vmul.f32 %v898, %v930
        %v939 = vmul.f32 %v899, %v931
        %v940 = vmul.f32 %v809, %v932
        %v941 = vmul.f32 %v809, %v933
        %v942 = vmul.f32 %v809, %v934
        %v943 = vmul.f32 %v809, %v935
        %v944 = vmul.f32 %v809, %v936
        %v945 = vmul.f32 %v809, %v937
        %v946 = vmul.f32 %v809, %v938
        %v947 = vmul.f32 %v809, %v939
        %v948 = vmax.f32 %v892, 0.0
        %v949 = vmax.f32 %v893, 0.0
        %v950 = vmax.f32 %v894, 0.0
        %v951 = vmax.f32 %v895, 0.0
        %v952 = vmax.f32 %v896, 0.0
        %v953 = vmax.f32 %v897, 0.0
        %v954 = vmax.f32 %v898, 0.0
        %v955 = vmax.f32 %v899, 0.0
        %v956 = vmul.f32 %v843, %v948
        %v957 = vmul.f32 %v843, %v949
        %v958 = vmul.f32 %v843, %v950
        %v959 = vmul.f32 %v843, %v951
        %v960 = vmul.f32 %v843, %v952
        %v961 = vmul.f32 %v843, %v953
        %v962 = vmul.f32 %v843, %v954
        %v963 = vmul.f32 %v843, %v955
        %v964 = vadd.f32 %v940, %v956
        %v965 = vadd.f32 %v941, %v957
        %v966 = vadd.f32 %v942, %v958
        %v967 = vadd.f32 %v943, %v959
        %v968 = vadd.f32 %v944, %v960
        %v969 = vadd.f32 %v945, %v961
        %v970 = vadd.f32 %v946, %v962
        %v971 = vadd.f32 %v947, %v963
        %v972 = vadd.f32 %v964, %v965
        %v973 = vadd.f32 %v972, %v966
        %v974 = vadd.f32 %v973, %v967
        %v975 = vadd.f32 %v974, %v968
        %v976 = vadd.f32 %v975, %v969
        %v977 = vadd.f32 %v976, %v970
        %v978 = vadd.f32 %v977, %v971
        %v979 = vrot.slane %v978, 4
        %v980 = vadd.f32 %v978, %v979
        %v981 = vrot.slane %v980, 2
        %v982 = vadd.f32 %v980, %v981
        %v983 = vrot.slane %v982, 1
        %v984 = vadd.f32 %v982, %v983
        %v985 = vmul.f32 %v984, 0.015625
        %s986 = scalar_lea.vmem [#allocation3], 48
        %987 = vst [vmem:[%s986 + $0x3] sm:$0xff] %v861
        %988 = vst [vmem:[%s986 + $0x13] sm:$0xff] %v863
        %989 = vst [vmem:[%s986 + $0x23] sm:$0xff] %v865
        %990 = vst [vmem:[%s986 + $0x33] sm:$0xff] %v867
        %991 = vst [vmem:[%s986 + $0x43] sm:$0xff] %v869
        %992 = vst [vmem:[%s986 + $0x53] sm:$0xff] %v871
        %993 = vst [vmem:[%s986 + $0x63] sm:$0xff] %v873
        %994 = vst [vmem:[%s986 + $0x73] sm:$0xff] %v875
        %v995 = vld [vmem:[%s390] sm:$0xff]
        %v996 = vld [vmem:[%s390 + $0x8] sm:$0xff]
        %v997 = vld [vmem:[%s390 + $0x10] sm:$0xff]
        %v998 = vld [vmem:[%s390 + $0x18] sm:$0xff]
        %v999 = vld [vmem:[%s390 + $0x20] sm:$0xff]
        %v1000 = vld [vmem:[%s390 + $0x28] sm:$0xff]
        %v1001 = vld [vmem:[%s390 + $0x30] sm:$0xff]
        %v1002 = vld [vmem:[#allocation3] sm:$0xff]
        %v1003 = vld [vmem:[#allocation3 + $0x10] sm:$0xff]
        %v1004 = vld [vmem:[#allocation3 + $0x20] sm:$0xff]
        %v1005 = vld [vmem:[#allocation3 + $0x30] sm:$0xff]
        %v1006 = vld [vmem:[#allocation3 + $0x40] sm:$0xff]
        %v1007 = vld [vmem:[#allocation3 + $0x50] sm:$0xff]
        %v1008 = vld [vmem:[#allocation3 + $0x60] sm:$0xff]
        %v1009 = vld [vmem:[#allocation3 + $0x70] sm:$0xff]
        %v1010 = vld [vmem:[#allocation3 + $0x80] sm:$0xff]
        %v1011 = vld [vmem:[#allocation3 + $0x90] sm:$0xff]
        %v1012 = vld [vmem:[#allocation3 + $0xa0] sm:$0xff]
        %v1013 = vld [vmem:[#allocation3 + $0xb0] sm:$0xff]
        %v1014 = vld [vmem:[#allocation3 + $0xc0] sm:$0xff]
        %v1015 = vld [vmem:[#allocation3 + $0xd0] sm:$0xff]
        %v1016 = vlaneseq
        %v1017 = vshrl.u32 %v1016, 7
        %v1018 = vsub.s32 0, %v1017
        %v1019 = vrot.slane %v995, %v1018
        %v1020 = vmul.f32 %v1019, %v1002
        %v1021 = vmul.f32 %v1019, %v1003
        %v1022 = vmul.f32 %v1019, %v1004
        %v1023 = vmul.f32 %v1019, %v1005
        %v1024 = vmul.f32 %v1019, %v1006
        %v1025 = vmul.f32 %v1019, %v1007
        %v1026 = vmul.f32 %v1019, %v1008
        %v1027 = vmul.f32 %v1019, %v1009
        %v1028 = vadd.f32 %v1020, 0.0
        %v1029 = vadd.f32 %v1021, 0.0
        %v1030 = vadd.f32 %v1022, 0.0
        %v1031 = vadd.f32 %v1023, 0.0
        %v1032 = vadd.f32 %v1024, 0.0
        %v1033 = vadd.f32 %v1025, 0.0
        %v1034 = vadd.f32 %v1026, 0.0
        %v1035 = vadd.f32 %v1027, 0.0
        %v1036 = vlaneseq
        %v1037 = vshrl.u32 %v1036, 7
        %v1038 = vsub.s32 7, %v1037
        %v1039 = vrot.slane %v995, %v1038
        %v1040 = vmul.f32 %v1039, %v1003
        %v1041 = vmul.f32 %v1039, %v1004
        %v1042 = vmul.f32 %v1039, %v1005
        %v1043 = vmul.f32 %v1039, %v1006
        %v1044 = vmul.f32 %v1039, %v1007
        %v1045 = vmul.f32 %v1039, %v1008
        %v1046 = vmul.f32 %v1039, %v1009
        %v1047 = vmul.f32 %v1039, %v1010
        %v1048 = vadd.f32 %v1028, %v1040
        %v1049 = vadd.f32 %v1029, %v1041
        %v1050 = vadd.f32 %v1030, %v1042
        %v1051 = vadd.f32 %v1031, %v1043
        %v1052 = vadd.f32 %v1032, %v1044
        %v1053 = vadd.f32 %v1033, %v1045
        %v1054 = vadd.f32 %v1034, %v1046
        %v1055 = vadd.f32 %v1035, %v1047
        %v1056 = vlaneseq
        %v1057 = vshrl.u32 %v1056, 7
        %v1058 = vsub.s32 6, %v1057
        %v1059 = vrot.slane %v996, %v1058
        %v1060 = vmul.f32 %v1059, %v1004
        %v1061 = vmul.f32 %v1059, %v1005
        %v1062 = vmul.f32 %v1059, %v1006
        %v1063 = vmul.f32 %v1059, %v1007
        %v1064 = vmul.f32 %v1059, %v1008
        %v1065 = vmul.f32 %v1059, %v1009
        %v1066 = vmul.f32 %v1059, %v1010
        %v1067 = vmul.f32 %v1059, %v1011
        %v1068 = vadd.f32 %v1048, %v1060
        %v1069 = vadd.f32 %v1049, %v1061
        %v1070 = vadd.f32 %v1050, %v1062
        %v1071 = vadd.f32 %v1051, %v1063
        %v1072 = vadd.f32 %v1052, %v1064
        %v1073 = vadd.f32 %v1053, %v1065
        %v1074 = vadd.f32 %v1054, %v1066
        %v1075 = vadd.f32 %v1055, %v1067
        %v1076 = vlaneseq
        %v1077 = vshrl.u32 %v1076, 7
        %v1078 = vsub.s32 5, %v1077
        %v1079 = vrot.slane %v997, %v1078
        %v1080 = vmul.f32 %v1079, %v1005
        %v1081 = vmul.f32 %v1079, %v1006
        %v1082 = vmul.f32 %v1079, %v1007
        %v1083 = vmul.f32 %v1079, %v1008
        %v1084 = vmul.f32 %v1079, %v1009
        %v1085 = vmul.f32 %v1079, %v1010
        %v1086 = vmul.f32 %v1079, %v1011
        %v1087 = vmul.f32 %v1079, %v1012
        %v1088 = vadd.f32 %v1068, %v1080
        %v1089 = vadd.f32 %v1069, %v1081
        %v1090 = vadd.f32 %v1070, %v1082
        %v1091 = vadd.f32 %v1071, %v1083
        %v1092 = vadd.f32 %v1072, %v1084
        %v1093 = vadd.f32 %v1073, %v1085
        %v1094 = vadd.f32 %v1074, %v1086
        %v1095 = vadd.f32 %v1075, %v1087
        %v1096 = vlaneseq
        %v1097 = vshrl.u32 %v1096, 7
        %v1098 = vsub.s32 4, %v1097
        %v1099 = vrot.slane %v998, %v1098
        %v1100 = vmul.f32 %v1099, %v1006
        %v1101 = vmul.f32 %v1099, %v1007
        %v1102 = vmul.f32 %v1099, %v1008
        %v1103 = vmul.f32 %v1099, %v1009
        %v1104 = vmul.f32 %v1099, %v1010
        %v1105 = vmul.f32 %v1099, %v1011
        %v1106 = vmul.f32 %v1099, %v1012
        %v1107 = vmul.f32 %v1099, %v1013
        %v1108 = vadd.f32 %v1088, %v1100
        %v1109 = vadd.f32 %v1089, %v1101
        %v1110 = vadd.f32 %v1090, %v1102
        %v1111 = vadd.f32 %v1091, %v1103
        %v1112 = vadd.f32 %v1092, %v1104
        %v1113 = vadd.f32 %v1093, %v1105
        %v1114 = vadd.f32 %v1094, %v1106
        %v1115 = vadd.f32 %v1095, %v1107
        %v1116 = vlaneseq
        %v1117 = vshrl.u32 %v1116, 7
        %v1118 = vsub.s32 3, %v1117
        %v1119 = vrot.slane %v999, %v1118
        %v1120 = vmul.f32 %v1119, %v1007
        %v1121 = vmul.f32 %v1119, %v1008
        %v1122 = vmul.f32 %v1119, %v1009
        %v1123 = vmul.f32 %v1119, %v1010
        %v1124 = vmul.f32 %v1119, %v1011
        %v1125 = vmul.f32 %v1119, %v1012
        %v1126 = vmul.f32 %v1119, %v1013
        %v1127 = vmul.f32 %v1119, %v1014
        %v1128 = vadd.f32 %v1108, %v1120
        %v1129 = vadd.f32 %v1109, %v1121
        %v1130 = vadd.f32 %v1110, %v1122
        %v1131 = vadd.f32 %v1111, %v1123
        %v1132 = vadd.f32 %v1112, %v1124
        %v1133 = vadd.f32 %v1113, %v1125
        %v1134 = vadd.f32 %v1114, %v1126
        %v1135 = vadd.f32 %v1115, %v1127
        %v1136 = vlaneseq
        %v1137 = vshrl.u32 %v1136, 7
        %v1138 = vsub.s32 2, %v1137
        %v1139 = vrot.slane %v1000, %v1138
        %v1140 = vmul.f32 %v1139, %v1008
        %v1141 = vmul.f32 %v1139, %v1009
        %v1142 = vmul.f32 %v1139, %v1010
        %v1143 = vmul.f32 %v1139, %v1011
        %v1144 = vmul.f32 %v1139, %v1012
        %v1145 = vmul.f32 %v1139, %v1013
        %v1146 = vmul.f32 %v1139, %v1014
        %v1147 = vmul.f32 %v1139, %v1015
        %v1148 = vadd.f32 %v1128, %v1140
        %v1149 = vadd.f32 %v1129, %v1141
        %v1150 = vadd.f32 %v1130, %v1142
        %v1151 = vadd.f32 %v1131, %v1143
        %v1152 = vadd.f32 %v1132, %v1144
        %v1153 = vadd.f32 %v1133, %v1145
        %v1154 = vadd.f32 %v1134, %v1146
        %v1155 = vadd.f32 %v1135, %v1147
        %v1156 = vld [vmem:[#allocation3 + $0x1] sm:$0xff]
        %v1157 = vld [vmem:[#allocation3 + $0x11] sm:$0xff]
        %v1158 = vld [vmem:[#allocation3 + $0x21] sm:$0xff]
        %v1159 = vld [vmem:[#allocation3 + $0x31] sm:$0xff]
        %v1160 = vld [vmem:[#allocation3 + $0x41] sm:$0xff]
        %v1161 = vld [vmem:[#allocation3 + $0x51] sm:$0xff]
        %v1162 = vld [vmem:[#allocation3 + $0x61] sm:$0xff]
        %v1163 = vld [vmem:[#allocation3 + $0x71] sm:$0xff]
        %v1164 = vld [vmem:[#allocation3 + $0x81] sm:$0xff]
        %v1165 = vld [vmem:[#allocation3 + $0x91] sm:$0xff]
        %v1166 = vld [vmem:[#allocation3 + $0xa1] sm:$0xff]
        %v1167 = vld [vmem:[#allocation3 + $0xb1] sm:$0xff]
        %v1168 = vld [vmem:[#allocation3 + $0xc1] sm:$0xff]
        %v1169 = vld [vmem:[#allocation3 + $0xd1] sm:$0xff]
        %v1170 = vlaneseq
        %v1171 = vshrl.u32 %v1170, 7
        %v1172 = vsub.s32 1, %v1171
        %v1173 = vrot.slane %v995, %v1172
        %v1174 = vmul.f32 %v1173, %v1156
        %v1175 = vmul.f32 %v1173, %v1157
        %v1176 = vmul.f32 %v1173, %v1158
        %v1177 = vmul.f32 %v1173, %v1159
        %v1178 = vmul.f32 %v1173, %v1160
        %v1179 = vmul.f32 %v1173, %v1161
        %v1180 = vmul.f32 %v1173, %v1162
        %v1181 = vmul.f32 %v1173, %v1163
        %v1182 = vadd.f32 %v1148, %v1174
        %v1183 = vadd.f32 %v1149, %v1175
        %v1184 = vadd.f32 %v1150, %v1176
        %v1185 = vadd.f32 %v1151, %v1177
        %v1186 = vadd.f32 %v1152, %v1178
        %v1187 = vadd.f32 %v1153, %v1179
        %v1188 = vadd.f32 %v1154, %v1180
        %v1189 = vadd.f32 %v1155, %v1181
        %v1190 = vlaneseq
        %v1191 = vshrl.u32 %v1190, 7
        %v1192 = vsub.s32 0, %v1191
        %v1193 = vrot.slane %v996, %v1192
        %v1194 = vmul.f32 %v1193, %v1157
        %v1195 = vmul.f32 %v1193, %v1158
        %v1196 = vmul.f32 %v1193, %v1159
        %v1197 = vmul.f32 %v1193, %v1160
        %v1198 = vmul.f32 %v1193, %v1161
        %v1199 = vmul.f32 %v1193, %v1162
        %v1200 = vmul.f32 %v1193, %v1163
        %v1201 = vmul.f32 %v1193, %v1164
        %v1202 = vadd.f32 %v1182, %v1194
        %v1203 = vadd.f32 %v1183, %v1195
        %v1204 = vadd.f32 %v1184, %v1196
        %v1205 = vadd.f32 %v1185, %v1197
        %v1206 = vadd.f32 %v1186, %v1198
        %v1207 = vadd.f32 %v1187, %v1199
        %v1208 = vadd.f32 %v1188, %v1200
        %v1209 = vadd.f32 %v1189, %v1201
        %v1210 = vlaneseq
        %v1211 = vshrl.u32 %v1210, 7
        %v1212 = vsub.s32 7, %v1211
        %v1213 = vrot.slane %v996, %v1212
        %v1214 = vmul.f32 %v1213, %v1158
        %v1215 = vmul.f32 %v1213, %v1159
        %v1216 = vmul.f32 %v1213, %v1160
        %v1217 = vmul.f32 %v1213, %v1161
        %v1218 = vmul.f32 %v1213, %v1162
        %v1219 = vmul.f32 %v1213, %v1163
        %v1220 = vmul.f32 %v1213, %v1164
        %v1221 = vmul.f32 %v1213, %v1165
        %v1222 = vadd.f32 %v1202, %v1214
        %v1223 = vadd.f32 %v1203, %v1215
        %v1224 = vadd.f32 %v1204, %v1216
        %v1225 = vadd.f32 %v1205, %v1217
        %v1226 = vadd.f32 %v1206, %v1218
        %v1227 = vadd.f32 %v1207, %v1219
        %v1228 = vadd.f32 %v1208, %v1220
        %v1229 = vadd.f32 %v1209, %v1221
        %v1230 = vlaneseq
        %v1231 = vshrl.u32 %v1230, 7
        %v1232 = vsub.s32 6, %v1231
        %v1233 = vrot.slane %v997, %v1232
        %v1234 = vmul.f32 %v1233, %v1159
        %v1235 = vmul.f32 %v1233, %v1160
        %v1236 = vmul.f32 %v1233, %v1161
        %v1237 = vmul.f32 %v1233, %v1162
        %v1238 = vmul.f32 %v1233, %v1163
        %v1239 = vmul.f32 %v1233, %v1164
        %v1240 = vmul.f32 %v1233, %v1165
        %v1241 = vmul.f32 %v1233, %v1166
        %v1242 = vadd.f32 %v1222, %v1234
        %v1243 = vadd.f32 %v1223, %v1235
        %v1244 = vadd.f32 %v1224, %v1236
        %v1245 = vadd.f32 %v1225, %v1237
        %v1246 = vadd.f32 %v1226, %v1238
        %v1247 = vadd.f32 %v1227, %v1239
        %v1248 = vadd.f32 %v1228, %v1240
        %v1249 = vadd.f32 %v1229, %v1241
        %v1250 = vlaneseq
        %v1251 = vshrl.u32 %v1250, 7
        %v1252 = vsub.s32 5, %v1251
        %v1253 = vrot.slane %v998, %v1252
        %v1254 = vmul.f32 %v1253, %v1160
        %v1255 = vmul.f32 %v1253, %v1161
        %v1256 = vmul.f32 %v1253, %v1162
        %v1257 = vmul.f32 %v1253, %v1163
        %v1258 = vmul.f32 %v1253, %v1164
        %v1259 = vmul.f32 %v1253, %v1165
        %v1260 = vmul.f32 %v1253, %v1166
        %v1261 = vmul.f32 %v1253, %v1167
        %v1262 = vadd.f32 %v1242, %v1254
        %v1263 = vadd.f32 %v1243, %v1255
        %v1264 = vadd.f32 %v1244, %v1256
        %v1265 = vadd.f32 %v1245, %v1257
        %v1266 = vadd.f32 %v1246, %v1258
        %v1267 = vadd.f32 %v1247, %v1259
        %v1268 = vadd.f32 %v1248, %v1260
        %v1269 = vadd.f32 %v1249, %v1261
        %v1270 = vlaneseq
        %v1271 = vshrl.u32 %v1270, 7
        %v1272 = vsub.s32 4, %v1271
        %v1273 = vrot.slane %v999, %v1272
        %v1274 = vmul.f32 %v1273, %v1161
        %v1275 = vmul.f32 %v1273, %v1162
        %v1276 = vmul.f32 %v1273, %v1163
        %v1277 = vmul.f32 %v1273, %v1164
        %v1278 = vmul.f32 %v1273, %v1165
        %v1279 = vmul.f32 %v1273, %v1166
        %v1280 = vmul.f32 %v1273, %v1167
        %v1281 = vmul.f32 %v1273, %v1168
        %v1282 = vadd.f32 %v1262, %v1274
        %v1283 = vadd.f32 %v1263, %v1275
        %v1284 = vadd.f32 %v1264, %v1276
        %v1285 = vadd.f32 %v1265, %v1277
        %v1286 = vadd.f32 %v1266, %v1278
        %v1287 = vadd.f32 %v1267, %v1279
        %v1288 = vadd.f32 %v1268, %v1280
        %v1289 = vadd.f32 %v1269, %v1281
        %v1290 = vlaneseq
        %v1291 = vshrl.u32 %v1290, 7
        %v1292 = vsub.s32 3, %v1291
        %v1293 = vrot.slane %v1000, %v1292
        %v1294 = vmul.f32 %v1293, %v1162
        %v1295 = vmul.f32 %v1293, %v1163
        %v1296 = vmul.f32 %v1293, %v1164
        %v1297 = vmul.f32 %v1293, %v1165
        %v1298 = vmul.f32 %v1293, %v1166
        %v1299 = vmul.f32 %v1293, %v1167
        %v1300 = vmul.f32 %v1293, %v1168
        %v1301 = vmul.f32 %v1293, %v1169
        %v1302 = vadd.f32 %v1282, %v1294
        %v1303 = vadd.f32 %v1283, %v1295
        %v1304 = vadd.f32 %v1284, %v1296
        %v1305 = vadd.f32 %v1285, %v1297
        %v1306 = vadd.f32 %v1286, %v1298
        %v1307 = vadd.f32 %v1287, %v1299
        %v1308 = vadd.f32 %v1288, %v1300
        %v1309 = vadd.f32 %v1289, %v1301
        %v1310 = vld [vmem:[#allocation3 + $0x2] sm:$0xff]
        %v1311 = vld [vmem:[#allocation3 + $0x12] sm:$0xff]
        %v1312 = vld [vmem:[#allocation3 + $0x22] sm:$0xff]
        %v1313 = vld [vmem:[#allocation3 + $0x32] sm:$0xff]
        %v1314 = vld [vmem:[#allocation3 + $0x42] sm:$0xff]
        %v1315 = vld [vmem:[#allocation3 + $0x52] sm:$0xff]
        %v1316 = vld [vmem:[#allocation3 + $0x62] sm:$0xff]
        %v1317 = vld [vmem:[#allocation3 + $0x72] sm:$0xff]
        %v1318 = vld [vmem:[#allocation3 + $0x82] sm:$0xff]
        %v1319 = vld [vmem:[#allocation3 + $0x92] sm:$0xff]
        %v1320 = vld [vmem:[#allocation3 + $0xa2] sm:$0xff]
        %v1321 = vld [vmem:[#allocation3 + $0xb2] sm:$0xff]
        %v1322 = vld [vmem:[#allocation3 + $0xc2] sm:$0xff]
        %v1323 = vld [vmem:[#allocation3 + $0xd2] sm:$0xff]
        %v1324 = vlaneseq
        %v1325 = vshrl.u32 %v1324, 7
        %v1326 = vsub.s32 2, %v1325
        %v1327 = vrot.slane %v995, %v1326
        %v1328 = vmul.f32 %v1327, %v1310
        %v1329 = vmul.f32 %v1327, %v1311
        %v1330 = vmul.f32 %v1327, %v1312
        %v1331 = vmul.f32 %v1327, %v1313
        %v1332 = vmul.f32 %v1327, %v1314
        %v1333 = vmul.f32 %v1327, %v1315
        %v1334 = vmul.f32 %v1327, %v1316
        %v1335 = vmul.f32 %v1327, %v1317
        %v1336 = vadd.f32 %v1302, %v1328
        %v1337 = vadd.f32 %v1303, %v1329
        %v1338 = vadd.f32 %v1304, %v1330
        %v1339 = vadd.f32 %v1305, %v1331
        %v1340 = vadd.f32 %v1306, %v1332
        %v1341 = vadd.f32 %v1307, %v1333
        %v1342 = vadd.f32 %v1308, %v1334
        %v1343 = vadd.f32 %v1309, %v1335
        %v1344 = vlaneseq
        %v1345 = vshrl.u32 %v1344, 7
        %v1346 = vsub.s32 1, %v1345
        %v1347 = vrot.slane %v996, %v1346
        %v1348 = vmul.f32 %v1347, %v1311
        %v1349 = vmul.f32 %v1347, %v1312
        %v1350 = vmul.f32 %v1347, %v1313
        %v1351 = vmul.f32 %v1347, %v1314
        %v1352 = vmul.f32 %v1347, %v1315
        %v1353 = vmul.f32 %v1347, %v1316
        %v1354 = vmul.f32 %v1347, %v1317
        %v1355 = vmul.f32 %v1347, %v1318
        %v1356 = vadd.f32 %v1336, %v1348
        %v1357 = vadd.f32 %v1337, %v1349
        %v1358 = vadd.f32 %v1338, %v1350
        %v1359 = vadd.f32 %v1339, %v1351
        %v1360 = vadd.f32 %v1340, %v1352
        %v1361 = vadd.f32 %v1341, %v1353
        %v1362 = vadd.f32 %v1342, %v1354
        %v1363 = vadd.f32 %v1343, %v1355
        %v1364 = vlaneseq
        %v1365 = vshrl.u32 %v1364, 7
        %v1366 = vsub.s32 0, %v1365
        %v1367 = vrot.slane %v997, %v1366
        %v1368 = vmul.f32 %v1367, %v1312
        %v1369 = vmul.f32 %v1367, %v1313
        %v1370 = vmul.f32 %v1367, %v1314
        %v1371 = vmul.f32 %v1367, %v1315
        %v1372 = vmul.f32 %v1367, %v1316
        %v1373 = vmul.f32 %v1367, %v1317
        %v1374 = vmul.f32 %v1367, %v1318
        %v1375 = vmul.f32 %v1367, %v1319
        %v1376 = vadd.f32 %v1356, %v1368
        %v1377 = vadd.f32 %v1357, %v1369
        %v1378 = vadd.f32 %v1358, %v1370
        %v1379 = vadd.f32 %v1359, %v1371
        %v1380 = vadd.f32 %v1360, %v1372
        %v1381 = vadd.f32 %v1361, %v1373
        %v1382 = vadd.f32 %v1362, %v1374
        %v1383 = vadd.f32 %v1363, %v1375
        %v1384 = vlaneseq
        %v1385 = vshrl.u32 %v1384, 7
        %v1386 = vsub.s32 7, %v1385
        %v1387 = vrot.slane %v997, %v1386
        %v1388 = vmul.f32 %v1387, %v1313
        %v1389 = vmul.f32 %v1387, %v1314
        %v1390 = vmul.f32 %v1387, %v1315
        %v1391 = vmul.f32 %v1387, %v1316
        %v1392 = vmul.f32 %v1387, %v1317
        %v1393 = vmul.f32 %v1387, %v1318
        %v1394 = vmul.f32 %v1387, %v1319
        %v1395 = vmul.f32 %v1387, %v1320
        %v1396 = vadd.f32 %v1376, %v1388
        %v1397 = vadd.f32 %v1377, %v1389
        %v1398 = vadd.f32 %v1378, %v1390
        %v1399 = vadd.f32 %v1379, %v1391
        %v1400 = vadd.f32 %v1380, %v1392
        %v1401 = vadd.f32 %v1381, %v1393
        %v1402 = vadd.f32 %v1382, %v1394
        %v1403 = vadd.f32 %v1383, %v1395
        %v1404 = vlaneseq
        %v1405 = vshrl.u32 %v1404, 7
        %v1406 = vsub.s32 6, %v1405
        %v1407 = vrot.slane %v998, %v1406
        %v1408 = vmul.f32 %v1407, %v1314
        %v1409 = vmul.f32 %v1407, %v1315
        %v1410 = vmul.f32 %v1407, %v1316
        %v1411 = vmul.f32 %v1407, %v1317
        %v1412 = vmul.f32 %v1407, %v1318
        %v1413 = vmul.f32 %v1407, %v1319
        %v1414 = vmul.f32 %v1407, %v1320
        %v1415 = vmul.f32 %v1407, %v1321
        %v1416 = vadd.f32 %v1396, %v1408
        %v1417 = vadd.f32 %v1397, %v1409
        %v1418 = vadd.f32 %v1398, %v1410
        %v1419 = vadd.f32 %v1399, %v1411
        %v1420 = vadd.f32 %v1400, %v1412
        %v1421 = vadd.f32 %v1401, %v1413
        %v1422 = vadd.f32 %v1402, %v1414
        %v1423 = vadd.f32 %v1403, %v1415
        %v1424 = vlaneseq
        %v1425 = vshrl.u32 %v1424, 7
        %v1426 = vsub.s32 5, %v1425
        %v1427 = vrot.slane %v999, %v1426
        %v1428 = vmul.f32 %v1427, %v1315
        %v1429 = vmul.f32 %v1427, %v1316
        %v1430 = vmul.f32 %v1427, %v1317
        %v1431 = vmul.f32 %v1427, %v1318
        %v1432 = vmul.f32 %v1427, %v1319
        %v1433 = vmul.f32 %v1427, %v1320
        %v1434 = vmul.f32 %v1427, %v1321
        %v1435 = vmul.f32 %v1427, %v1322
        %v1436 = vadd.f32 %v1416, %v1428
        %v1437 = vadd.f32 %v1417, %v1429
        %v1438 = vadd.f32 %v1418, %v1430
        %v1439 = vadd.f32 %v1419, %v1431
        %v1440 = vadd.f32 %v1420, %v1432
        %v1441 = vadd.f32 %v1421, %v1433
        %v1442 = vadd.f32 %v1422, %v1434
        %v1443 = vadd.f32 %v1423, %v1435
        %v1444 = vlaneseq
        %v1445 = vshrl.u32 %v1444, 7
        %v1446 = vsub.s32 4, %v1445
        %v1447 = vrot.slane %v1000, %v1446
        %v1448 = vmul.f32 %v1447, %v1316
        %v1449 = vmul.f32 %v1447, %v1317
        %v1450 = vmul.f32 %v1447, %v1318
        %v1451 = vmul.f32 %v1447, %v1319
        %v1452 = vmul.f32 %v1447, %v1320
        %v1453 = vmul.f32 %v1447, %v1321
        %v1454 = vmul.f32 %v1447, %v1322
        %v1455 = vmul.f32 %v1447, %v1323
        %v1456 = vadd.f32 %v1436, %v1448
        %v1457 = vadd.f32 %v1437, %v1449
        %v1458 = vadd.f32 %v1438, %v1450
        %v1459 = vadd.f32 %v1439, %v1451
        %v1460 = vadd.f32 %v1440, %v1452
        %v1461 = vadd.f32 %v1441, %v1453
        %v1462 = vadd.f32 %v1442, %v1454
        %v1463 = vadd.f32 %v1443, %v1455
        %v1464 = vld [vmem:[#allocation3 + $0x3] sm:$0xff]
        %v1465 = vld [vmem:[#allocation3 + $0x13] sm:$0xff]
        %v1466 = vld [vmem:[#allocation3 + $0x23] sm:$0xff]
        %v1467 = vld [vmem:[#allocation3 + $0x33] sm:$0xff]
        %v1468 = vld [vmem:[#allocation3 + $0x43] sm:$0xff]
        %v1469 = vld [vmem:[#allocation3 + $0x53] sm:$0xff]
        %v1470 = vld [vmem:[#allocation3 + $0x63] sm:$0xff]
        %v1471 = vld [vmem:[#allocation3 + $0x73] sm:$0xff]
        %v1472 = vld [vmem:[#allocation3 + $0x83] sm:$0xff]
        %v1473 = vld [vmem:[#allocation3 + $0x93] sm:$0xff]
        %v1474 = vld [vmem:[#allocation3 + $0xa3] sm:$0xff]
        %v1475 = vld [vmem:[#allocation3 + $0xb3] sm:$0xff]
        %v1476 = vld [vmem:[#allocation3 + $0xc3] sm:$0xff]
        %v1477 = vld [vmem:[#allocation3 + $0xd3] sm:$0xff]
        %v1478 = vlaneseq
        %v1479 = vshrl.u32 %v1478, 7
        %v1480 = vsub.s32 3, %v1479
        %v1481 = vrot.slane %v995, %v1480
        %v1482 = vmul.f32 %v1481, %v1464
        %v1483 = vmul.f32 %v1481, %v1465
        %v1484 = vmul.f32 %v1481, %v1466
        %v1485 = vmul.f32 %v1481, %v1467
        %v1486 = vmul.f32 %v1481, %v1468
        %v1487 = vmul.f32 %v1481, %v1469
        %v1488 = vmul.f32 %v1481, %v1470
        %v1489 = vmul.f32 %v1481, %v1471
        %v1490 = vadd.f32 %v1456, %v1482
        %v1491 = vadd.f32 %v1457, %v1483
        %v1492 = vadd.f32 %v1458, %v1484
        %v1493 = vadd.f32 %v1459, %v1485
        %v1494 = vadd.f32 %v1460, %v1486
        %v1495 = vadd.f32 %v1461, %v1487
        %v1496 = vadd.f32 %v1462, %v1488
        %v1497 = vadd.f32 %v1463, %v1489
        %v1498 = vlaneseq
        %v1499 = vshrl.u32 %v1498, 7
        %v1500 = vsub.s32 2, %v1499
        %v1501 = vrot.slane %v996, %v1500
        %v1502 = vmul.f32 %v1501, %v1465
        %v1503 = vmul.f32 %v1501, %v1466
        %v1504 = vmul.f32 %v1501, %v1467
        %v1505 = vmul.f32 %v1501, %v1468
        %v1506 = vmul.f32 %v1501, %v1469
        %v1507 = vmul.f32 %v1501, %v1470
        %v1508 = vmul.f32 %v1501, %v1471
        %v1509 = vmul.f32 %v1501, %v1472
        %v1510 = vadd.f32 %v1490, %v1502
        %v1511 = vadd.f32 %v1491, %v1503
        %v1512 = vadd.f32 %v1492, %v1504
        %v1513 = vadd.f32 %v1493, %v1505
        %v1514 = vadd.f32 %v1494, %v1506
        %v1515 = vadd.f32 %v1495, %v1507
        %v1516 = vadd.f32 %v1496, %v1508
        %v1517 = vadd.f32 %v1497, %v1509
        %v1518 = vlaneseq
        %v1519 = vshrl.u32 %v1518, 7
        %v1520 = vsub.s32 1, %v1519
        %v1521 = vrot.slane %v997, %v1520
        %v1522 = vmul.f32 %v1521, %v1466
        %v1523 = vmul.f32 %v1521, %v1467
        %v1524 = vmul.f32 %v1521, %v1468
        %v1525 = vmul.f32 %v1521, %v1469
        %v1526 = vmul.f32 %v1521, %v1470
        %v1527 = vmul.f32 %v1521, %v1471
        %v1528 = vmul.f32 %v1521, %v1472
        %v1529 = vmul.f32 %v1521, %v1473
        %v1530 = vadd.f32 %v1510, %v1522
        %v1531 = vadd.f32 %v1511, %v1523
        %v1532 = vadd.f32 %v1512, %v1524
        %v1533 = vadd.f32 %v1513, %v1525
        %v1534 = vadd.f32 %v1514, %v1526
        %v1535 = vadd.f32 %v1515, %v1527
        %v1536 = vadd.f32 %v1516, %v1528
        %v1537 = vadd.f32 %v1517, %v1529
        %v1538 = vlaneseq
        %v1539 = vshrl.u32 %v1538, 7
        %v1540 = vsub.s32 0, %v1539
        %v1541 = vrot.slane %v998, %v1540
        %v1542 = vmul.f32 %v1541, %v1467
        %v1543 = vmul.f32 %v1541, %v1468
        %v1544 = vmul.f32 %v1541, %v1469
        %v1545 = vmul.f32 %v1541, %v1470
        %v1546 = vmul.f32 %v1541, %v1471
        %v1547 = vmul.f32 %v1541, %v1472
        %v1548 = vmul.f32 %v1541, %v1473
        %v1549 = vmul.f32 %v1541, %v1474
        %v1550 = vadd.f32 %v1530, %v1542
        %v1551 = vadd.f32 %v1531, %v1543
        %v1552 = vadd.f32 %v1532, %v1544
        %v1553 = vadd.f32 %v1533, %v1545
        %v1554 = vadd.f32 %v1534, %v1546
        %v1555 = vadd.f32 %v1535, %v1547
        %v1556 = vadd.f32 %v1536, %v1548
        %v1557 = vadd.f32 %v1537, %v1549
        %v1558 = vlaneseq
        %v1559 = vshrl.u32 %v1558, 7
        %v1560 = vsub.s32 7, %v1559
        %v1561 = vrot.slane %v998, %v1560
        %v1562 = vmul.f32 %v1561, %v1468
        %v1563 = vmul.f32 %v1561, %v1469
        %v1564 = vmul.f32 %v1561, %v1470
        %v1565 = vmul.f32 %v1561, %v1471
        %v1566 = vmul.f32 %v1561, %v1472
        %v1567 = vmul.f32 %v1561, %v1473
        %v1568 = vmul.f32 %v1561, %v1474
        %v1569 = vmul.f32 %v1561, %v1475
        %v1570 = vadd.f32 %v1550, %v1562
        %v1571 = vadd.f32 %v1551, %v1563
        %v1572 = vadd.f32 %v1552, %v1564
        %v1573 = vadd.f32 %v1553, %v1565
        %v1574 = vadd.f32 %v1554, %v1566
        %v1575 = vadd.f32 %v1555, %v1567
        %v1576 = vadd.f32 %v1556, %v1568
        %v1577 = vadd.f32 %v1557, %v1569
        %v1578 = vlaneseq
        %v1579 = vshrl.u32 %v1578, 7
        %v1580 = vsub.s32 6, %v1579
        %v1581 = vrot.slane %v999, %v1580
        %v1582 = vmul.f32 %v1581, %v1469
        %v1583 = vmul.f32 %v1581, %v1470
        %v1584 = vmul.f32 %v1581, %v1471
        %v1585 = vmul.f32 %v1581, %v1472
        %v1586 = vmul.f32 %v1581, %v1473
        %v1587 = vmul.f32 %v1581, %v1474
        %v1588 = vmul.f32 %v1581, %v1475
        %v1589 = vmul.f32 %v1581, %v1476
        %v1590 = vadd.f32 %v1570, %v1582
        %v1591 = vadd.f32 %v1571, %v1583
        %v1592 = vadd.f32 %v1572, %v1584
        %v1593 = vadd.f32 %v1573, %v1585
        %v1594 = vadd.f32 %v1574, %v1586
        %v1595 = vadd.f32 %v1575, %v1587
        %v1596 = vadd.f32 %v1576, %v1588
        %v1597 = vadd.f32 %v1577, %v1589
        %v1598 = vlaneseq
        %v1599 = vshrl.u32 %v1598, 7
        %v1600 = vsub.s32 5, %v1599
        %v1601 = vrot.slane %v1000, %v1600
        %v1602 = vmul.f32 %v1601, %v1470
        %v1603 = vmul.f32 %v1601, %v1471
        %v1604 = vmul.f32 %v1601, %v1472
        %v1605 = vmul.f32 %v1601, %v1473
        %v1606 = vmul.f32 %v1601, %v1474
        %v1607 = vmul.f32 %v1601, %v1475
        %v1608 = vmul.f32 %v1601, %v1476
        %v1609 = vmul.f32 %v1601, %v1477
        %v1610 = vadd.f32 %v1590, %v1602
        %v1611 = vadd.f32 %v1591, %v1603
        %v1612 = vadd.f32 %v1592, %v1604
        %v1613 = vadd.f32 %v1593, %v1605
        %v1614 = vadd.f32 %v1594, %v1606
        %v1615 = vadd.f32 %v1595, %v1607
        %v1616 = vadd.f32 %v1596, %v1608
        %v1617 = vadd.f32 %v1597, %v1609
        %v1618 = vld [vmem:[#allocation3 + $0x4] sm:$0xff]
        %v1619 = vld [vmem:[#allocation3 + $0x14] sm:$0xff]
        %v1620 = vld [vmem:[#allocation3 + $0x24] sm:$0xff]
        %v1621 = vld [vmem:[#allocation3 + $0x34] sm:$0xff]
        %v1622 = vld [vmem:[#allocation3 + $0x44] sm:$0xff]
        %v1623 = vld [vmem:[#allocation3 + $0x54] sm:$0xff]
        %v1624 = vld [vmem:[#allocation3 + $0x64] sm:$0xff]
        %v1625 = vld [vmem:[#allocation3 + $0x74] sm:$0xff]
        %v1626 = vld [vmem:[#allocation3 + $0x84] sm:$0xff]
        %v1627 = vld [vmem:[#allocation3 + $0x94] sm:$0xff]
        %v1628 = vld [vmem:[#allocation3 + $0xa4] sm:$0xff]
        %v1629 = vld [vmem:[#allocation3 + $0xb4] sm:$0xff]
        %v1630 = vld [vmem:[#allocation3 + $0xc4] sm:$0xff]
        %v1631 = vld [vmem:[#allocation3 + $0xd4] sm:$0xff]
        %v1632 = vlaneseq
        %v1633 = vshrl.u32 %v1632, 7
        %v1634 = vsub.s32 4, %v1633
        %v1635 = vrot.slane %v995, %v1634
        %v1636 = vmul.f32 %v1635, %v1618
        %v1637 = vmul.f32 %v1635, %v1619
        %v1638 = vmul.f32 %v1635, %v1620
        %v1639 = vmul.f32 %v1635, %v1621
        %v1640 = vmul.f32 %v1635, %v1622
        %v1641 = vmul.f32 %v1635, %v1623
        %v1642 = vmul.f32 %v1635, %v1624
        %v1643 = vmul.f32 %v1635, %v1625
        %v1644 = vadd.f32 %v1610, %v1636
        %v1645 = vadd.f32 %v1611, %v1637
        %v1646 = vadd.f32 %v1612, %v1638
        %v1647 = vadd.f32 %v1613, %v1639
        %v1648 = vadd.f32 %v1614, %v1640
        %v1649 = vadd.f32 %v1615, %v1641
        %v1650 = vadd.f32 %v1616, %v1642
        %v1651 = vadd.f32 %v1617, %v1643
        %v1652 = vlaneseq
        %v1653 = vshrl.u32 %v1652, 7
        %v1654 = vsub.s32 3, %v1653
        %v1655 = vrot.slane %v996, %v1654
        %v1656 = vmul.f32 %v1655, %v1619
        %v1657 = vmul.f32 %v1655, %v1620
        %v1658 = vmul.f32 %v1655, %v1621
        %v1659 = vmul.f32 %v1655, %v1622
        %v1660 = vmul.f32 %v1655, %v1623
        %v1661 = vmul.f32 %v1655, %v1624
        %v1662 = vmul.f32 %v1655, %v1625
        %v1663 = vmul.f32 %v1655, %v1626
        %v1664 = vadd.f32 %v1644, %v1656
        %v1665 = vadd.f32 %v1645, %v1657
        %v1666 = vadd.f32 %v1646, %v1658
        %v1667 = vadd.f32 %v1647, %v1659
        %v1668 = vadd.f32 %v1648, %v1660
        %v1669 = vadd.f32 %v1649, %v1661
        %v1670 = vadd.f32 %v1650, %v1662
        %v1671 = vadd.f32 %v1651, %v1663
        %v1672 = vlaneseq
        %v1673 = vshrl.u32 %v1672, 7
        %v1674 = vsub.s32 2, %v1673
        %v1675 = vrot.slane %v997, %v1674
        %v1676 = vmul.f32 %v1675, %v1620
        %v1677 = vmul.f32 %v1675, %v1621
        %v1678 = vmul.f32 %v1675, %v1622
        %v1679 = vmul.f32 %v1675, %v1623
        %v1680 = vmul.f32 %v1675, %v1624
        %v1681 = vmul.f32 %v1675, %v1625
        %v1682 = vmul.f32 %v1675, %v1626
        %v1683 = vmul.f32 %v1675, %v1627
        %v1684 = vadd.f32 %v1664, %v1676
        %v1685 = vadd.f32 %v1665, %v1677
        %v1686 = vadd.f32 %v1666, %v1678
        %v1687 = vadd.f32 %v1667, %v1679
        %v1688 = vadd.f32 %v1668, %v1680
        %v1689 = vadd.f32 %v1669, %v1681
        %v1690 = vadd.f32 %v1670, %v1682
        %v1691 = vadd.f32 %v1671, %v1683
        %v1692 = vlaneseq
        %v1693 = vshrl.u32 %v1692, 7
        %v1694 = vsub.s32 1, %v1693
        %v1695 = vrot.slane %v998, %v1694
        %v1696 = vmul.f32 %v1695, %v1621
        %v1697 = vmul.f32 %v1695, %v1622
        %v1698 = vmul.f32 %v1695, %v1623
        %v1699 = vmul.f32 %v1695, %v1624
        %v1700 = vmul.f32 %v1695, %v1625
        %v1701 = vmul.f32 %v1695, %v1626
        %v1702 = vmul.f32 %v1695, %v1627
        %v1703 = vmul.f32 %v1695, %v1628
        %v1704 = vadd.f32 %v1684, %v1696
        %v1705 = vadd.f32 %v1685, %v1697
        %v1706 = vadd.f32 %v1686, %v1698
        %v1707 = vadd.f32 %v1687, %v1699
        %v1708 = vadd.f32 %v1688, %v1700
        %v1709 = vadd.f32 %v1689, %v1701
        %v1710 = vadd.f32 %v1690, %v1702
        %v1711 = vadd.f32 %v1691, %v1703
        %v1712 = vlaneseq
        %v1713 = vshrl.u32 %v1712, 7
        %v1714 = vsub.s32 0, %v1713
        %v1715 = vrot.slane %v999, %v1714
        %v1716 = vmul.f32 %v1715, %v1622
        %v1717 = vmul.f32 %v1715, %v1623
        %v1718 = vmul.f32 %v1715, %v1624
        %v1719 = vmul.f32 %v1715, %v1625
        %v1720 = vmul.f32 %v1715, %v1626
        %v1721 = vmul.f32 %v1715, %v1627
        %v1722 = vmul.f32 %v1715, %v1628
        %v1723 = vmul.f32 %v1715, %v1629
        %v1724 = vadd.f32 %v1704, %v1716
        %v1725 = vadd.f32 %v1705, %v1717
        %v1726 = vadd.f32 %v1706, %v1718
        %v1727 = vadd.f32 %v1707, %v1719
        %v1728 = vadd.f32 %v1708, %v1720
        %v1729 = vadd.f32 %v1709, %v1721
        %v1730 = vadd.f32 %v1710, %v1722
        %v1731 = vadd.f32 %v1711, %v1723
        %v1732 = vlaneseq
        %v1733 = vshrl.u32 %v1732, 7
        %v1734 = vsub.s32 7, %v1733
        %v1735 = vrot.slane %v999, %v1734
        %v1736 = vmul.f32 %v1735, %v1623
        %v1737 = vmul.f32 %v1735, %v1624
        %v1738 = vmul.f32 %v1735, %v1625
        %v1739 = vmul.f32 %v1735, %v1626
        %v1740 = vmul.f32 %v1735, %v1627
        %v1741 = vmul.f32 %v1735, %v1628
        %v1742 = vmul.f32 %v1735, %v1629
        %v1743 = vmul.f32 %v1735, %v1630
        %v1744 = vadd.f32 %v1724, %v1736
        %v1745 = vadd.f32 %v1725, %v1737
        %v1746 = vadd.f32 %v1726, %v1738
        %v1747 = vadd.f32 %v1727, %v1739
        %v1748 = vadd.f32 %v1728, %v1740
        %v1749 = vadd.f32 %v1729, %v1741
        %v1750 = vadd.f32 %v1730, %v1742
        %v1751 = vadd.f32 %v1731, %v1743
        %v1752 = vlaneseq
        %v1753 = vshrl.u32 %v1752, 7
        %v1754 = vsub.s32 6, %v1753
        %v1755 = vrot.slane %v1000, %v1754
        %v1756 = vmul.f32 %v1755, %v1624
        %v1757 = vmul.f32 %v1755, %v1625
        %v1758 = vmul.f32 %v1755, %v1626
        %v1759 = vmul.f32 %v1755, %v1627
        %v1760 = vmul.f32 %v1755, %v1628
        %v1761 = vmul.f32 %v1755, %v1629
        %v1762 = vmul.f32 %v1755, %v1630
        %v1763 = vmul.f32 %v1755, %v1631
        %v1764 = vadd.f32 %v1744, %v1756
        %v1765 = vadd.f32 %v1745, %v1757
        %v1766 = vadd.f32 %v1746, %v1758
        %v1767 = vadd.f32 %v1747, %v1759
        %v1768 = vadd.f32 %v1748, %v1760
        %v1769 = vadd.f32 %v1749, %v1761
        %v1770 = vadd.f32 %v1750, %v1762
        %v1771 = vadd.f32 %v1751, %v1763
        %v1772 = vld [vmem:[#allocation3 + $0x5] sm:$0xff]
        %v1773 = vld [vmem:[#allocation3 + $0x15] sm:$0xff]
        %v1774 = vld [vmem:[#allocation3 + $0x25] sm:$0xff]
        %v1775 = vld [vmem:[#allocation3 + $0x35] sm:$0xff]
        %v1776 = vld [vmem:[#allocation3 + $0x45] sm:$0xff]
        %v1777 = vld [vmem:[#allocation3 + $0x55] sm:$0xff]
        %v1778 = vld [vmem:[#allocation3 + $0x65] sm:$0xff]
        %v1779 = vld [vmem:[#allocation3 + $0x75] sm:$0xff]
        %v1780 = vld [vmem:[#allocation3 + $0x85] sm:$0xff]
        %v1781 = vld [vmem:[#allocation3 + $0x95] sm:$0xff]
        %v1782 = vld [vmem:[#allocation3 + $0xa5] sm:$0xff]
        %v1783 = vld [vmem:[#allocation3 + $0xb5] sm:$0xff]
        %v1784 = vld [vmem:[#allocation3 + $0xc5] sm:$0xff]
        %v1785 = vld [vmem:[#allocation3 + $0xd5] sm:$0xff]
        %v1786 = vlaneseq
        %v1787 = vshrl.u32 %v1786, 7
        %v1788 = vsub.s32 5, %v1787
        %v1789 = vrot.slane %v995, %v1788
        %v1790 = vmul.f32 %v1789, %v1772
        %v1791 = vmul.f32 %v1789, %v1773
        %v1792 = vmul.f32 %v1789, %v1774
        %v1793 = vmul.f32 %v1789, %v1775
        %v1794 = vmul.f32 %v1789, %v1776
        %v1795 = vmul.f32 %v1789, %v1777
        %v1796 = vmul.f32 %v1789, %v1778
        %v1797 = vmul.f32 %v1789, %v1779
        %v1798 = vadd.f32 %v1764, %v1790
        %v1799 = vadd.f32 %v1765, %v1791
        %v1800 = vadd.f32 %v1766, %v1792
        %v1801 = vadd.f32 %v1767, %v1793
        %v1802 = vadd.f32 %v1768, %v1794
        %v1803 = vadd.f32 %v1769, %v1795
        %v1804 = vadd.f32 %v1770, %v1796
        %v1805 = vadd.f32 %v1771, %v1797
        %v1806 = vlaneseq
        %v1807 = vshrl.u32 %v1806, 7
        %v1808 = vsub.s32 4, %v1807
        %v1809 = vrot.slane %v996, %v1808
        %v1810 = vmul.f32 %v1809, %v1773
        %v1811 = vmul.f32 %v1809, %v1774
        %v1812 = vmul.f32 %v1809, %v1775
        %v1813 = vmul.f32 %v1809, %v1776
        %v1814 = vmul.f32 %v1809, %v1777
        %v1815 = vmul.f32 %v1809, %v1778
        %v1816 = vmul.f32 %v1809, %v1779
        %v1817 = vmul.f32 %v1809, %v1780
        %v1818 = vadd.f32 %v1798, %v1810
        %v1819 = vadd.f32 %v1799, %v1811
        %v1820 = vadd.f32 %v1800, %v1812
        %v1821 = vadd.f32 %v1801, %v1813
        %v1822 = vadd.f32 %v1802, %v1814
        %v1823 = vadd.f32 %v1803, %v1815
        %v1824 = vadd.f32 %v1804, %v1816
        %v1825 = vadd.f32 %v1805, %v1817
        %v1826 = vlaneseq
        %v1827 = vshrl.u32 %v1826, 7
        %v1828 = vsub.s32 3, %v1827
        %v1829 = vrot.slane %v997, %v1828
        %v1830 = vmul.f32 %v1829, %v1774
        %v1831 = vmul.f32 %v1829, %v1775
        %v1832 = vmul.f32 %v1829, %v1776
        %v1833 = vmul.f32 %v1829, %v1777
        %v1834 = vmul.f32 %v1829, %v1778
        %v1835 = vmul.f32 %v1829, %v1779
        %v1836 = vmul.f32 %v1829, %v1780
        %v1837 = vmul.f32 %v1829, %v1781
        %v1838 = vadd.f32 %v1818, %v1830
        %v1839 = vadd.f32 %v1819, %v1831
        %v1840 = vadd.f32 %v1820, %v1832
        %v1841 = vadd.f32 %v1821, %v1833
        %v1842 = vadd.f32 %v1822, %v1834
        %v1843 = vadd.f32 %v1823, %v1835
        %v1844 = vadd.f32 %v1824, %v1836
        %v1845 = vadd.f32 %v1825, %v1837
        %v1846 = vlaneseq
        %v1847 = vshrl.u32 %v1846, 7
        %v1848 = vsub.s32 2, %v1847
        %v1849 = vrot.slane %v998, %v1848
        %v1850 = vmul.f32 %v1849, %v1775
        %v1851 = vmul.f32 %v1849, %v1776
        %v1852 = vmul.f32 %v1849, %v1777
        %v1853 = vmul.f32 %v1849, %v1778
        %v1854 = vmul.f32 %v1849, %v1779
        %v1855 = vmul.f32 %v1849, %v1780
        %v1856 = vmul.f32 %v1849, %v1781
        %v1857 = vmul.f32 %v1849, %v1782
        %v1858 = vadd.f32 %v1838, %v1850
        %v1859 = vadd.f32 %v1839, %v1851
        %v1860 = vadd.f32 %v1840, %v1852
        %v1861 = vadd.f32 %v1841, %v1853
        %v1862 = vadd.f32 %v1842, %v1854
        %v1863 = vadd.f32 %v1843, %v1855
        %v1864 = vadd.f32 %v1844, %v1856
        %v1865 = vadd.f32 %v1845, %v1857
        %v1866 = vlaneseq
        %v1867 = vshrl.u32 %v1866, 7
        %v1868 = vsub.s32 1, %v1867
        %v1869 = vrot.slane %v999, %v1868
        %v1870 = vmul.f32 %v1869, %v1776
        %v1871 = vmul.f32 %v1869, %v1777
        %v1872 = vmul.f32 %v1869, %v1778
        %v1873 = vmul.f32 %v1869, %v1779
        %v1874 = vmul.f32 %v1869, %v1780
        %v1875 = vmul.f32 %v1869, %v1781
        %v1876 = vmul.f32 %v1869, %v1782
        %v1877 = vmul.f32 %v1869, %v1783
        %v1878 = vadd.f32 %v1858, %v1870
        %v1879 = vadd.f32 %v1859, %v1871
        %v1880 = vadd.f32 %v1860, %v1872
        %v1881 = vadd.f32 %v1861, %v1873
        %v1882 = vadd.f32 %v1862, %v1874
        %v1883 = vadd.f32 %v1863, %v1875
        %v1884 = vadd.f32 %v1864, %v1876
        %v1885 = vadd.f32 %v1865, %v1877
        %v1886 = vlaneseq
        %v1887 = vshrl.u32 %v1886, 7
        %v1888 = vsub.s32 0, %v1887
        %v1889 = vrot.slane %v1000, %v1888
        %v1890 = vmul.f32 %v1889, %v1777
        %v1891 = vmul.f32 %v1889, %v1778
        %v1892 = vmul.f32 %v1889, %v1779
        %v1893 = vmul.f32 %v1889, %v1780
        %v1894 = vmul.f32 %v1889, %v1781
        %v1895 = vmul.f32 %v1889, %v1782
        %v1896 = vmul.f32 %v1889, %v1783
        %v1897 = vmul.f32 %v1889, %v1784
        %v1898 = vadd.f32 %v1878, %v1890
        %v1899 = vadd.f32 %v1879, %v1891
        %v1900 = vadd.f32 %v1880, %v1892
        %v1901 = vadd.f32 %v1881, %v1893
        %v1902 = vadd.f32 %v1882, %v1894
        %v1903 = vadd.f32 %v1883, %v1895
        %v1904 = vadd.f32 %v1884, %v1896
        %v1905 = vadd.f32 %v1885, %v1897
        %v1906 = vlaneseq
        %v1907 = vshrl.u32 %v1906, 7
        %v1908 = vsub.s32 7, %v1907
        %v1909 = vrot.slane %v1000, %v1908
        %v1910 = vmul.f32 %v1909, %v1778
        %v1911 = vmul.f32 %v1909, %v1779
        %v1912 = vmul.f32 %v1909, %v1780
        %v1913 = vmul.f32 %v1909, %v1781
        %v1914 = vmul.f32 %v1909, %v1782
        %v1915 = vmul.f32 %v1909, %v1783
        %v1916 = vmul.f32 %v1909, %v1784
        %v1917 = vmul.f32 %v1909, %v1785
        %v1918 = vadd.f32 %v1898, %v1910
        %v1919 = vadd.f32 %v1899, %v1911
        %v1920 = vadd.f32 %v1900, %v1912
        %v1921 = vadd.f32 %v1901, %v1913
        %v1922 = vadd.f32 %v1902, %v1914
        %v1923 = vadd.f32 %v1903, %v1915
        %v1924 = vadd.f32 %v1904, %v1916
        %v1925 = vadd.f32 %v1905, %v1917
        %v1926 = vld [vmem:[#allocation3 + $0x6] sm:$0xff]
        %v1927 = vld [vmem:[#allocation3 + $0x16] sm:$0xff]
        %v1928 = vld [vmem:[#allocation3 + $0x26] sm:$0xff]
        %v1929 = vld [vmem:[#allocation3 + $0x36] sm:$0xff]
        %v1930 = vld [vmem:[#allocation3 + $0x46] sm:$0xff]
        %v1931 = vld [vmem:[#allocation3 + $0x56] sm:$0xff]
        %v1932 = vld [vmem:[#allocation3 + $0x66] sm:$0xff]
        %v1933 = vld [vmem:[#allocation3 + $0x76] sm:$0xff]
        %v1934 = vld [vmem:[#allocation3 + $0x86] sm:$0xff]
        %v1935 = vld [vmem:[#allocation3 + $0x96] sm:$0xff]
        %v1936 = vld [vmem:[#allocation3 + $0xa6] sm:$0xff]
        %v1937 = vld [vmem:[#allocation3 + $0xb6] sm:$0xff]
        %v1938 = vld [vmem:[#allocation3 + $0xc6] sm:$0xff]
        %v1939 = vld [vmem:[#allocation3 + $0xd6] sm:$0xff]
        %v1940 = vlaneseq
        %v1941 = vshrl.u32 %v1940, 7
        %v1942 = vsub.s32 6, %v1941
        %v1943 = vrot.slane %v995, %v1942
        %v1944 = vmul.f32 %v1943, %v1926
        %v1945 = vmul.f32 %v1943, %v1927
        %v1946 = vmul.f32 %v1943, %v1928
        %v1947 = vmul.f32 %v1943, %v1929
        %v1948 = vmul.f32 %v1943, %v1930
        %v1949 = vmul.f32 %v1943, %v1931
        %v1950 = vmul.f32 %v1943, %v1932
        %v1951 = vmul.f32 %v1943, %v1933
        %v1952 = vadd.f32 %v1918, %v1944
        %v1953 = vadd.f32 %v1919, %v1945
        %v1954 = vadd.f32 %v1920, %v1946
        %v1955 = vadd.f32 %v1921, %v1947
        %v1956 = vadd.f32 %v1922, %v1948
        %v1957 = vadd.f32 %v1923, %v1949
        %v1958 = vadd.f32 %v1924, %v1950
        %v1959 = vadd.f32 %v1925, %v1951
        %v1960 = vlaneseq
        %v1961 = vshrl.u32 %v1960, 7
        %v1962 = vsub.s32 5, %v1961
        %v1963 = vrot.slane %v996, %v1962
        %v1964 = vmul.f32 %v1963, %v1927
        %v1965 = vmul.f32 %v1963, %v1928
        %v1966 = vmul.f32 %v1963, %v1929
        %v1967 = vmul.f32 %v1963, %v1930
        %v1968 = vmul.f32 %v1963, %v1931
        %v1969 = vmul.f32 %v1963, %v1932
        %v1970 = vmul.f32 %v1963, %v1933
        %v1971 = vmul.f32 %v1963, %v1934
        %v1972 = vadd.f32 %v1952, %v1964
        %v1973 = vadd.f32 %v1953, %v1965
        %v1974 = vadd.f32 %v1954, %v1966
        %v1975 = vadd.f32 %v1955, %v1967
        %v1976 = vadd.f32 %v1956, %v1968
        %v1977 = vadd.f32 %v1957, %v1969
        %v1978 = vadd.f32 %v1958, %v1970
        %v1979 = vadd.f32 %v1959, %v1971
        %v1980 = vlaneseq
        %v1981 = vshrl.u32 %v1980, 7
        %v1982 = vsub.s32 4, %v1981
        %v1983 = vrot.slane %v997, %v1982
        %v1984 = vmul.f32 %v1983, %v1928
        %v1985 = vmul.f32 %v1983, %v1929
        %v1986 = vmul.f32 %v1983, %v1930
        %v1987 = vmul.f32 %v1983, %v1931
        %v1988 = vmul.f32 %v1983, %v1932
        %v1989 = vmul.f32 %v1983, %v1933
        %v1990 = vmul.f32 %v1983, %v1934
        %v1991 = vmul.f32 %v1983, %v1935
        %v1992 = vadd.f32 %v1972, %v1984
        %v1993 = vadd.f32 %v1973, %v1985
        %v1994 = vadd.f32 %v1974, %v1986
        %v1995 = vadd.f32 %v1975, %v1987
        %v1996 = vadd.f32 %v1976, %v1988
        %v1997 = vadd.f32 %v1977, %v1989
        %v1998 = vadd.f32 %v1978, %v1990
        %v1999 = vadd.f32 %v1979, %v1991
        %v2000 = vlaneseq
        %v2001 = vshrl.u32 %v2000, 7
        %v2002 = vsub.s32 3, %v2001
        %v2003 = vrot.slane %v998, %v2002
        %v2004 = vmul.f32 %v2003, %v1929
        %v2005 = vmul.f32 %v2003, %v1930
        %v2006 = vmul.f32 %v2003, %v1931
        %v2007 = vmul.f32 %v2003, %v1932
        %v2008 = vmul.f32 %v2003, %v1933
        %v2009 = vmul.f32 %v2003, %v1934
        %v2010 = vmul.f32 %v2003, %v1935
        %v2011 = vmul.f32 %v2003, %v1936
        %v2012 = vadd.f32 %v1992, %v2004
        %v2013 = vadd.f32 %v1993, %v2005
        %v2014 = vadd.f32 %v1994, %v2006
        %v2015 = vadd.f32 %v1995, %v2007
        %v2016 = vadd.f32 %v1996, %v2008
        %v2017 = vadd.f32 %v1997, %v2009
        %v2018 = vadd.f32 %v1998, %v2010
        %v2019 = vadd.f32 %v1999, %v2011
        %v2020 = vlaneseq
        %v2021 = vshrl.u32 %v2020, 7
        %v2022 = vsub.s32 2, %v2021
        %v2023 = vrot.slane %v999, %v2022
        %v2024 = vmul.f32 %v2023, %v1930
        %v2025 = vmul.f32 %v2023, %v1931
        %v2026 = vmul.f32 %v2023, %v1932
        %v2027 = vmul.f32 %v2023, %v1933
        %v2028 = vmul.f32 %v2023, %v1934
        %v2029 = vmul.f32 %v2023, %v1935
        %v2030 = vmul.f32 %v2023, %v1936
        %v2031 = vmul.f32 %v2023, %v1937
        %v2032 = vadd.f32 %v2012, %v2024
        %v2033 = vadd.f32 %v2013, %v2025
        %v2034 = vadd.f32 %v2014, %v2026
        %v2035 = vadd.f32 %v2015, %v2027
        %v2036 = vadd.f32 %v2016, %v2028
        %v2037 = vadd.f32 %v2017, %v2029
        %v2038 = vadd.f32 %v2018, %v2030
        %v2039 = vadd.f32 %v2019, %v2031
        %v2040 = vlaneseq
        %v2041 = vshrl.u32 %v2040, 7
        %v2042 = vsub.s32 1, %v2041
        %v2043 = vrot.slane %v1000, %v2042
        %v2044 = vmul.f32 %v2043, %v1931
        %v2045 = vmul.f32 %v2043, %v1932
        %v2046 = vmul.f32 %v2043, %v1933
        %v2047 = vmul.f32 %v2043, %v1934
        %v2048 = vmul.f32 %v2043, %v1935
        %v2049 = vmul.f32 %v2043, %v1936
        %v2050 = vmul.f32 %v2043, %v1937
        %v2051 = vmul.f32 %v2043, %v1938
        %v2052 = vadd.f32 %v2032, %v2044
        %v2053 = vadd.f32 %v2033, %v2045
        %v2054 = vadd.f32 %v2034, %v2046
        %v2055 = vadd.f32 %v2035, %v2047
        %v2056 = vadd.f32 %v2036, %v2048
        %v2057 = vadd.f32 %v2037, %v2049
        %v2058 = vadd.f32 %v2038, %v2050
        %v2059 = vadd.f32 %v2039, %v2051
        %v2060 = vlaneseq
        %v2061 = vshrl.u32 %v2060, 7
        %v2062 = vsub.s32 0, %v2061
        %v2063 = vrot.slane %v1001, %v2062
        %v2064 = vmul.f32 %v2063, %v1932
        %v2065 = vmul.f32 %v2063, %v1933
        %v2066 = vmul.f32 %v2063, %v1934
        %v2067 = vmul.f32 %v2063, %v1935
        %v2068 = vmul.f32 %v2063, %v1936
        %v2069 = vmul.f32 %v2063, %v1937
        %v2070 = vmul.f32 %v2063, %v1938
        %v2071 = vmul.f32 %v2063, %v1939
        %v2072 = vadd.f32 %v2052, %v2064
        %v2073 = vadd.f32 %v2053, %v2065
        %v2074 = vadd.f32 %v2054, %v2066
        %v2075 = vadd.f32 %v2055, %v2067
        %v2076 = vadd.f32 %v2056, %v2068
        %v2077 = vadd.f32 %v2057, %v2069
        %v2078 = vadd.f32 %v2058, %v2070
        %v2079 = vadd.f32 %v2059, %v2071
        %v2080 = vlaneseq
        %v2081 = vshrl.u32 %v2080, 7
        %v2082 = vsub.s32 1, %v2081
        %v2083 = vrot.slane %v539, %v2082
        %v2084 = vmul.f32 %v2072, %v2083
        %v2085 = vmul.f32 %v2073, %v2083
        %v2086 = vmul.f32 %v2074, %v2083
        %v2087 = vmul.f32 %v2075, %v2083
        %v2088 = vmul.f32 %v2076, %v2083
        %v2089 = vmul.f32 %v2077, %v2083
        %v2090 = vmul.f32 %v2078, %v2083
        %v2091 = vmul.f32 %v2079, %v2083
        %v2092 = vlaneseq
        %v2093 = vshrl.u32 %v2092, 7
        %v2094 = vsub.s32 2, %v2093
        %v2095 = vrot.slane %v539, %v2094
        %v2096 = vadd.f32 %v2084, %v2095
        %v2097 = vadd.f32 %v2085, %v2095
        %v2098 = vadd.f32 %v2086, %v2095
        %v2099 = vadd.f32 %v2087, %v2095
        %v2100 = vadd.f32 %v2088, %v2095
        %v2101 = vadd.f32 %v2089, %v2095
        %v2102 = vadd.f32 %v2090, %v2095
        %v2103 = vadd.f32 %v2091, %v2095
        %v2104 = vadd.f32 %v2096, 3.0
        %v2105 = vadd.f32 %v2097, 3.0
        %v2106 = vadd.f32 %v2098, 3.0
        %v2107 = vadd.f32 %v2099, 3.0
        %v2108 = vadd.f32 %v2100, 3.0
        %v2109 = vadd.f32 %v2101, 3.0
        %v2110 = vadd.f32 %v2102, 3.0
        %v2111 = vadd.f32 %v2103, 3.0
        %v2112 = vmax.f32 %v2104, 0.0
        %v2113 = vmax.f32 %v2105, 0.0
        %v2114 = vmax.f32 %v2106, 0.0
        %v2115 = vmax.f32 %v2107, 0.0
        %v2116 = vmax.f32 %v2108, 0.0
        %v2117 = vmax.f32 %v2109, 0.0
        %v2118 = vmax.f32 %v2110, 0.0
        %v2119 = vmax.f32 %v2111, 0.0
        %v2120 = vmin.f32 %v2112, 6.0
        %v2121 = vmin.f32 %v2113, 6.0
        %v2122 = vmin.f32 %v2114, 6.0
        %v2123 = vmin.f32 %v2115, 6.0
        %v2124 = vmin.f32 %v2116, 6.0
        %v2125 = vmin.f32 %v2117, 6.0
        %v2126 = vmin.f32 %v2118, 6.0
        %v2127 = vmin.f32 %v2119, 6.0
        %v2128 = vmul.f32 %v2120, 0.16666667
        %v2129 = vmul.f32 %v2121, 0.16666667
        %v2130 = vmul.f32 %v2122, 0.16666667
        %v2131 = vmul.f32 %v2123, 0.16666667
        %v2132 = vmul.f32 %v2124, 0.16666667
        %v2133 = vmul.f32 %v2125, 0.16666667
        %v2134 = vmul.f32 %v2126, 0.16666667
        %v2135 = vmul.f32 %v2127, 0.16666667
        %v2136 = vmul.f32 %v2096, %v2128
        %v2137 = vmul.f32 %v2097, %v2129
        %v2138 = vmul.f32 %v2098, %v2130
        %v2139 = vmul.f32 %v2099, %v2131
        %v2140 = vmul.f32 %v2100, %v2132
        %v2141 = vmul.f32 %v2101, %v2133
        %v2142 = vmul.f32 %v2102, %v2134
        %v2143 = vmul.f32 %v2103, %v2135
        %v2144 = vmul.f32 %v809, %v2136
        %v2145 = vmul.f32 %v809, %v2137
        %v2146 = vmul.f32 %v809, %v2138
        %v2147 = vmul.f32 %v809, %v2139
        %v2148 = vmul.f32 %v809, %v2140
        %v2149 = vmul.f32 %v809, %v2141
        %v2150 = vmul.f32 %v809, %v2142
        %v2151 = vmul.f32 %v809, %v2143
        %v2152 = vmax.f32 %v2096, 0.0
        %v2153 = vmax.f32 %v2097, 0.0
        %v2154 = vmax.f32 %v2098, 0.0
        %v2155 = vmax.f32 %v2099, 0.0
        %v2156 = vmax.f32 %v2100, 0.0
        %v2157 = vmax.f32 %v2101, 0.0
        %v2158 = vmax.f32 %v2102, 0.0
        %v2159 = vmax.f32 %v2103, 0.0
        %v2160 = vmul.f32 %v843, %v2152
        %v2161 = vmul.f32 %v843, %v2153
        %v2162 = vmul.f32 %v843, %v2154
        %v2163 = vmul.f32 %v843, %v2155
        %v2164 = vmul.f32 %v843, %v2156
        %v2165 = vmul.f32 %v843, %v2157
        %v2166 = vmul.f32 %v843, %v2158
        %v2167 = vmul.f32 %v843, %v2159
        %v2168 = vadd.f32 %v2144, %v2160
        %v2169 = vadd.f32 %v2145, %v2161
        %v2170 = vadd.f32 %v2146, %v2162
        %v2171 = vadd.f32 %v2147, %v2163
        %v2172 = vadd.f32 %v2148, %v2164
        %v2173 = vadd.f32 %v2149, %v2165
        %v2174 = vadd.f32 %v2150, %v2166
        %v2175 = vadd.f32 %v2151, %v2167
        %v2176 = vadd.f32 %v2168, %v2169
        %v2177 = vadd.f32 %v2176, %v2170
        %v2178 = vadd.f32 %v2177, %v2171
        %v2179 = vadd.f32 %v2178, %v2172
        %v2180 = vadd.f32 %v2179, %v2173
        %v2181 = vadd.f32 %v2180, %v2174
        %v2182 = vadd.f32 %v2181, %v2175
        %v2183 = vrot.slane %v2182, 4
        %v2184 = vadd.f32 %v2182, %v2183
        %v2185 = vrot.slane %v2184, 2
        %v2186 = vadd.f32 %v2184, %v2185
        %v2187 = vrot.slane %v2186, 1
        %v2188 = vadd.f32 %v2186, %v2187
        %v2189 = vmul.f32 %v2188, 0.015625
        %v2190 = vpack.c.bf16 %v985, %v985
        %v2191 = vld [vmem:[%s479] sm:$0xf]
        %v2192 = vld [vmem:[%s479 + $0x4] sm:$0xf]
        %v2193 = vld [vmem:[%s479 + $0x8] sm:$0xf]
        %v2194 = vld [vmem:[%s479 + $0xc] sm:$0xf]
        %v2195 = vld [vmem:[%s479 + $0x10] sm:$0xf]
        %v2196 = vld [vmem:[%s479 + $0x14] sm:$0xf]
        %v2197 = vld [vmem:[%s479 + $0x18] sm:$0xf]
        %v2198 = vld [vmem:[%s479 + $0x1c] sm:$0xf]
        %v2199 = vld [vmem:[%s479 + $0x20] sm:$0xf]
        %v2200 = vld [vmem:[%s479 + $0x24] sm:$0xf]
        %v2201 = vld [vmem:[%s479 + $0x28] sm:$0xf]
        %v2202 = vld [vmem:[%s479 + $0x2c] sm:$0xf]
        %v2203 = vld [vmem:[%s479 + $0x30] sm:$0xf]
        %v2204 = vld [vmem:[%s479 + $0x34] sm:$0xf]
        %v2205 = vld [vmem:[%s479 + $0x38] sm:$0xf]
        %v2206 = vld [vmem:[%s479 + $0x3c] sm:$0xf]
        %v2207 = vpack.c.bf16 %v2189, %v2189
        %v2208 = vld [vmem:[%s479 + $0x40] sm:$0xf]
        %v2209 = vld [vmem:[%s479 + $0x44] sm:$0xf]
        %v2210 = vld [vmem:[%s479 + $0x48] sm:$0xf]
        %v2211 = vld [vmem:[%s479 + $0x4c] sm:$0xf]
        %v2212 = vld [vmem:[%s479 + $0x50] sm:$0xf]
        %v2213 = vld [vmem:[%s479 + $0x54] sm:$0xf]
        %v2214 = vld [vmem:[%s479 + $0x58] sm:$0xf]
        %v2215 = vld [vmem:[%s479 + $0x5c] sm:$0xf]
        %v2216 = vld [vmem:[%s479 + $0x60] sm:$0xf]
        %v2217 = vld [vmem:[%s479 + $0x64] sm:$0xf]
        %v2218 = vld [vmem:[%s479 + $0x68] sm:$0xf]
        %v2219 = vld [vmem:[%s479 + $0x6c] sm:$0xf]
        %v2220 = vld [vmem:[%s479 + $0x70] sm:$0xf]
        %v2221 = vld [vmem:[%s479 + $0x74] sm:$0xf]
        %v2222 = vld [vmem:[%s479 + $0x78] sm:$0xf]
        %v2223 = vld [vmem:[%s479 + $0x7c] sm:$0xf]
        %v2240 = vunpack.c.l.b16 %v2208
        %v2241 = vunpack.c.l.b16 %v2209
        %v2242 = vunpack.c.l.b16 %v2210
        %v2243 = vunpack.c.l.b16 %v2211
        %v2244 = vunpack.c.l.b16 %v2212
        %v2245 = vunpack.c.l.b16 %v2213
        %v2246 = vunpack.c.l.b16 %v2214
        %v2247 = vunpack.c.l.b16 %v2215
        %v2248 = vunpack.c.l.b16 %v2216
        %v2249 = vunpack.c.l.b16 %v2217
        %v2250 = vunpack.c.l.b16 %v2218
        %v2251 = vunpack.c.l.b16 %v2219
        %v2252 = vunpack.c.l.b16 %v2220
        %v2253 = vunpack.c.l.b16 %v2221
        %v2254 = vunpack.c.l.b16 %v2222
        %v2255 = vunpack.c.l.b16 %v2223
        %v2256 = vpack.c.b16 %v2241, %v2240
        %v2257 = vpack.c.b16 %v2243, %v2242
        %v2258 = vpack.c.b16 %v2245, %v2244
        %v2259 = vpack.c.b16 %v2247, %v2246
        %v2260 = vpack.c.b16 %v2249, %v2248
        %v2261 = vpack.c.b16 %v2251, %v2250
        %v2262 = vpack.c.b16 %v2253, %v2252
        %v2263 = vpack.c.b16 %v2255, %v2254
        %2272 = vmatprep.subr.bf16.mxu0 0
        %2273 = vmatpush1.bf16.msra.mxu0 %v2256
        %2274 = vmatprep.subr.bf16.mxu0 0
        %2275 = vmatpush1.bf16.msra.mxu0 %v2257
        %2276 = vmatprep.subr.bf16.mxu0 0
        %2277 = vmatpush1.bf16.msra.mxu0 %v2258
        %2278 = vmatprep.subr.bf16.mxu0 0
        %2279 = vmatpush1.bf16.msra.mxu0 %v2259
        %2280 = vmatprep.subr.bf16.mxu0 0
        %2281 = vmatpush1.bf16.msra.mxu0 %v2260
        %2282 = vmatprep.subr.bf16.mxu0 0
        %2283 = vmatpush1.bf16.msra.mxu0 %v2261
        %2284 = vmatprep.subr.bf16.mxu0 0
        %2285 = vmatpush1.bf16.msra.mxu0 %v2262
        %2286 = vmatprep.subr.bf16.mxu0 0
        %2287 = vmatpush1.bf16.msra.mxu0 %v2263
        %2288 = vmatprep.subr.bf16.mxu0 0
        %2289 = vmatpush1.bf16.msra.mxu0 0
        %2290 = vmatprep.subr.bf16.mxu0 0
        %2291 = vmatpush1.bf16.msra.mxu0 0
        %2292 = vmatprep.subr.bf16.mxu0 0
        %2293 = vmatpush1.bf16.msra.mxu0 0
        %2294 = vmatprep.subr.bf16.mxu0 0
        %2295 = vmatpush1.bf16.msra.mxu0 0
        %2296 = vmatprep.subr.bf16.mxu0 0
        %2297 = vmatpush1.bf16.msra.mxu0 0
        %2298 = vmatprep.subr.bf16.mxu0 0
        %2299 = vmatpush1.bf16.msra.mxu0 0
        %2300 = vmatprep.subr.bf16.mxu0 0
        %2301 = vmatpush1.bf16.msra.mxu0 0
        %2302 = vmatprep.subr.bf16.mxu0 0
        %2303 = vmatpush1.bf16.msra.mxu0 0
        %2304 = vmatprep.mubr.bf16.mxu0 0
        %2305 = vmatmul.mubr.bf16.gmra.mrb[0].mxu0 %v2207
        %v2306 = vpop.f32.mrb[0].mxu0
        %v2307 = vadd.f32 0.0, %v2306
        %v2308 = vpop.f32.mrb[0].mxu0
        %v2309 = vpop.f32.mrb[0].mxu0
        %v2310 = vpop.f32.mrb[0].mxu0
        %2311 = vdwg.mxu0
        %v2328 = vunpack.c.l.b16 %v2191
        %v2329 = vunpack.c.l.b16 %v2192
        %v2330 = vunpack.c.l.b16 %v2193
        %v2331 = vunpack.c.l.b16 %v2194
        %v2332 = vunpack.c.l.b16 %v2195
        %v2333 = vunpack.c.l.b16 %v2196
        %v2334 = vunpack.c.l.b16 %v2197
        %v2335 = vunpack.c.l.b16 %v2198
        %v2336 = vunpack.c.l.b16 %v2199
        %v2337 = vunpack.c.l.b16 %v2200
        %v2338 = vunpack.c.l.b16 %v2201
        %v2339 = vunpack.c.l.b16 %v2202
        %v2340 = vunpack.c.l.b16 %v2203
        %v2341 = vunpack.c.l.b16 %v2204
        %v2342 = vunpack.c.l.b16 %v2205
        %v2343 = vunpack.c.l.b16 %v2206
        %v2344 = vpack.c.b16 %v2329, %v2328
        %v2345 = vpack.c.b16 %v2331, %v2330
        %v2346 = vpack.c.b16 %v2333, %v2332
        %v2347 = vpack.c.b16 %v2335, %v2334
        %v2348 = vpack.c.b16 %v2337, %v2336
        %v2349 = vpack.c.b16 %v2339, %v2338
        %v2350 = vpack.c.b16 %v2341, %v2340
        %v2351 = vpack.c.b16 %v2343, %v2342
        %2360 = vmatprep.subr.bf16.mxu0 0
        %2361 = vmatpush1.bf16.msra.mxu0 %v2344
        %2362 = vmatprep.subr.bf16.mxu0 0
        %2363 = vmatpush1.bf16.msra.mxu0 %v2345
        %2364 = vmatprep.subr.bf16.mxu0 0
        %2365 = vmatpush1.bf16.msra.mxu0 %v2346
        %2366 = vmatprep.subr.bf16.mxu0 0
        %2367 = vmatpush1.bf16.msra.mxu0 %v2347
        %2368 = vmatprep.subr.bf16.mxu0 0
        %2369 = vmatpush1.bf16.msra.mxu0 %v2348
        %2370 = vmatprep.subr.bf16.mxu0 0
        %2371 = vmatpush1.bf16.msra.mxu0 %v2349
        %2372 = vmatprep.subr.bf16.mxu0 0
        %2373 = vmatpush1.bf16.msra.mxu0 %v2350
        %2374 = vmatprep.subr.bf16.mxu0 0
        %2375 = vmatpush1.bf16.msra.mxu0 %v2351
        %2376 = vmatprep.subr.bf16.mxu0 0
        %2377 = vmatpush1.bf16.msra.mxu0 0
        %2378 = vmatprep.subr.bf16.mxu0 0
        %2379 = vmatpush1.bf16.msra.mxu0 0
        %2380 = vmatprep.subr.bf16.mxu0 0
        %2381 = vmatpush1.bf16.msra.mxu0 0
        %2382 = vmatprep.subr.bf16.mxu0 0
        %2383 = vmatpush1.bf16.msra.mxu0 0
        %2384 = vmatprep.subr.bf16.mxu0 0
        %2385 = vmatpush1.bf16.msra.mxu0 0
        %2386 = vmatprep.subr.bf16.mxu0 0
        %2387 = vmatpush1.bf16.msra.mxu0 0
        %2388 = vmatprep.subr.bf16.mxu0 0
        %2389 = vmatpush1.bf16.msra.mxu0 0
        %2390 = vmatprep.subr.bf16.mxu0 0
        %2391 = vmatpush1.bf16.msra.mxu0 0
        %2392 = vmatprep.mubr.bf16.mxu0 0
        %2393 = vmatmul.mubr.bf16.gmra.mrb[0].mxu0 %v2190
        %v2394 = vpop.f32.mrb[0].mxu0
        %v2395 = vadd.f32 %v2307, %v2394
        %v2396 = vpop.f32.mrb[0].mxu0
        %v2397 = vpop.f32.mrb[0].mxu0
        %v2398 = vpop.f32.mrb[0].mxu0
        %2399 = vdwg.mxu0
        %v2401 = vrot.slane %v538, 4
        %v2403 = vadd.f32 %v2395, %v2401
        %v2404 = vmax.f32 %v2403, 0.0
        %v2405 = vpack.c.bf16 %v2404, %v2404
        %v2406 = vld [vmem:[%s484] sm:$0xff]
        %v2407 = vld [vmem:[%s484 + $0x8] sm:$0xff]
        %v2408 = vld [vmem:[%s484 + $0x10] sm:$0xff]
        %v2409 = vld [vmem:[%s484 + $0x18] sm:$0xff]
        %v2410 = vld [vmem:[%s484 + $0x20] sm:$0xff]
        %v2411 = vld [vmem:[%s484 + $0x28] sm:$0xff]
        %v2412 = vld [vmem:[%s484 + $0x30] sm:$0xff]
        %v2413 = vld [vmem:[%s484 + $0x38] sm:$0xff]
        %v2422 = vunpack.c.l.b16 %v2406
        %v2423 = vunpack.c.h.b16 %v2406
        %v2424 = vunpack.c.l.b16 %v2407
        %v2425 = vunpack.c.h.b16 %v2407
        %v2426 = vunpack.c.l.b16 %v2408
        %v2427 = vunpack.c.h.b16 %v2408
        %v2428 = vunpack.c.l.b16 %v2409
        %v2429 = vunpack.c.h.b16 %v2409
        %v2430 = vunpack.c.l.b16 %v2410
        %v2431 = vunpack.c.h.b16 %v2410
        %v2432 = vunpack.c.l.b16 %v2411
        %v2433 = vunpack.c.h.b16 %v2411
        %v2434 = vunpack.c.l.b16 %v2412
        %v2435 = vunpack.c.h.b16 %v2412
        %v2436 = vunpack.c.l.b16 %v2413
        %v2437 = vunpack.c.h.b16 %v2413
        %v2438 = vpack.c.b16 %v2424, %v2422
        %v2439 = vpack.c.b16 %v2425, %v2423
        %v2440 = vpack.c.b16 %v2428, %v2426
        %v2441 = vpack.c.b16 %v2429, %v2427
        %v2442 = vpack.c.b16 %v2432, %v2430
        %v2443 = vpack.c.b16 %v2433, %v2431
        %v2444 = vpack.c.b16 %v2436, %v2434
        %v2445 = vpack.c.b16 %v2437, %v2435
        %v2455 = vrot.slane %v538, 3
        %v2456 = vrot.slane %v539, 3
        %vm2459 = vcmask 523264
        %v2461 = vsel %vm2459, %v2405, 0
        %2463 = vmatprep.subr.bf16.mxu0 %v2439
        %2464 = vmatpush1.bf16.msra.mxu0 %v2438
        %2465 = vmatprep.subr.bf16.mxu0 %v2441
        %2466 = vmatpush1.bf16.msra.mxu0 %v2440
        %2467 = vmatprep.subr.bf16.mxu0 %v2443
        %2468 = vmatpush1.bf16.msra.mxu0 %v2442
        %2469 = vmatprep.subr.bf16.mxu0 %v2445
        %2470 = vmatpush1.bf16.msra.mxu0 %v2444
        %2471 = vmatprep.subr.bf16.mxu0 0
        %2472 = vmatpush1.bf16.msra.mxu0 0
        %2473 = vmatprep.subr.bf16.mxu0 0
        %2474 = vmatpush1.bf16.msra.mxu0 0
        %2475 = vmatprep.subr.bf16.mxu0 0
        %2476 = vmatpush1.bf16.msra.mxu0 0
        %2477 = vmatprep.subr.bf16.mxu0 0
        %2478 = vmatpush1.bf16.msra.mxu0 0
        %2479 = vmatprep.subr.bf16.mxu0 0
        %2480 = vmatpush1.bf16.msra.mxu0 0
        %2481 = vmatprep.subr.bf16.mxu0 0
        %2482 = vmatpush1.bf16.msra.mxu0 0
        %2483 = vmatprep.subr.bf16.mxu0 0
        %2484 = vmatpush1.bf16.msra.mxu0 0
        %2485 = vmatprep.subr.bf16.mxu0 0
        %2486 = vmatpush1.bf16.msra.mxu0 0
        %2487 = vmatprep.subr.bf16.mxu0 0
        %2488 = vmatpush1.bf16.msra.mxu0 0
        %2489 = vmatprep.subr.bf16.mxu0 0
        %2490 = vmatpush1.bf16.msra.mxu0 0
        %2491 = vmatprep.subr.bf16.mxu0 0
        %2492 = vmatpush1.bf16.msra.mxu0 0
        %2493 = vmatprep.subr.bf16.mxu0 0
        %2494 = vmatpush1.bf16.msra.mxu0 0
        %2495 = vmatprep.mubr.bf16.mxu0 0
        %2496 = vmatmul.mubr.bf16.gmra.mrb[0].mxu0 %v2461
        %v2497 = vpop.f32.mrb[0].mxu0
        %v2498 = vadd.f32 %v2455, %v2497
        %v2499 = vpop.f32.mrb[0].mxu0
        %v2500 = vadd.f32 %v2456, %v2499
        %v2501 = vpop.f32.mrb[0].mxu0
        %v2502 = vpop.f32.mrb[0].mxu0
        %2503 = vdwg.mxu0
        %v2504 = vmul.f32 %v2498, 0.16666667
        %v2505 = vmul.f32 %v2500, 0.16666667
        %v2506 = vadd.f32 %v2504, 0.5
        %v2507 = vadd.f32 %v2505, 0.5
        %v2508 = vmax.f32 %v2506, 0.0
        %v2509 = vmax.f32 %v2507, 0.0
        %v2510 = vmin.f32 %v2508, 1.0
        %v2511 = vmin.f32 %v2509, 1.0
        %v2512 = vlaneseq
        %v2513 = vshrl.u32 %v2512, 7
        %v2514 = vsub.s32 0, %v2513
        %v2515 = vrot.slane %v2510, %v2514
        %v2516 = vmul.f32 %v964, %v2515
        %v2517 = vmul.f32 %v965, %v2515
        %v2518 = vmul.f32 %v966, %v2515
        %v2519 = vmul.f32 %v967, %v2515
        %v2520 = vmul.f32 %v968, %v2515
        %v2521 = vmul.f32 %v969, %v2515
        %v2522 = vmul.f32 %v970, %v2515
        %v2523 = vmul.f32 %v971, %v2515
        %v2524 = vlaneseq
        %v2525 = vshrl.u32 %v2524, 7
        %v2526 = vsub.s32 0, %v2525
        %v2527 = vrot.slane %v2511, %v2526
        %v2528 = vmul.f32 %v2168, %v2527
        %v2529 = vmul.f32 %v2169, %v2527
        %v2530 = vmul.f32 %v2170, %v2527
        %v2531 = vmul.f32 %v2171, %v2527
        %v2532 = vmul.f32 %v2172, %v2527
        %v2533 = vmul.f32 %v2173, %v2527
        %v2534 = vmul.f32 %v2174, %v2527
        %v2535 = vmul.f32 %v2175, %v2527
        %v2536 = vpack.c.bf16 %v2517, %v2516
        %v2537 = vpack.c.bf16 %v2519, %v2518
        %v2538 = vpack.c.bf16 %v2521, %v2520
        %v2539 = vpack.c.bf16 %v2523, %v2522
        %v2540 = vld [vmem:[%s399] sm:$0xf]
        %v2541 = vld [vmem:[%s399 + $0x4] sm:$0xf]
        %v2542 = vld [vmem:[%s399 + $0x8] sm:$0xf]
        %v2543 = vld [vmem:[%s399 + $0xc] sm:$0xf]
        %v2544 = vld [vmem:[%s399 + $0x10] sm:$0xf]
        %v2545 = vld [vmem:[%s399 + $0x14] sm:$0xf]
        %v2546 = vld [vmem:[%s399 + $0x18] sm:$0xf]
        %v2547 = vld [vmem:[%s399 + $0x1c] sm:$0xf]
        %v2548 = vld [vmem:[%s399 + $0x20] sm:$0xf]
        %v2549 = vld [vmem:[%s399 + $0x24] sm:$0xf]
        %v2550 = vld [vmem:[%s399 + $0x28] sm:$0xf]
        %v2551 = vld [vmem:[%s399 + $0x2c] sm:$0xf]
        %v2552 = vld [vmem:[%s399 + $0x30] sm:$0xf]
        %v2553 = vld [vmem:[%s399 + $0x34] sm:$0xf]
        %v2554 = vld [vmem:[%s399 + $0x38] sm:$0xf]
        %v2555 = vld [vmem:[%s399 + $0x3c] sm:$0xf]
        %v2556 = vpack.c.bf16 %v2529, %v2528
        %v2557 = vpack.c.bf16 %v2531, %v2530
        %v2558 = vpack.c.bf16 %v2533, %v2532
        %v2559 = vpack.c.bf16 %v2535, %v2534
        %v2560 = vld [vmem:[%s399 + $0x40] sm:$0xf]
        %v2561 = vld [vmem:[%s399 + $0x44] sm:$0xf]
        %v2562 = vld [vmem:[%s399 + $0x48] sm:$0xf]
        %v2563 = vld [vmem:[%s399 + $0x4c] sm:$0xf]
        %v2564 = vld [vmem:[%s399 + $0x50] sm:$0xf]
        %v2565 = vld [vmem:[%s399 + $0x54] sm:$0xf]
        %v2566 = vld [vmem:[%s399 + $0x58] sm:$0xf]
        %v2567 = vld [vmem:[%s399 + $0x5c] sm:$0xf]
        %v2568 = vld [vmem:[%s399 + $0x60] sm:$0xf]
        %v2569 = vld [vmem:[%s399 + $0x64] sm:$0xf]
        %v2570 = vld [vmem:[%s399 + $0x68] sm:$0xf]
        %v2571 = vld [vmem:[%s399 + $0x6c] sm:$0xf]
        %v2572 = vld [vmem:[%s399 + $0x70] sm:$0xf]
        %v2573 = vld [vmem:[%s399 + $0x74] sm:$0xf]
        %v2574 = vld [vmem:[%s399 + $0x78] sm:$0xf]
        %v2575 = vld [vmem:[%s399 + $0x7c] sm:$0xf]
        %v2592 = vunpack.c.l.b16 %v2560
        %v2593 = vunpack.c.l.b16 %v2561
        %v2594 = vunpack.c.l.b16 %v2562
        %v2595 = vunpack.c.l.b16 %v2563
        %v2596 = vunpack.c.l.b16 %v2564
        %v2597 = vunpack.c.l.b16 %v2565
        %v2598 = vunpack.c.l.b16 %v2566
        %v2599 = vunpack.c.l.b16 %v2567
        %v2600 = vunpack.c.l.b16 %v2568
        %v2601 = vunpack.c.l.b16 %v2569
        %v2602 = vunpack.c.l.b16 %v2570
        %v2603 = vunpack.c.l.b16 %v2571
        %v2604 = vunpack.c.l.b16 %v2572
        %v2605 = vunpack.c.l.b16 %v2573
        %v2606 = vunpack.c.l.b16 %v2574
        %v2607 = vunpack.c.l.b16 %v2575
        %v2608 = vpack.c.b16 %v2593, %v2592
        %v2609 = vpack.c.b16 %v2595, %v2594
        %v2610 = vpack.c.b16 %v2597, %v2596
        %v2611 = vpack.c.b16 %v2599, %v2598
        %v2612 = vpack.c.b16 %v2601, %v2600
        %v2613 = vpack.c.b16 %v2603, %v2602
        %v2614 = vpack.c.b16 %v2605, %v2604
        %v2615 = vpack.c.b16 %v2607, %v2606
        %2624 = vmatprep.subr.bf16.mxu0 0
        %2625 = vmatpush1.bf16.msra.mxu0 %v2608
        %2626 = vmatprep.subr.bf16.mxu0 0
        %2627 = vmatpush1.bf16.msra.mxu0 %v2609
        %2628 = vmatprep.subr.bf16.mxu0 0
        %2629 = vmatpush1.bf16.msra.mxu0 %v2610
        %2630 = vmatprep.subr.bf16.mxu0 0
        %2631 = vmatpush1.bf16.msra.mxu0 %v2611
        %2632 = vmatprep.subr.bf16.mxu0 0
        %2633 = vmatpush1.bf16.msra.mxu0 %v2612
        %2634 = vmatprep.subr.bf16.mxu0 0
        %2635 = vmatpush1.bf16.msra.mxu0 %v2613
        %2636 = vmatprep.subr.bf16.mxu0 0
        %2637 = vmatpush1.bf16.msra.mxu0 %v2614
        %2638 = vmatprep.subr.bf16.mxu0 0
        %2639 = vmatpush1.bf16.msra.mxu0 %v2615
        %2640 = vmatprep.subr.bf16.mxu0 0
        %2641 = vmatpush1.bf16.msra.mxu0 0
        %2642 = vmatprep.subr.bf16.mxu0 0
        %2643 = vmatpush1.bf16.msra.mxu0 0
        %2644 = vmatprep.subr.bf16.mxu0 0
        %2645 = vmatpush1.bf16.msra.mxu0 0
        %2646 = vmatprep.subr.bf16.mxu0 0
        %2647 = vmatpush1.bf16.msra.mxu0 0
        %2648 = vmatprep.subr.bf16.mxu0 0
        %2649 = vmatpush1.bf16.msra.mxu0 0
        %2650 = vmatprep.subr.bf16.mxu0 0
        %2651 = vmatpush1.bf16.msra.mxu0 0
        %2652 = vmatprep.subr.bf16.mxu0 0
        %2653 = vmatpush1.bf16.msra.mxu0 0
        %2654 = vmatprep.subr.bf16.mxu0 0
        %2655 = vmatpush1.bf16.msra.mxu0 0
        %2656 = vmatprep.mubr.bf16.mxu0 0
        %2657 = vmatmul.mubr.bf16.gmra.mrb[0].mxu0 %v2556
        %v2658 = vpop.f32.mrb[0].mxu0
        %v2659 = vadd.f32 0.0, %v2658
        %v2660 = vpop.f32.mrb[0].mxu0
        %v2661 = vpop.f32.mrb[0].mxu0
        %v2662 = vadd.f32 0.0, %v2661
        %v2663 = vpop.f32.mrb[0].mxu0
        %2664 = vmatprep.mubr.bf16.mxu0 0
        %2665 = vmatmul.mubr.bf16.gmra.mrb[0].mxu0 %v2557
        %v2666 = vpop.f32.mrb[0].mxu0
        %v2667 = vadd.f32 0.0, %v2666
        %v2668 = vpop.f32.mrb[0].mxu0
        %v2669 = vpop.f32.mrb[0].mxu0
        %v2670 = vadd.f32 0.0, %v2669
        %v2671 = vpop.f32.mrb[0].mxu0
        %2672 = vmatprep.mubr.bf16.mxu0 0
        %2673 = vmatmul.mubr.bf16.gmra.mrb[0].mxu0 %v2558
        %v2674 = vpop.f32.mrb[0].mxu0
        %v2675 = vadd.f32 0.0, %v2674
        %v2676 = vpop.f32.mrb[0].mxu0
        %v2677 = vpop.f32.mrb[0].mxu0
        %v2678 = vadd.f32 0.0, %v2677
        %v2679 = vpop.f32.mrb[0].mxu0
        %2680 = vmatprep.mubr.bf16.mxu0 0
        %2681 = vmatmul.mubr.bf16.gmra.mrb[0].mxu0 %v2559
        %v2682 = vpop.f32.mrb[0].mxu0
        %v2683 = vadd.f32 0.0, %v2682
        %v2684 = vpop.f32.mrb[0].mxu0
        %v2685 = vpop.f32.mrb[0].mxu0
        %v2686 = vadd.f32 0.0, %v2685
        %v2687 = vpop.f32.mrb[0].mxu0
        %2688 = vdwg.mxu0
        %v2705 = vunpack.c.l.b16 %v2540
        %v2706 = vunpack.c.l.b16 %v2541
        %v2707 = vunpack.c.l.b16 %v2542
        %v2708 = vunpack.c.l.b16 %v2543
        %v2709 = vunpack.c.l.b16 %v2544
        %v2710 = vunpack.c.l.b16 %v2545
        %v2711 = vunpack.c.l.b16 %v2546
        %v2712 = vunpack.c.l.b16 %v2547
        %v2713 = vunpack.c.l.b16 %v2548
        %v2714 = vunpack.c.l.b16 %v2549
        %v2715 = vunpack.c.l.b16 %v2550
        %v2716 = vunpack.c.l.b16 %v2551
        %v2717 = vunpack.c.l.b16 %v2552
        %v2718 = vunpack.c.l.b16 %v2553
        %v2719 = vunpack.c.l.b16 %v2554
        %v2720 = vunpack.c.l.b16 %v2555
        %v2721 = vpack.c.b16 %v2706, %v2705
        %v2722 = vpack.c.b16 %v2708, %v2707
        %v2723 = vpack.c.b16 %v2710, %v2709
        %v2724 = vpack.c.b16 %v2712, %v2711
        %v2725 = vpack.c.b16 %v2714, %v2713
        %v2726 = vpack.c.b16 %v2716, %v2715
        %v2727 = vpack.c.b16 %v2718, %v2717
        %v2728 = vpack.c.b16 %v2720, %v2719
        %2737 = vmatprep.subr.bf16.mxu0 0
        %2738 = vmatpush1.bf16.msra.mxu0 %v2721
        %2739 = vmatprep.subr.bf16.mxu0 0
        %2740 = vmatpush1.bf16.msra.mxu0 %v2722
        %2741 = vmatprep.subr.bf16.mxu0 0
        %2742 = vmatpush1.bf16.msra.mxu0 %v2723
        %2743 = vmatprep.subr.bf16.mxu0 0
        %2744 = vmatpush1.bf16.msra.mxu0 %v2724
        %2745 = vmatprep.subr.bf16.mxu0 0
        %2746 = vmatpush1.bf16.msra.mxu0 %v2725
        %2747 = vmatprep.subr.bf16.mxu0 0
        %2748 = vmatpush1.bf16.msra.mxu0 %v2726
        %2749 = vmatprep.subr.bf16.mxu0 0
        %2750 = vmatpush1.bf16.msra.mxu0 %v2727
        %2751 = vmatprep.subr.bf16.mxu0 0
        %2752 = vmatpush1.bf16.msra.mxu0 %v2728
        %2753 = vmatprep.subr.bf16.mxu0 0
        %2754 = vmatpush1.bf16.msra.mxu0 0
        %2755 = vmatprep.subr.bf16.mxu0 0
        %2756 = vmatpush1.bf16.msra.mxu0 0
        %2757 = vmatprep.subr.bf16.mxu0 0
        %2758 = vmatpush1.bf16.msra.mxu0 0
        %2759 = vmatprep.subr.bf16.mxu0 0
        %2760 = vmatpush1.bf16.msra.mxu0 0
        %2761 = vmatprep.subr.bf16.mxu0 0
        %2762 = vmatpush1.bf16.msra.mxu0 0
        %2763 = vmatprep.subr.bf16.mxu0 0
        %2764 = vmatpush1.bf16.msra.mxu0 0
        %2765 = vmatprep.subr.bf16.mxu0 0
        %2766 = vmatpush1.bf16.msra.mxu0 0
        %2767 = vmatprep.subr.bf16.mxu0 0
        %2768 = vmatpush1.bf16.msra.mxu0 0
        %2769 = vmatprep.mubr.bf16.mxu0 0
        %2770 = vmatmul.mubr.bf16.gmra.mrb[0].mxu0 %v2536
        %v2771 = vpop.f32.mrb[0].mxu0
        %v2772 = vadd.f32 %v2659, %v2771
        %v2773 = vpop.f32.mrb[0].mxu0
        %v2774 = vpop.f32.mrb[0].mxu0
        %v2775 = vadd.f32 %v2662, %v2774
        %v2776 = vpop.f32.mrb[0].mxu0
        %2777 = vmatprep.mubr.bf16.mxu0 0
        %2778 = vmatmul.mubr.bf16.gmra.mrb[0].mxu0 %v2537
        %v2779 = vpop.f32.mrb[0].mxu0
        %v2780 = vadd.f32 %v2667, %v2779
        %v2781 = vpop.f32.mrb[0].mxu0
        %v2782 = vpop.f32.mrb[0].mxu0
        %v2783 = vadd.f32 %v2670, %v2782
        %v2784 = vpop.f32.mrb[0].mxu0
        %2785 = vmatprep.mubr.bf16.mxu0 0
        %2786 = vmatmul.mubr.bf16.gmra.mrb[0].mxu0 %v2538
        %v2787 = vpop.f32.mrb[0].mxu0
        %v2788 = vadd.f32 %v2675, %v2787
        %v2789 = vpop.f32.mrb[0].mxu0
        %v2790 = vpop.f32.mrb[0].mxu0
        %v2791 = vadd.f32 %v2678, %v2790
        %v2792 = vpop.f32.mrb[0].mxu0
        %2793 = vmatprep.mubr.bf16.mxu0 0
        %2794 = vmatmul.mubr.bf16.gmra.mrb[0].mxu0 %v2539
        %v2795 = vpop.f32.mrb[0].mxu0
        %v2796 = vadd.f32 %v2683, %v2795
        %v2797 = vpop.f32.mrb[0].mxu0
        %v2798 = vpop.f32.mrb[0].mxu0
        %v2799 = vadd.f32 %v2686, %v2798
        %v2800 = vpop.f32.mrb[0].mxu0
        %2801 = vdwg.mxu0
        %v2802 = vlaneseq
        %v2803 = vshrl.u32 %v2802, 7
        %v2804 = vsub.s32 5, %v2803
        %v2805 = vrot.slane %v538, %v2804
        %v2806 = vadd.f32 %v2772, %v2805
        %v2807 = vadd.f32 %v2775, %v2805
        %v2808 = vadd.f32 %v2780, %v2805
        %v2809 = vadd.f32 %v2783, %v2805
        %v2810 = vadd.f32 %v2788, %v2805
        %v2811 = vadd.f32 %v2791, %v2805
        %v2812 = vadd.f32 %v2796, %v2805
        %v2813 = vadd.f32 %v2799, %v2805
        %v2814 = vadd.f32 %v540, %v2806
        %v2815 = vadd.f32 %v541, %v2807
        %v2816 = vadd.f32 %v542, %v2808
        %v2817 = vadd.f32 %v543, %v2809
        %v2818 = vadd.f32 %v544, %v2810
        %v2819 = vadd.f32 %v545, %v2811
        %v2820 = vadd.f32 %v546, %v2812
        %v2821 = vadd.f32 %v547, %v2813
        %2822 = vst [vmem:[#allocation2] sm:$0xff] %v2814
        %2823 = vst [vmem:[#allocation2 + $0x8] sm:$0xff] %v2815
        %2824 = vst [vmem:[#allocation2 + $0x10] sm:$0xff] %v2816
        %2825 = vst [vmem:[#allocation2 + $0x18] sm:$0xff] %v2817
        %2826 = vst [vmem:[#allocation2 + $0x20] sm:$0xff] %v2818
        %2827 = vst [vmem:[#allocation2 + $0x28] sm:$0xff] %v2819
        %2828 = vst [vmem:[#allocation2 + $0x30] sm:$0xff] %v2820
        %2829 = vst [vmem:[#allocation2 + $0x38] sm:$0xff] %v2821
        %p2830 = scmp.eq.s32.totalorder %s35, 15
        // Predicated region
        $region69: #{_lambda_.1} parent=47 // pred_check
          %p2831 = pneg %p2830
        $region70: #{_lambda_.1} parent=47 // pred_check_branch
          %2833 = sbr.rel (%p2831) target = $region72
        $region71: #{_lambda_.1} parent=47 // pred_region
          %2834 = vst [vmem:[%s468] sm:$0xff] %v2814
          %2835 = vst [vmem:[%s468 + $0x8] sm:$0xff] %v2815
          %2836 = vst [vmem:[%s468 + $0x10] sm:$0xff] %v2816
          %2837 = vst [vmem:[%s468 + $0x18] sm:$0xff] %v2817
          %2838 = vst [vmem:[%s468 + $0x20] sm:$0xff] %v2818
          %2839 = vst [vmem:[%s468 + $0x28] sm:$0xff] %v2819
          %2840 = vst [vmem:[%s468 + $0x30] sm:$0xff] %v2820
          %2841 = vst [vmem:[%s468 + $0x38] sm:$0xff] %v2821
        $region72: #{_lambda_.1} parent=47 // pred_fallthru
          _
        %s2842 = sand.u32 %s232, 1
        %s2843 = scalar_lea.sflag [#allocation6], %s2842
        %s2844 = sand.u32 %s232, 1
        %s2845 = smul.addr %s2844, 64
        %s2846 = scalar_lea.vmem [#allocation12], %s2845
        // Predicated region
        $region73: #{_lambda_.1} parent=47 // pred_check
          %p2847 = pneg %p242
        $region74: #{_lambda_.1} parent=47 // pred_check_branch
          %2849 = sbr.rel (%p2847) target = $region76
        $region75: #{_lambda_.1} parent=47 // pred_region
          %s2850 = smul.u32 8, %s34
          %s2852 = ssub.s32 1024, 1024
          %2853 = vsyncadd %s2843, %s2852
          %s2854 = smul.addr %s2850, 128
          %s2855 = scalar_lea.hbm %s7, %s2854
          %s2856 = sshll.u32 %s2846, 4
          %s2857 = int_to_ptr.vmem [resolvable:$true] %s2856
          %2862 = dma.vmem_to_hbm [thread:$0]  %s2857, 1024, %s2855, %s2843, 128, 128, 8
        $region76: #{_lambda_.1} parent=47 // pred_fallthru
          _
      $region48: #{_lambda_.1} parent=5 // pred_fallthru
        _
      %p2863 = scmp.le.s32.totalorder 2, %s25
      // Predicated region
      $region77: #{_lambda_.1} parent=5 // pred_check
        %p2864 = pneg %p2863
      $region78: #{_lambda_.1} parent=5 // pred_check_branch
        %2866 = sbr.rel (%p2864) target = $region80
      $region79: #{_lambda_.1} parent=5 // pred_region
        %s2867 = ssub.s32 %s25, 2
        // Predicated region
        $region81: #{_lambda_.1} parent=79 // pred_check
          %p2868 = pneg %p248
        $region82: #{_lambda_.1} parent=79 // pred_check_branch
          %2870 = sbr.rel (%p2868) target = $region84
        $region83: #{_lambda_.1} parent=79 // pred_region
          %s2871 = sand.u32 %s233, 1
          %s2872 = scalar_lea.sflag [#allocation6], %s2871
          %s2873 = sand.u32 %s233, 1
          %s2874 = smul.addr %s2873, 64
          %s2875 = scalar_lea.vmem [#allocation12], %s2874
          %2876 = dma.done %s2872, 1024
        $region84: #{_lambda_.1} parent=79 // pred_fallthru
          _
      $region80: #{_lambda_.1} parent=5 // pred_fallthru
        _
    $region6: #{_lambda_.1} parent=1 // loop_footer
      %s29 = sadd.s32 1, %s25
    $region7: #{_lambda_.1} parent=1 // loop_footer_branch
      %24 = sbr.rel target = $region3
    $region8: #{_lambda_.1} parent=1 // loop_exit
      _
    %2877 = vsyncpa [#allocation5], 1
    %s2878 = scalar_lea.sflag [#allocation5], 1
    %2879 = vsyncpa %s2878, 1
    %2880 = vsyncpa [#allocation8], 1
    %s2881 = scalar_lea.sflag [#allocation8], 1
    %2882 = vsyncpa %s2881, 1
    %2883 = vsyncpa [#allocation11], 1
    %s2884 = scalar_lea.sflag [#allocation11], 1
    %2885 = vsyncpa %s2884, 1
    %2886 = vsyncpa [#allocation6], 1
    %s2887 = scalar_lea.sflag [#allocation6], 1
    %2888 = vsyncpa %s2887, 1

</llo_original>
